<compile_context>
chip_gen: v7x
topology: tpu7x:2x2x1
jax: 0.10.0
libtpu: 0.0.40
codegen_flags: <defaults>
</compile_context>

<pallas_src>
import functools
import math

import numpy as np
import jax
import jax.numpy as jnp
from jax.experimental import pallas as pl
from jax.experimental.pallas import tpu as pltpu

_EPS = 1e-5
_INV_SQRT2 = 1.0 / math.sqrt(2.0)


def _gelu_exact(x):
    # PyTorch nn.GELU() default: exact erf formulation.
    return 0.5 * x * (1.0 + jax.lax.erf(x * _INV_SQRT2))


def _double_conv_kernel(mask_ref, x_ref, w1_ref, g1_ref, b1_ref,
                        w2_ref, g2_ref, b2_ref, o_ref, *, W, residual):
    f32 = jnp.float32
    B = x_ref.shape[0]

    g1, b1 = g1_ref[...].astype(f32), b1_ref[...].astype(f32)   # (Cmid, 1)
    g2, b2 = g2_ref[...].astype(f32), b2_ref[...].astype(f32)   # (Cout, 1)

    def conv3x3(a, w_ref):
        # a: (Cin_a, HW) f32, pixels lane-dense; w_ref: (9, Cout_a, Cin_a).
        acc = None
        for dy in range(3):
            for dx in range(3):
                t = dy * 3 + dx
                s = (dy - 1) * W + (dx - 1)
                shifted = a if s == 0 else jnp.roll(a, -s, axis=1)
                if not (dy == 1 and dx == 1):
                    # zero taps whose source pixel falls outside the image
                    shifted = shifted * mask_ref[t]              # (1, HW)
                d = jnp.dot(w_ref[t].astype(f32), shifted,
                            preferred_element_type=f32)
                acc = d if acc is None else acc + d
        return acc                                               # (Cout_a, HW)

    def groupnorm(h, gamma, beta):
        # GroupNorm(num_groups=1): stats over the whole (C, H, W) per sample,
        # single pass (sum + sum-of-squares), biased variance, eps=1e-5.
        n = h.shape[0] * h.shape[1]
        mean = jnp.sum(h) / n
        var = jnp.maximum(jnp.sum(h * h) / n - mean * mean, 0.0)
        return (h - mean) * jax.lax.rsqrt(var + _EPS) * gamma + beta

    for b in range(B):
        x_b = x_ref[b].astype(f32)                               # (Cin, HW)
        h1 = _gelu_exact(groupnorm(conv3x3(x_b, w1_ref), g1, b1))
        h2 = groupnorm(conv3x3(h1, w2_ref), g2, b2)
        if residual:
            h2 = _gelu_exact(x_b + h2)
        o_ref[b] = h2.astype(o_ref.dtype)                        # dense (Cout, HW) store


def _tap_masks(H, W):
    """(9, 1, H*W) float32 validity masks, one per 3x3 tap (zero = out of image)."""
    ys = np.arange(H).reshape(H, 1)
    xs = np.arange(W).reshape(1, W)
    m = []
    for dy in range(3):
        for dx in range(3):
            ok = ((ys + dy - 1 >= 0) & (ys + dy - 1 < H) &
                  (xs + dx - 1 >= 0) & (xs + dx - 1 < W))
            m.append(np.broadcast_to(ok, (H, W)))
    return np.stack(m).astype(np.float32).reshape(9, 1, H * W)


def double_conv(x_nchw, w1, g1, b1, w2, g2, b2, *, residual=False):
    """x_nchw: (N, Cin, H, W); w1: (3,3,Cin,Cmid) HWIO; w2: (3,3,Cmid,Cout) HWIO."""
    N, Cin, H, W = x_nchw.shape
    Cmid, Cout = w1.shape[-1], w2.shape[-1]
    if residual and Cin != Cout:
        raise ValueError("residual requires in_channels == out_channels")
    HW = H * W

    x = x_nchw.reshape(N, Cin, HW)                    # free reshape, stays NCHW order
    mask = jnp.asarray(_tap_masks(H, W))              # (9, 1, HW), tiny, grid-invariant
    # HWIO -> (tap, Cout, Cin) so w_ref[t] is directly the (Cout, Cin) matmul LHS.
    w1m = jnp.transpose(w1, (0, 1, 3, 2)).reshape(9, Cmid, Cin).astype(jnp.float32)
    w2m = jnp.transpose(w2, (0, 1, 3, 2)).reshape(9, Cout, Cmid).astype(jnp.float32)
    g1c = g1.reshape(Cmid, 1).astype(jnp.float32)
    b1c = b1.reshape(Cmid, 1).astype(jnp.float32)
    g2c = g2.reshape(Cout, 1).astype(jnp.float32)
    b2c = b2.reshape(Cout, 1).astype(jnp.float32)

    # batch a few samples per grid step to amortize per-step overhead
    B = next(c for c in (8, 4, 2, 1) if N % c == 0)

    kernel = functools.partial(_double_conv_kernel, W=W, residual=residual)
    # NOTE: for large images / channel counts, add an H-row grid axis with a
    # 1-row halo so per-step blocks fit v7x's 64 MiB VMEM; test shapes are small.
    out = pl.pallas_call(
        kernel,
        out_shape=jax.ShapeDtypeStruct((N, Cout, HW), x_nchw.dtype),
        grid_spec=pltpu.PrefetchScalarGridSpec(
            num_scalar_prefetch=0,
            grid=(N // B,),
            in_specs=[
                pl.BlockSpec((9, 1, HW), lambda i: (0, 0, 0)),
                pl.BlockSpec((B, Cin, HW), lambda i: (i, 0, 0)),
                pl.BlockSpec((9, Cmid, Cin), lambda i: (0, 0, 0)),
                pl.BlockSpec((Cmid, 1), lambda i: (0, 0)),
                pl.BlockSpec((Cmid, 1), lambda i: (0, 0)),
                pl.BlockSpec((9, Cout, Cmid), lambda i: (0, 0, 0)),
                pl.BlockSpec((Cout, 1), lambda i: (0, 0)),
                pl.BlockSpec((Cout, 1), lambda i: (0, 0)),
            ],
            out_specs=pl.BlockSpec((B, Cout, HW), lambda i: (i, 0, 0)),
        ),
        compiler_params=pltpu.CompilerParams(dimension_semantics=("parallel",)),
    )(mask, x, w1m, g1c, b1c, w2m, g2c, b2c)

    return out.reshape(N, Cout, H, W)


# ---------- pure-JAX reference (for verification only) ----------
def _ref_double_conv(x_nchw, w1, g1, b1, w2, g2, b2, *, residual=False):
    x = jnp.transpose(x_nchw, (0, 2, 3, 1))

    def conv(h, w):
        return jax.lax.conv_general_dilated(
            h, w, (1, 1), "SAME", dimension_numbers=("NHWC", "HWIO", "NHWC"))

    def gn(h, g, b):
        mean = jnp.mean(h, axis=(1, 2, 3), keepdims=True)
        var = jnp.mean((h - mean) ** 2, axis=(1, 2, 3), keepdims=True)
        return (h - mean) / jnp.sqrt(var + _EPS) * g + b

    h = gn(conv(x, w1), g1, b1)
    h = _gelu_exact(h)
    h = gn(conv(h, w2), g2, b2)
    if residual:
        h = _gelu_exact(x + h)
    return jnp.transpose(h, (0, 3, 1, 2))


if __name__ == "__main__":
    key = jax.random.PRNGKey(0)
    ks = jax.random.split(key, 12)

    # --- case 1: residual=False, in=4, out=8 (mid defaults to out) ---
    N, Cin, H, W = 2, 4, 16, 16
    Cout = 8
    Cmid = Cout
    x = jax.random.normal(ks[0], (N, Cin, H, W), jnp.float32)
    w1 = 0.2 * jax.random.normal(ks[1], (3, 3, Cin, Cmid), jnp.float32)
    g1 = 1.0 + 0.1 * jax.random.normal(ks[2], (Cmid,), jnp.float32)
    b1 = 0.1 * jax.random.normal(ks[3], (Cmid,), jnp.float32)
    w2 = 0.2 * jax.random.normal(ks[4], (3, 3, Cmid, Cout), jnp.float32)
    g2 = 1.0 + 0.1 * jax.random.normal(ks[5], (Cout,), jnp.float32)
    b2 = 0.1 * jax.random.normal(ks[6], (Cout,), jnp.float32)

    y = double_conv(x, w1, g1, b1, w2, g2, b2, residual=False)
    jax.block_until_ready(y)
    y_ref = _ref_double_conv(x, w1, g1, b1, w2, g2, b2, residual=False)
    assert jnp.allclose(y, y_ref, atol=1e-4, rtol=1e-4), "residual=False mismatch"

    # --- case 2: residual=True, in=out=4 ---
    Cr = 4
    xr = jax.random.normal(ks[7], (N, Cr, H, W), jnp.float32)
    wr1 = 0.2 * jax.random.normal(ks[8], (3, 3, Cr, Cr), jnp.float32)
    gr1 = jnp.ones((Cr,), jnp.float32)
    br1 = jnp.zeros((Cr,), jnp.float32)
    wr2 = 0.2 * jax.random.normal(ks[9], (3, 3, Cr, Cr), jnp.float32)
    gr2 = 1.0 + 0.1 * jax.random.normal(ks[10], (Cr,), jnp.float32)
    br2 = 0.1 * jax.random.normal(ks[11], (Cr,), jnp.float32)

    yr = double_conv(xr, wr1, gr1, br1, wr2, gr2, br2, residual=True)
    jax.block_until_ready(yr)
    yr_ref = _ref_double_conv(xr, wr1, gr1, br1, wr2, gr2, br2, residual=True)
    assert jnp.allclose(yr, yr_ref, atol=1e-4, rtol=1e-4), "residual=True mismatch"

    print("KERNEL_OK")
</pallas_src>

<mosaic_0001>
module attributes {stable_mosaic.version = 11 : i64} {
  func.func @_double_conv_kernel(%arg0: i32, %arg1: memref<9x1x256xf32, #tpu.memory_space<vmem>>, %arg2: memref<2x4x256xf32, #tpu.memory_space<vmem>>, %arg3: memref<9x8x4xf32, #tpu.memory_space<vmem>>, %arg4: memref<8x1xf32, #tpu.memory_space<vmem>>, %arg5: memref<8x1xf32, #tpu.memory_space<vmem>>, %arg6: memref<9x8x8xf32, #tpu.memory_space<vmem>>, %arg7: memref<8x1xf32, #tpu.memory_space<vmem>>, %arg8: memref<8x1xf32, #tpu.memory_space<vmem>>, %arg9: memref<2x8x256xf32, #tpu.memory_space<vmem>>) attributes {dimension_semantics = [#tpu.dimension_semantics<parallel>], iteration_bounds = array<i64: 1>, scalar_prefetch = 0 : i64, scratch_operands = 0 : i64, tpu.core_type = #tpu.core_type<tc>, window_params = [{pipeline_mode = #tpu.pipeline_mode<synchronous>, transform_indices = @transform_0, window_bounds = array<i64: 9, 1, 256>}, {transform_indices = @transform_1, window_bounds = array<i64: 2, 4, 256>}, {pipeline_mode = #tpu.pipeline_mode<synchronous>, transform_indices = @transform_2, window_bounds = array<i64: 9, 8, 4>}, {pipeline_mode = #tpu.pipeline_mode<synchronous>, transform_indices = @transform_3, window_bounds = array<i64: 8, 1>}, {pipeline_mode = #tpu.pipeline_mode<synchronous>, transform_indices = @transform_4, window_bounds = array<i64: 8, 1>}, {pipeline_mode = #tpu.pipeline_mode<synchronous>, transform_indices = @transform_5, window_bounds = array<i64: 9, 8, 8>}, {pipeline_mode = #tpu.pipeline_mode<synchronous>, transform_indices = @transform_6, window_bounds = array<i64: 8, 1>}, {pipeline_mode = #tpu.pipeline_mode<synchronous>, transform_indices = @transform_7, window_bounds = array<i64: 8, 1>}, {transform_indices = @transform_8, window_bounds = array<i64: 2, 8, 256>}]} {
    %c0 = arith.constant 0 : index
    %c0_0 = arith.constant 0 : index
    %0 = vector.load %arg4[%c0, %c0_0] : memref<8x1xf32, #tpu.memory_space<vmem>>, vector<8x1xf32>
    %c0_1 = arith.constant 0 : index
    %c0_2 = arith.constant 0 : index
    %1 = vector.load %arg5[%c0_1, %c0_2] : memref<8x1xf32, #tpu.memory_space<vmem>>, vector<8x1xf32>
    %c0_3 = arith.constant 0 : index
    %c0_4 = arith.constant 0 : index
    %2 = vector.load %arg7[%c0_3, %c0_4] : memref<8x1xf32, #tpu.memory_space<vmem>>, vector<8x1xf32>
    %c0_5 = arith.constant 0 : index
    %c0_6 = arith.constant 0 : index
    %3 = vector.load %arg8[%c0_5, %c0_6] : memref<8x1xf32, #tpu.memory_space<vmem>>, vector<8x1xf32>
    %c0_7 = arith.constant 0 : index
    %c0_8 = arith.constant 0 : index
    %c0_9 = arith.constant 0 : index
    %4 = vector.load %arg2[%c0_7, %c0_8, %c0_9] : memref<2x4x256xf32, #tpu.memory_space<vmem>>, vector<1x4x256xf32>
    %5 = vector.shape_cast %4 : vector<1x4x256xf32> to vector<4x256xf32>
    %6 = vector.extract_strided_slice %5 {offsets = [0, 239], sizes = [4, 17], strides = [1, 1]} : vector<4x256xf32> to vector<4x17xf32>
    %7 = vector.extract_strided_slice %5 {offsets = [0, 0], sizes = [4, 239], strides = [1, 1]} : vector<4x256xf32> to vector<4x239xf32>
    %8 = tpu.concatenate %6, %7 in 1 : vector<4x17xf32>, vector<4x239xf32> -> vector<4x256xf32>
    %c0_10 = arith.constant 0 : index
    %c0_11 = arith.constant 0 : index
    %c0_12 = arith.constant 0 : index
    %9 = vector.load %arg1[%c0_10, %c0_11, %c0_12] : memref<9x1x256xf32, #tpu.memory_space<vmem>>, vector<1x1x256xf32>
    %10 = vector.shape_cast %9 : vector<1x1x256xf32> to vector<1x256xf32>
    %11 = vector.broadcast %10 : vector<1x256xf32> to vector<4x256xf32>
    %12 = arith.mulf %8, %11 : vector<4x256xf32>
    %c0_13 = arith.constant 0 : index
    %c0_14 = arith.constant 0 : index
    %c0_15 = arith.constant 0 : index
    %13 = vector.load %arg3[%c0_13, %c0_14, %c0_15] : memref<9x8x4xf32, #tpu.memory_space<vmem>>, vector<1x8x4xf32>
    %14 = vector.shape_cast %13 : vector<1x8x4xf32> to vector<8x4xf32>
    %cst = arith.constant dense<0.000000e+00> : vector<8x256xf32>
    %15 = tpu.matmul %14, %12, %cst {dimension_numbers = #tpu.dot_dimension_numbers<[1], [0], [0], [1], [0, 0, 1, 1], [], []>} : vector<8x4xf32>, vector<4x256xf32>, vector<8x256xf32> -> vector<8x256xf32>
    %16 = vector.extract_strided_slice %5 {offsets = [0, 240], sizes = [4, 16], strides = [1, 1]} : vector<4x256xf32> to vector<4x16xf32>
    %17 = vector.extract_strided_slice %5 {offsets = [0, 0], sizes = [4, 240], strides = [1, 1]} : vector<4x256xf32> to vector<4x240xf32>
    %18 = tpu.concatenate %16, %17 in 1 : vector<4x16xf32>, vector<4x240xf32> -> vector<4x256xf32>
    %c1 = arith.constant 1 : index
    %c0_16 = arith.constant 0 : index
    %c0_17 = arith.constant 0 : index
    %19 = vector.load %arg1[%c1, %c0_16, %c0_17] : memref<9x1x256xf32, #tpu.memory_space<vmem>>, vector<1x1x256xf32>
    %20 = vector.shape_cast %19 : vector<1x1x256xf32> to vector<1x256xf32>
    %21 = vector.broadcast %20 : vector<1x256xf32> to vector<4x256xf32>
    %22 = arith.mulf %18, %21 : vector<4x256xf32>
    %c1_18 = arith.constant 1 : index
    %c0_19 = arith.constant 0 : index
    %c0_20 = arith.constant 0 : index
    %23 = vector.load %arg3[%c1_18, %c0_19, %c0_20] : memref<9x8x4xf32, #tpu.memory_space<vmem>>, vector<1x8x4xf32>
    %24 = vector.shape_cast %23 : vector<1x8x4xf32> to vector<8x4xf32>
    %cst_21 = arith.constant dense<0.000000e+00> : vector<8x256xf32>
    %25 = tpu.matmul %24, %22, %cst_21 {dimension_numbers = #tpu.dot_dimension_numbers<[1], [0], [0], [1], [0, 0, 1, 1], [], []>} : vector<8x4xf32>, vector<4x256xf32>, vector<8x256xf32> -> vector<8x256xf32>
    %26 = arith.addf %15, %25 : vector<8x256xf32>
    %27 = vector.extract_strided_slice %5 {offsets = [0, 241], sizes = [4, 15], strides = [1, 1]} : vector<4x256xf32> to vector<4x15xf32>
    %28 = vector.extract_strided_slice %5 {offsets = [0, 0], sizes = [4, 241], strides = [1, 1]} : vector<4x256xf32> to vector<4x241xf32>
    %29 = tpu.concatenate %27, %28 in 1 : vector<4x15xf32>, vector<4x241xf32> -> vector<4x256xf32>
    %c2 = arith.constant 2 : index
    %c0_22 = arith.constant 0 : index
    %c0_23 = arith.constant 0 : index
    %30 = vector.load %arg1[%c2, %c0_22, %c0_23] : memref<9x1x256xf32, #tpu.memory_space<vmem>>, vector<1x1x256xf32>
    %31 = vector.shape_cast %30 : vector<1x1x256xf32> to vector<1x256xf32>
    %32 = vector.broadcast %31 : vector<1x256xf32> to vector<4x256xf32>
    %33 = arith.mulf %29, %32 : vector<4x256xf32>
    %c2_24 = arith.constant 2 : index
    %c0_25 = arith.constant 0 : index
    %c0_26 = arith.constant 0 : index
    %34 = vector.load %arg3[%c2_24, %c0_25, %c0_26] : memref<9x8x4xf32, #tpu.memory_space<vmem>>, vector<1x8x4xf32>
    %35 = vector.shape_cast %34 : vector<1x8x4xf32> to vector<8x4xf32>
    %cst_27 = arith.constant dense<0.000000e+00> : vector<8x256xf32>
    %36 = tpu.matmul %35, %33, %cst_27 {dimension_numbers = #tpu.dot_dimension_numbers<[1], [0], [0], [1], [0, 0, 1, 1], [], []>} : vector<8x4xf32>, vector<4x256xf32>, vector<8x256xf32> -> vector<8x256xf32>
    %37 = arith.addf %26, %36 : vector<8x256xf32>
    %38 = vector.extract_strided_slice %5 {offsets = [0, 255], sizes = [4, 1], strides = [1, 1]} : vector<4x256xf32> to vector<4x1xf32>
    %39 = vector.extract_strided_slice %5 {offsets = [0, 0], sizes = [4, 255], strides = [1, 1]} : vector<4x256xf32> to vector<4x255xf32>
    %40 = tpu.concatenate %38, %39 in 1 : vector<4x1xf32>, vector<4x255xf32> -> vector<4x256xf32>
    %c3 = arith.constant 3 : index
    %c0_28 = arith.constant 0 : index
    %c0_29 = arith.constant 0 : index
    %41 = vector.load %arg1[%c3, %c0_28, %c0_29] : memref<9x1x256xf32, #tpu.memory_space<vmem>>, vector<1x1x256xf32>
    %42 = vector.shape_cast %41 : vector<1x1x256xf32> to vector<1x256xf32>
    %43 = vector.broadcast %42 : vector<1x256xf32> to vector<4x256xf32>
    %44 = arith.mulf %40, %43 : vector<4x256xf32>
    %c3_30 = arith.constant 3 : index
    %c0_31 = arith.constant 0 : index
    %c0_32 = arith.constant 0 : index
    %45 = vector.load %arg3[%c3_30, %c0_31, %c0_32] : memref<9x8x4xf32, #tpu.memory_space<vmem>>, vector<1x8x4xf32>
    %46 = vector.shape_cast %45 : vector<1x8x4xf32> to vector<8x4xf32>
    %cst_33 = arith.constant dense<0.000000e+00> : vector<8x256xf32>
    %47 = tpu.matmul %46, %44, %cst_33 {dimension_numbers = #tpu.dot_dimension_numbers<[1], [0], [0], [1], [0, 0, 1, 1], [], []>} : vector<8x4xf32>, vector<4x256xf32>, vector<8x256xf32> -> vector<8x256xf32>
    %48 = arith.addf %37, %47 : vector<8x256xf32>
    %c4 = arith.constant 4 : index
    %c0_34 = arith.constant 0 : index
    %c0_35 = arith.constant 0 : index
    %49 = vector.load %arg3[%c4, %c0_34, %c0_35] : memref<9x8x4xf32, #tpu.memory_space<vmem>>, vector<1x8x4xf32>
    %50 = vector.shape_cast %49 : vector<1x8x4xf32> to vector<8x4xf32>
    %cst_36 = arith.constant dense<0.000000e+00> : vector<8x256xf32>
    %51 = tpu.matmul %50, %5, %cst_36 {dimension_numbers = #tpu.dot_dimension_numbers<[1], [0], [0], [1], [0, 0, 1, 1], [], []>} : vector<8x4xf32>, vector<4x256xf32>, vector<8x256xf32> -> vector<8x256xf32>
    %52 = arith.addf %48, %51 : vector<8x256xf32>
    %53 = vector.extract_strided_slice %5 {offsets = [0, 1], sizes = [4, 255], strides = [1, 1]} : vector<4x256xf32> to vector<4x255xf32>
    %54 = vector.extract_strided_slice %5 {offsets = [0, 0], sizes = [4, 1], strides = [1, 1]} : vector<4x256xf32> to vector<4x1xf32>
    %55 = tpu.concatenate %53, %54 in 1 : vector<4x255xf32>, vector<4x1xf32> -> vector<4x256xf32>
    %c5 = arith.constant 5 : index
    %c0_37 = arith.constant 0 : index
    %c0_38 = arith.constant 0 : index
    %56 = vector.load %arg1[%c5, %c0_37, %c0_38] : memref<9x1x256xf32, #tpu.memory_space<vmem>>, vector<1x1x256xf32>
    %57 = vector.shape_cast %56 : vector<1x1x256xf32> to vector<1x256xf32>
    %58 = vector.broadcast %57 : vector<1x256xf32> to vector<4x256xf32>
    %59 = arith.mulf %55, %58 : vector<4x256xf32>
    %c5_39 = arith.constant 5 : index
    %c0_40 = arith.constant 0 : index
    %c0_41 = arith.constant 0 : index
    %60 = vector.load %arg3[%c5_39, %c0_40, %c0_41] : memref<9x8x4xf32, #tpu.memory_space<vmem>>, vector<1x8x4xf32>
    %61 = vector.shape_cast %60 : vector<1x8x4xf32> to vector<8x4xf32>
    %cst_42 = arith.constant dense<0.000000e+00> : vector<8x256xf32>
    %62 = tpu.matmul %61, %59, %cst_42 {dimension_numbers = #tpu.dot_dimension_numbers<[1], [0], [0], [1], [0, 0, 1, 1], [], []>} : vector<8x4xf32>, vector<4x256xf32>, vector<8x256xf32> -> vector<8x256xf32>
    %63 = arith.addf %52, %62 : vector<8x256xf32>
    %64 = vector.extract_strided_slice %5 {offsets = [0, 15], sizes = [4, 241], strides = [1, 1]} : vector<4x256xf32> to vector<4x241xf32>
    %65 = vector.extract_strided_slice %5 {offsets = [0, 0], sizes = [4, 15], strides = [1, 1]} : vector<4x256xf32> to vector<4x15xf32>
    %66 = tpu.concatenate %64, %65 in 1 : vector<4x241xf32>, vector<4x15xf32> -> vector<4x256xf32>
    %c6 = arith.constant 6 : index
    %c0_43 = arith.constant 0 : index
    %c0_44 = arith.constant 0 : index
    %67 = vector.load %arg1[%c6, %c0_43, %c0_44] : memref<9x1x256xf32, #tpu.memory_space<vmem>>, vector<1x1x256xf32>
    %68 = vector.shape_cast %67 : vector<1x1x256xf32> to vector<1x256xf32>
    %69 = vector.broadcast %68 : vector<1x256xf32> to vector<4x256xf32>
    %70 = arith.mulf %66, %69 : vector<4x256xf32>
    %c6_45 = arith.constant 6 : index
    %c0_46 = arith.constant 0 : index
    %c0_47 = arith.constant 0 : index
    %71 = vector.load %arg3[%c6_45, %c0_46, %c0_47] : memref<9x8x4xf32, #tpu.memory_space<vmem>>, vector<1x8x4xf32>
    %72 = vector.shape_cast %71 : vector<1x8x4xf32> to vector<8x4xf32>
    %cst_48 = arith.constant dense<0.000000e+00> : vector<8x256xf32>
    %73 = tpu.matmul %72, %70, %cst_48 {dimension_numbers = #tpu.dot_dimension_numbers<[1], [0], [0], [1], [0, 0, 1, 1], [], []>} : vector<8x4xf32>, vector<4x256xf32>, vector<8x256xf32> -> vector<8x256xf32>
    %74 = arith.addf %63, %73 : vector<8x256xf32>
    %75 = vector.extract_strided_slice %5 {offsets = [0, 16], sizes = [4, 240], strides = [1, 1]} : vector<4x256xf32> to vector<4x240xf32>
    %76 = vector.extract_strided_slice %5 {offsets = [0, 0], sizes = [4, 16], strides = [1, 1]} : vector<4x256xf32> to vector<4x16xf32>
    %77 = tpu.concatenate %75, %76 in 1 : vector<4x240xf32>, vector<4x16xf32> -> vector<4x256xf32>
    %c7 = arith.constant 7 : index
    %c0_49 = arith.constant 0 : index
    %c0_50 = arith.constant 0 : index
    %78 = vector.load %arg1[%c7, %c0_49, %c0_50] : memref<9x1x256xf32, #tpu.memory_space<vmem>>, vector<1x1x256xf32>
    %79 = vector.shape_cast %78 : vector<1x1x256xf32> to vector<1x256xf32>
    %80 = vector.broadcast %79 : vector<1x256xf32> to vector<4x256xf32>
    %81 = arith.mulf %77, %80 : vector<4x256xf32>
    %c7_51 = arith.constant 7 : index
    %c0_52 = arith.constant 0 : index
    %c0_53 = arith.constant 0 : index
    %82 = vector.load %arg3[%c7_51, %c0_52, %c0_53] : memref<9x8x4xf32, #tpu.memory_space<vmem>>, vector<1x8x4xf32>
    %83 = vector.shape_cast %82 : vector<1x8x4xf32> to vector<8x4xf32>
    %cst_54 = arith.constant dense<0.000000e+00> : vector<8x256xf32>
    %84 = tpu.matmul %83, %81, %cst_54 {dimension_numbers = #tpu.dot_dimension_numbers<[1], [0], [0], [1], [0, 0, 1, 1], [], []>} : vector<8x4xf32>, vector<4x256xf32>, vector<8x256xf32> -> vector<8x256xf32>
    %85 = arith.addf %74, %84 : vector<8x256xf32>
    %86 = vector.extract_strided_slice %5 {offsets = [0, 17], sizes = [4, 239], strides = [1, 1]} : vector<4x256xf32> to vector<4x239xf32>
    %87 = vector.extract_strided_slice %5 {offsets = [0, 0], sizes = [4, 17], strides = [1, 1]} : vector<4x256xf32> to vector<4x17xf32>
    %88 = tpu.concatenate %86, %87 in 1 : vector<4x239xf32>, vector<4x17xf32> -> vector<4x256xf32>
    %c8 = arith.constant 8 : index
    %c0_55 = arith.constant 0 : index
    %c0_56 = arith.constant 0 : index
    %89 = vector.load %arg1[%c8, %c0_55, %c0_56] : memref<9x1x256xf32, #tpu.memory_space<vmem>>, vector<1x1x256xf32>
    %90 = vector.shape_cast %89 : vector<1x1x256xf32> to vector<1x256xf32>
    %91 = vector.broadcast %90 : vector<1x256xf32> to vector<4x256xf32>
    %92 = arith.mulf %88, %91 : vector<4x256xf32>
    %c8_57 = arith.constant 8 : index
    %c0_58 = arith.constant 0 : index
    %c0_59 = arith.constant 0 : index
    %93 = vector.load %arg3[%c8_57, %c0_58, %c0_59] : memref<9x8x4xf32, #tpu.memory_space<vmem>>, vector<1x8x4xf32>
    %94 = vector.shape_cast %93 : vector<1x8x4xf32> to vector<8x4xf32>
    %cst_60 = arith.constant dense<0.000000e+00> : vector<8x256xf32>
    %95 = tpu.matmul %94, %92, %cst_60 {dimension_numbers = #tpu.dot_dimension_numbers<[1], [0], [0], [1], [0, 0, 1, 1], [], []>} : vector<8x4xf32>, vector<4x256xf32>, vector<8x256xf32> -> vector<8x256xf32>
    %96 = arith.addf %85, %95 : vector<8x256xf32>
    %97 = vector.shape_cast %96 : vector<8x256xf32> to vector<1x8x256xf32>
    %cst_61 = arith.constant dense<0.000000e+00> : vector<1xf32>
    %98 = vector.multi_reduction <add>, %97, %cst_61 [1, 2] : vector<1x8x256xf32> to vector<1xf32>
    %99 = vector.shape_cast %98 : vector<1xf32> to vector<1x1x1xf32>
    %100 = vector.extract %99[0, 0, 0] : f32 from vector<1x1x1xf32>
    %cst_62 = arith.constant 2.048000e+03 : f32
    %101 = arith.divf %100, %cst_62 : f32
    %102 = arith.mulf %96, %96 : vector<8x256xf32>
    %103 = vector.shape_cast %102 : vector<8x256xf32> to vector<1x8x256xf32>
    %cst_63 = arith.constant dense<0.000000e+00> : vector<1xf32>
    %104 = vector.multi_reduction <add>, %103, %cst_63 [1, 2] : vector<1x8x256xf32> to vector<1xf32>
    %105 = vector.shape_cast %104 : vector<1xf32> to vector<1x1x1xf32>
    %106 = vector.extract %105[0, 0, 0] : f32 from vector<1x1x1xf32>
    %cst_64 = arith.constant 2.048000e+03 : f32
    %107 = arith.divf %106, %cst_64 : f32
    %108 = arith.mulf %101, %101 : f32
    %109 = arith.subf %107, %108 : f32
    %cst_65 = arith.constant 0.000000e+00 : f32
    %110 = arith.maximumf %109, %cst_65 : f32
    %111 = vector.broadcast %101 : f32 to vector<8x256xf32>
    %112 = arith.subf %96, %111 : vector<8x256xf32>
    %cst_66 = arith.constant 9.99999974E-6 : f32
    %113 = arith.addf %110, %cst_66 : f32
    %114 = math.rsqrt %113 : f32
    %115 = vector.broadcast %114 : f32 to vector<8x256xf32>
    %116 = arith.mulf %112, %115 : vector<8x256xf32>
    %117 = vector.broadcast %0 : vector<8x1xf32> to vector<8x256xf32>
    %118 = arith.mulf %116, %117 : vector<8x256xf32>
    %119 = vector.broadcast %1 : vector<8x1xf32> to vector<8x256xf32>
    %120 = arith.addf %118, %119 : vector<8x256xf32>
    %cst_67 = arith.constant 5.000000e-01 : f32
    %121 = vector.broadcast %cst_67 : f32 to vector<8x256xf32>
    %122 = arith.mulf %121, %120 : vector<8x256xf32>
    %cst_68 = arith.constant 0.707106769 : f32
    %123 = vector.broadcast %cst_68 : f32 to vector<8x256xf32>
    %124 = arith.mulf %120, %123 : vector<8x256xf32>
    %125 = math.erf %124 : vector<8x256xf32>
    %cst_69 = arith.constant 1.000000e+00 : f32
    %126 = vector.broadcast %cst_69 : f32 to vector<8x256xf32>
    %127 = arith.addf %126, %125 : vector<8x256xf32>
    %128 = arith.mulf %122, %127 : vector<8x256xf32>
    %129 = vector.extract_strided_slice %128 {offsets = [0, 239], sizes = [8, 17], strides = [1, 1]} : vector<8x256xf32> to vector<8x17xf32>
    %130 = vector.extract_strided_slice %128 {offsets = [0, 0], sizes = [8, 239], strides = [1, 1]} : vector<8x256xf32> to vector<8x239xf32>
    %131 = tpu.concatenate %129, %130 in 1 : vector<8x17xf32>, vector<8x239xf32> -> vector<8x256xf32>
    %c0_70 = arith.constant 0 : index
    %c0_71 = arith.constant 0 : index
    %c0_72 = arith.constant 0 : index
    %132 = vector.load %arg1[%c0_70, %c0_71, %c0_72] : memref<9x1x256xf32, #tpu.memory_space<vmem>>, vector<1x1x256xf32>
    %133 = vector.shape_cast %132 : vector<1x1x256xf32> to vector<1x256xf32>
    %134 = vector.broadcast %133 : vector<1x256xf32> to vector<8x256xf32>
    %135 = arith.mulf %131, %134 : vector<8x256xf32>
    %c0_73 = arith.constant 0 : index
    %c0_74 = arith.constant 0 : index
    %c0_75 = arith.constant 0 : index
    %136 = vector.load %arg6[%c0_73, %c0_74, %c0_75] : memref<9x8x8xf32, #tpu.memory_space<vmem>>, vector<1x8x8xf32>
    %137 = vector.shape_cast %136 : vector<1x8x8xf32> to vector<8x8xf32>
    %cst_76 = arith.constant dense<0.000000e+00> : vector<8x256xf32>
    %138 = tpu.matmul %137, %135, %cst_76 {dimension_numbers = #tpu.dot_dimension_numbers<[1], [0], [0], [1], [0, 0, 1, 1], [], []>} : vector<8x8xf32>, vector<8x256xf32>, vector<8x256xf32> -> vector<8x256xf32>
    %139 = vector.extract_strided_slice %128 {offsets = [0, 240], sizes = [8, 16], strides = [1, 1]} : vector<8x256xf32> to vector<8x16xf32>
    %140 = vector.extract_strided_slice %128 {offsets = [0, 0], sizes = [8, 240], strides = [1, 1]} : vector<8x256xf32> to vector<8x240xf32>
    %141 = tpu.concatenate %139, %140 in 1 : vector<8x16xf32>, vector<8x240xf32> -> vector<8x256xf32>
    %c1_77 = arith.constant 1 : index
    %c0_78 = arith.constant 0 : index
    %c0_79 = arith.constant 0 : index
    %142 = vector.load %arg1[%c1_77, %c0_78, %c0_79] : memref<9x1x256xf32, #tpu.memory_space<vmem>>, vector<1x1x256xf32>
    %143 = vector.shape_cast %142 : vector<1x1x256xf32> to vector<1x256xf32>
    %144 = vector.broadcast %143 : vector<1x256xf32> to vector<8x256xf32>
    %145 = arith.mulf %141, %144 : vector<8x256xf32>
    %c1_80 = arith.constant 1 : index
    %c0_81 = arith.constant 0 : index
    %c0_82 = arith.constant 0 : index
    %146 = vector.load %arg6[%c1_80, %c0_81, %c0_82] : memref<9x8x8xf32, #tpu.memory_space<vmem>>, vector<1x8x8xf32>
    %147 = vector.shape_cast %146 : vector<1x8x8xf32> to vector<8x8xf32>
    %cst_83 = arith.constant dense<0.000000e+00> : vector<8x256xf32>
    %148 = tpu.matmul %147, %145, %cst_83 {dimension_numbers = #tpu.dot_dimension_numbers<[1], [0], [0], [1], [0, 0, 1, 1], [], []>} : vector<8x8xf32>, vector<8x256xf32>, vector<8x256xf32> -> vector<8x256xf32>
    %149 = arith.addf %138, %148 : vector<8x256xf32>
    %150 = vector.extract_strided_slice %128 {offsets = [0, 241], sizes = [8, 15], strides = [1, 1]} : vector<8x256xf32> to vector<8x15xf32>
    %151 = vector.extract_strided_slice %128 {offsets = [0, 0], sizes = [8, 241], strides = [1, 1]} : vector<8x256xf32> to vector<8x241xf32>
    %152 = tpu.concatenate %150, %151 in 1 : vector<8x15xf32>, vector<8x241xf32> -> vector<8x256xf32>
    %c2_84 = arith.constant 2 : index
    %c0_85 = arith.constant 0 : index
    %c0_86 = arith.constant 0 : index
    %153 = vector.load %arg1[%c2_84, %c0_85, %c0_86] : memref<9x1x256xf32, #tpu.memory_space<vmem>>, vector<1x1x256xf32>
    %154 = vector.shape_cast %153 : vector<1x1x256xf32> to vector<1x256xf32>
    %155 = vector.broadcast %154 : vector<1x256xf32> to vector<8x256xf32>
    %156 = arith.mulf %152, %155 : vector<8x256xf32>
    %c2_87 = arith.constant 2 : index
    %c0_88 = arith.constant 0 : index
    %c0_89 = arith.constant 0 : index
    %157 = vector.load %arg6[%c2_87, %c0_88, %c0_89] : memref<9x8x8xf32, #tpu.memory_space<vmem>>, vector<1x8x8xf32>
    %158 = vector.shape_cast %157 : vector<1x8x8xf32> to vector<8x8xf32>
    %cst_90 = arith.constant dense<0.000000e+00> : vector<8x256xf32>
    %159 = tpu.matmul %158, %156, %cst_90 {dimension_numbers = #tpu.dot_dimension_numbers<[1], [0], [0], [1], [0, 0, 1, 1], [], []>} : vector<8x8xf32>, vector<8x256xf32>, vector<8x256xf32> -> vector<8x256xf32>
    %160 = arith.addf %149, %159 : vector<8x256xf32>
    %161 = vector.extract_strided_slice %128 {offsets = [0, 255], sizes = [8, 1], strides = [1, 1]} : vector<8x256xf32> to vector<8x1xf32>
    %162 = vector.extract_strided_slice %128 {offsets = [0, 0], sizes = [8, 255], strides = [1, 1]} : vector<8x256xf32> to vector<8x255xf32>
    %163 = tpu.concatenate %161, %162 in 1 : vector<8x1xf32>, vector<8x255xf32> -> vector<8x256xf32>
    %c3_91 = arith.constant 3 : index
    %c0_92 = arith.constant 0 : index
    %c0_93 = arith.constant 0 : index
    %164 = vector.load %arg1[%c3_91, %c0_92, %c0_93] : memref<9x1x256xf32, #tpu.memory_space<vmem>>, vector<1x1x256xf32>
    %165 = vector.shape_cast %164 : vector<1x1x256xf32> to vector<1x256xf32>
    %166 = vector.broadcast %165 : vector<1x256xf32> to vector<8x256xf32>
    %167 = arith.mulf %163, %166 : vector<8x256xf32>
    %c3_94 = arith.constant 3 : index
    %c0_95 = arith.constant 0 : index
    %c0_96 = arith.constant 0 : index
    %168 = vector.load %arg6[%c3_94, %c0_95, %c0_96] : memref<9x8x8xf32, #tpu.memory_space<vmem>>, vector<1x8x8xf32>
    %169 = vector.shape_cast %168 : vector<1x8x8xf32> to vector<8x8xf32>
    %cst_97 = arith.constant dense<0.000000e+00> : vector<8x256xf32>
    %170 = tpu.matmul %169, %167, %cst_97 {dimension_numbers = #tpu.dot_dimension_numbers<[1], [0], [0], [1], [0, 0, 1, 1], [], []>} : vector<8x8xf32>, vector<8x256xf32>, vector<8x256xf32> -> vector<8x256xf32>
    %171 = arith.addf %160, %170 : vector<8x256xf32>
    %c4_98 = arith.constant 4 : index
    %c0_99 = arith.constant 0 : index
    %c0_100 = arith.constant 0 : index
    %172 = vector.load %arg6[%c4_98, %c0_99, %c0_100] : memref<9x8x8xf32, #tpu.memory_space<vmem>>, vector<1x8x8xf32>
    %173 = vector.shape_cast %172 : vector<1x8x8xf32> to vector<8x8xf32>
    %cst_101 = arith.constant dense<0.000000e+00> : vector<8x256xf32>
    %174 = tpu.matmul %173, %128, %cst_101 {dimension_numbers = #tpu.dot_dimension_numbers<[1], [0], [0], [1], [0, 0, 1, 1], [], []>} : vector<8x8xf32>, vector<8x256xf32>, vector<8x256xf32> -> vector<8x256xf32>
    %175 = arith.addf %171, %174 : vector<8x256xf32>
    %176 = vector.extract_strided_slice %128 {offsets = [0, 1], sizes = [8, 255], strides = [1, 1]} : vector<8x256xf32> to vector<8x255xf32>
    %177 = vector.extract_strided_slice %128 {offsets = [0, 0], sizes = [8, 1], strides = [1, 1]} : vector<8x256xf32> to vector<8x1xf32>
    %178 = tpu.concatenate %176, %177 in 1 : vector<8x255xf32>, vector<8x1xf32> -> vector<8x256xf32>
    %c5_102 = arith.constant 5 : index
    %c0_103 = arith.constant 0 : index
    %c0_104 = arith.constant 0 : index
    %179 = vector.load %arg1[%c5_102, %c0_103, %c0_104] : memref<9x1x256xf32, #tpu.memory_space<vmem>>, vector<1x1x256xf32>
    %180 = vector.shape_cast %179 : vector<1x1x256xf32> to vector<1x256xf32>
    %181 = vector.broadcast %180 : vector<1x256xf32> to vector<8x256xf32>
    %182 = arith.mulf %178, %181 : vector<8x256xf32>
    %c5_105 = arith.constant 5 : index
    %c0_106 = arith.constant 0 : index
    %c0_107 = arith.constant 0 : index
    %183 = vector.load %arg6[%c5_105, %c0_106, %c0_107] : memref<9x8x8xf32, #tpu.memory_space<vmem>>, vector<1x8x8xf32>
    %184 = vector.shape_cast %183 : vector<1x8x8xf32> to vector<8x8xf32>
    %cst_108 = arith.constant dense<0.000000e+00> : vector<8x256xf32>
    %185 = tpu.matmul %184, %182, %cst_108 {dimension_numbers = #tpu.dot_dimension_numbers<[1], [0], [0], [1], [0, 0, 1, 1], [], []>} : vector<8x8xf32>, vector<8x256xf32>, vector<8x256xf32> -> vector<8x256xf32>
    %186 = arith.addf %175, %185 : vector<8x256xf32>
    %187 = vector.extract_strided_slice %128 {offsets = [0, 15], sizes = [8, 241], strides = [1, 1]} : vector<8x256xf32> to vector<8x241xf32>
    %188 = vector.extract_strided_slice %128 {offsets = [0, 0], sizes = [8, 15], strides = [1, 1]} : vector<8x256xf32> to vector<8x15xf32>
    %189 = tpu.concatenate %187, %188 in 1 : vector<8x241xf32>, vector<8x15xf32> -> vector<8x256xf32>
    %c6_109 = arith.constant 6 : index
    %c0_110 = arith.constant 0 : index
    %c0_111 = arith.constant 0 : index
    %190 = vector.load %arg1[%c6_109, %c0_110, %c0_111] : memref<9x1x256xf32, #tpu.memory_space<vmem>>, vector<1x1x256xf32>
    %191 = vector.shape_cast %190 : vector<1x1x256xf32> to vector<1x256xf32>
    %192 = vector.broadcast %191 : vector<1x256xf32> to vector<8x256xf32>
    %193 = arith.mulf %189, %192 : vector<8x256xf32>
    %c6_112 = arith.constant 6 : index
    %c0_113 = arith.constant 0 : index
    %c0_114 = arith.constant 0 : index
    %194 = vector.load %arg6[%c6_112, %c0_113, %c0_114] : memref<9x8x8xf32, #tpu.memory_space<vmem>>, vector<1x8x8xf32>
    %195 = vector.shape_cast %194 : vector<1x8x8xf32> to vector<8x8xf32>
    %cst_115 = arith.constant dense<0.000000e+00> : vector<8x256xf32>
    %196 = tpu.matmul %195, %193, %cst_115 {dimension_numbers = #tpu.dot_dimension_numbers<[1], [0], [0], [1], [0, 0, 1, 1], [], []>} : vector<8x8xf32>, vector<8x256xf32>, vector<8x256xf32> -> vector<8x256xf32>
    %197 = arith.addf %186, %196 : vector<8x256xf32>
    %198 = vector.extract_strided_slice %128 {offsets = [0, 16], sizes = [8, 240], strides = [1, 1]} : vector<8x256xf32> to vector<8x240xf32>
    %199 = vector.extract_strided_slice %128 {offsets = [0, 0], sizes = [8, 16], strides = [1, 1]} : vector<8x256xf32> to vector<8x16xf32>
    %200 = tpu.concatenate %198, %199 in 1 : vector<8x240xf32>, vector<8x16xf32> -> vector<8x256xf32>
    %c7_116 = arith.constant 7 : index
    %c0_117 = arith.constant 0 : index
    %c0_118 = arith.constant 0 : index
    %201 = vector.load %arg1[%c7_116, %c0_117, %c0_118] : memref<9x1x256xf32, #tpu.memory_space<vmem>>, vector<1x1x256xf32>
    %202 = vector.shape_cast %201 : vector<1x1x256xf32> to vector<1x256xf32>
    %203 = vector.broadcast %202 : vector<1x256xf32> to vector<8x256xf32>
    %204 = arith.mulf %200, %203 : vector<8x256xf32>
    %c7_119 = arith.constant 7 : index
    %c0_120 = arith.constant 0 : index
    %c0_121 = arith.constant 0 : index
    %205 = vector.load %arg6[%c7_119, %c0_120, %c0_121] : memref<9x8x8xf32, #tpu.memory_space<vmem>>, vector<1x8x8xf32>
    %206 = vector.shape_cast %205 : vector<1x8x8xf32> to vector<8x8xf32>
    %cst_122 = arith.constant dense<0.000000e+00> : vector<8x256xf32>
    %207 = tpu.matmul %206, %204, %cst_122 {dimension_numbers = #tpu.dot_dimension_numbers<[1], [0], [0], [1], [0, 0, 1, 1], [], []>} : vector<8x8xf32>, vector<8x256xf32>, vector<8x256xf32> -> vector<8x256xf32>
    %208 = arith.addf %197, %207 : vector<8x256xf32>
    %209 = vector.extract_strided_slice %128 {offsets = [0, 17], sizes = [8, 239], strides = [1, 1]} : vector<8x256xf32> to vector<8x239xf32>
    %210 = vector.extract_strided_slice %128 {offsets = [0, 0], sizes = [8, 17], strides = [1, 1]} : vector<8x256xf32> to vector<8x17xf32>
    %211 = tpu.concatenate %209, %210 in 1 : vector<8x239xf32>, vector<8x17xf32> -> vector<8x256xf32>
    %c8_123 = arith.constant 8 : index
    %c0_124 = arith.constant 0 : index
    %c0_125 = arith.constant 0 : index
    %212 = vector.load %arg1[%c8_123, %c0_124, %c0_125] : memref<9x1x256xf32, #tpu.memory_space<vmem>>, vector<1x1x256xf32>
    %213 = vector.shape_cast %212 : vector<1x1x256xf32> to vector<1x256xf32>
    %214 = vector.broadcast %213 : vector<1x256xf32> to vector<8x256xf32>
    %215 = arith.mulf %211, %214 : vector<8x256xf32>
    %c8_126 = arith.constant 8 : index
    %c0_127 = arith.constant 0 : index
    %c0_128 = arith.constant 0 : index
    %216 = vector.load %arg6[%c8_126, %c0_127, %c0_128] : memref<9x8x8xf32, #tpu.memory_space<vmem>>, vector<1x8x8xf32>
    %217 = vector.shape_cast %216 : vector<1x8x8xf32> to vector<8x8xf32>
    %cst_129 = arith.constant dense<0.000000e+00> : vector<8x256xf32>
    %218 = tpu.matmul %217, %215, %cst_129 {dimension_numbers = #tpu.dot_dimension_numbers<[1], [0], [0], [1], [0, 0, 1, 1], [], []>} : vector<8x8xf32>, vector<8x256xf32>, vector<8x256xf32> -> vector<8x256xf32>
    %219 = arith.addf %208, %218 : vector<8x256xf32>
    %220 = vector.shape_cast %219 : vector<8x256xf32> to vector<1x8x256xf32>
    %cst_130 = arith.constant dense<0.000000e+00> : vector<1xf32>
    %221 = vector.multi_reduction <add>, %220, %cst_130 [1, 2] : vector<1x8x256xf32> to vector<1xf32>
    %222 = vector.shape_cast %221 : vector<1xf32> to vector<1x1x1xf32>
    %223 = vector.extract %222[0, 0, 0] : f32 from vector<1x1x1xf32>
    %cst_131 = arith.constant 2.048000e+03 : f32
    %224 = arith.divf %223, %cst_131 : f32
    %225 = arith.mulf %219, %219 : vector<8x256xf32>
    %226 = vector.shape_cast %225 : vector<8x256xf32> to vector<1x8x256xf32>
    %cst_132 = arith.constant dense<0.000000e+00> : vector<1xf32>
    %227 = vector.multi_reduction <add>, %226, %cst_132 [1, 2] : vector<1x8x256xf32> to vector<1xf32>
    %228 = vector.shape_cast %227 : vector<1xf32> to vector<1x1x1xf32>
    %229 = vector.extract %228[0, 0, 0] : f32 from vector<1x1x1xf32>
    %cst_133 = arith.constant 2.048000e+03 : f32
    %230 = arith.divf %229, %cst_133 : f32
    %231 = arith.mulf %224, %224 : f32
    %232 = arith.subf %230, %231 : f32
    %cst_134 = arith.constant 0.000000e+00 : f32
    %233 = arith.maximumf %232, %cst_134 : f32
    %234 = vector.broadcast %224 : f32 to vector<8x256xf32>
    %235 = arith.subf %219, %234 : vector<8x256xf32>
    %cst_135 = arith.constant 9.99999974E-6 : f32
    %236 = arith.addf %233, %cst_135 : f32
    %237 = math.rsqrt %236 : f32
    %238 = vector.broadcast %237 : f32 to vector<8x256xf32>
    %239 = arith.mulf %235, %238 : vector<8x256xf32>
    %240 = vector.broadcast %2 : vector<8x1xf32> to vector<8x256xf32>
    %241 = arith.mulf %239, %240 : vector<8x256xf32>
    %242 = vector.broadcast %3 : vector<8x1xf32> to vector<8x256xf32>
    %243 = arith.addf %241, %242 : vector<8x256xf32>
    %c0_136 = arith.constant 0 : index
    %c0_137 = arith.constant 0 : index
    %c0_138 = arith.constant 0 : index
    %244 = vector.load %arg9[%c0_136, %c0_137, %c0_138] : memref<2x8x256xf32, #tpu.memory_space<vmem>>, vector<1x8x256xf32>
    %245 = vector.shape_cast %244 : vector<1x8x256xf32> to vector<8x256xf32>
    %246 = vector.shape_cast %243 : vector<8x256xf32> to vector<1x8x256xf32>
    tpu.vector_store %arg9[%c0_136, %c0_137, %c0_138], %246 {strides = array<i32>} : memref<2x8x256xf32, #tpu.memory_space<vmem>>, vector<1x8x256xf32>,
    %c1_139 = arith.constant 1 : index
    %c0_140 = arith.constant 0 : index
    %c0_141 = arith.constant 0 : index
    %247 = vector.load %arg2[%c1_139, %c0_140, %c0_141] : memref<2x4x256xf32, #tpu.memory_space<vmem>>, vector<1x4x256xf32>
    %248 = vector.shape_cast %247 : vector<1x4x256xf32> to vector<4x256xf32>
    %249 = vector.extract_strided_slice %248 {offsets = [0, 239], sizes = [4, 17], strides = [1, 1]} : vector<4x256xf32> to vector<4x17xf32>
    %250 = vector.extract_strided_slice %248 {offsets = [0, 0], sizes = [4, 239], strides = [1, 1]} : vector<4x256xf32> to vector<4x239xf32>
    %251 = tpu.concatenate %249, %250 in 1 : vector<4x17xf32>, vector<4x239xf32> -> vector<4x256xf32>
    %c0_142 = arith.constant 0 : index
    %c0_143 = arith.constant 0 : index
    %c0_144 = arith.constant 0 : index
    %252 = vector.load %arg1[%c0_142, %c0_143, %c0_144] : memref<9x1x256xf32, #tpu.memory_space<vmem>>, vector<1x1x256xf32>
    %253 = vector.shape_cast %252 : vector<1x1x256xf32> to vector<1x256xf32>
    %254 = vector.broadcast %253 : vector<1x256xf32> to vector<4x256xf32>
    %255 = arith.mulf %251, %254 : vector<4x256xf32>
    %c0_145 = arith.constant 0 : index
    %c0_146 = arith.constant 0 : index
    %c0_147 = arith.constant 0 : index
    %256 = vector.load %arg3[%c0_145, %c0_146, %c0_147] : memref<9x8x4xf32, #tpu.memory_space<vmem>>, vector<1x8x4xf32>
    %257 = vector.shape_cast %256 : vector<1x8x4xf32> to vector<8x4xf32>
    %cst_148 = arith.constant dense<0.000000e+00> : vector<8x256xf32>
    %258 = tpu.matmul %257, %255, %cst_148 {dimension_numbers = #tpu.dot_dimension_numbers<[1], [0], [0], [1], [0, 0, 1, 1], [], []>} : vector<8x4xf32>, vector<4x256xf32>, vector<8x256xf32> -> vector<8x256xf32>
    %259 = vector.extract_strided_slice %248 {offsets = [0, 240], sizes = [4, 16], strides = [1, 1]} : vector<4x256xf32> to vector<4x16xf32>
    %260 = vector.extract_strided_slice %248 {offsets = [0, 0], sizes = [4, 240], strides = [1, 1]} : vector<4x256xf32> to vector<4x240xf32>
    %261 = tpu.concatenate %259, %260 in 1 : vector<4x16xf32>, vector<4x240xf32> -> vector<4x256xf32>
    %c1_149 = arith.constant 1 : index
    %c0_150 = arith.constant 0 : index
    %c0_151 = arith.constant 0 : index
    %262 = vector.load %arg1[%c1_149, %c0_150, %c0_151] : memref<9x1x256xf32, #tpu.memory_space<vmem>>, vector<1x1x256xf32>
    %263 = vector.shape_cast %262 : vector<1x1x256xf32> to vector<1x256xf32>
    %264 = vector.broadcast %263 : vector<1x256xf32> to vector<4x256xf32>
    %265 = arith.mulf %261, %264 : vector<4x256xf32>
    %c1_152 = arith.constant 1 : index
    %c0_153 = arith.constant 0 : index
    %c0_154 = arith.constant 0 : index
    %266 = vector.load %arg3[%c1_152, %c0_153, %c0_154] : memref<9x8x4xf32, #tpu.memory_space<vmem>>, vector<1x8x4xf32>
    %267 = vector.shape_cast %266 : vector<1x8x4xf32> to vector<8x4xf32>
    %cst_155 = arith.constant dense<0.000000e+00> : vector<8x256xf32>
    %268 = tpu.matmul %267, %265, %cst_155 {dimension_numbers = #tpu.dot_dimension_numbers<[1], [0], [0], [1], [0, 0, 1, 1], [], []>} : vector<8x4xf32>, vector<4x256xf32>, vector<8x256xf32> -> vector<8x256xf32>
    %269 = arith.addf %258, %268 : vector<8x256xf32>
    %270 = vector.extract_strided_slice %248 {offsets = [0, 241], sizes = [4, 15], strides = [1, 1]} : vector<4x256xf32> to vector<4x15xf32>
    %271 = vector.extract_strided_slice %248 {offsets = [0, 0], sizes = [4, 241], strides = [1, 1]} : vector<4x256xf32> to vector<4x241xf32>
    %272 = tpu.concatenate %270, %271 in 1 : vector<4x15xf32>, vector<4x241xf32> -> vector<4x256xf32>
    %c2_156 = arith.constant 2 : index
    %c0_157 = arith.constant 0 : index
    %c0_158 = arith.constant 0 : index
    %273 = vector.load %arg1[%c2_156, %c0_157, %c0_158] : memref<9x1x256xf32, #tpu.memory_space<vmem>>, vector<1x1x256xf32>
    %274 = vector.shape_cast %273 : vector<1x1x256xf32> to vector<1x256xf32>
    %275 = vector.broadcast %274 : vector<1x256xf32> to vector<4x256xf32>
    %276 = arith.mulf %272, %275 : vector<4x256xf32>
    %c2_159 = arith.constant 2 : index
    %c0_160 = arith.constant 0 : index
    %c0_161 = arith.constant 0 : index
    %277 = vector.load %arg3[%c2_159, %c0_160, %c0_161] : memref<9x8x4xf32, #tpu.memory_space<vmem>>, vector<1x8x4xf32>
    %278 = vector.shape_cast %277 : vector<1x8x4xf32> to vector<8x4xf32>
    %cst_162 = arith.constant dense<0.000000e+00> : vector<8x256xf32>
    %279 = tpu.matmul %278, %276, %cst_162 {dimension_numbers = #tpu.dot_dimension_numbers<[1], [0], [0], [1], [0, 0, 1, 1], [], []>} : vector<8x4xf32>, vector<4x256xf32>, vector<8x256xf32> -> vector<8x256xf32>
    %280 = arith.addf %269, %279 : vector<8x256xf32>
    %281 = vector.extract_strided_slice %248 {offsets = [0, 255], sizes = [4, 1], strides = [1, 1]} : vector<4x256xf32> to vector<4x1xf32>
    %282 = vector.extract_strided_slice %248 {offsets = [0, 0], sizes = [4, 255], strides = [1, 1]} : vector<4x256xf32> to vector<4x255xf32>
    %283 = tpu.concatenate %281, %282 in 1 : vector<4x1xf32>, vector<4x255xf32> -> vector<4x256xf32>
    %c3_163 = arith.constant 3 : index
    %c0_164 = arith.constant 0 : index
    %c0_165 = arith.constant 0 : index
    %284 = vector.load %arg1[%c3_163, %c0_164, %c0_165] : memref<9x1x256xf32, #tpu.memory_space<vmem>>, vector<1x1x256xf32>
    %285 = vector.shape_cast %284 : vector<1x1x256xf32> to vector<1x256xf32>
    %286 = vector.broadcast %285 : vector<1x256xf32> to vector<4x256xf32>
    %287 = arith.mulf %283, %286 : vector<4x256xf32>
    %c3_166 = arith.constant 3 : index
    %c0_167 = arith.constant 0 : index
    %c0_168 = arith.constant 0 : index
    %288 = vector.load %arg3[%c3_166, %c0_167, %c0_168] : memref<9x8x4xf32, #tpu.memory_space<vmem>>, vector<1x8x4xf32>
    %289 = vector.shape_cast %288 : vector<1x8x4xf32> to vector<8x4xf32>
    %cst_169 = arith.constant dense<0.000000e+00> : vector<8x256xf32>
    %290 = tpu.matmul %289, %287, %cst_169 {dimension_numbers = #tpu.dot_dimension_numbers<[1], [0], [0], [1], [0, 0, 1, 1], [], []>} : vector<8x4xf32>, vector<4x256xf32>, vector<8x256xf32> -> vector<8x256xf32>
    %291 = arith.addf %280, %290 : vector<8x256xf32>
    %c4_170 = arith.constant 4 : index
    %c0_171 = arith.constant 0 : index
    %c0_172 = arith.constant 0 : index
    %292 = vector.load %arg3[%c4_170, %c0_171, %c0_172] : memref<9x8x4xf32, #tpu.memory_space<vmem>>, vector<1x8x4xf32>
    %293 = vector.shape_cast %292 : vector<1x8x4xf32> to vector<8x4xf32>
    %cst_173 = arith.constant dense<0.000000e+00> : vector<8x256xf32>
    %294 = tpu.matmul %293, %248, %cst_173 {dimension_numbers = #tpu.dot_dimension_numbers<[1], [0], [0], [1], [0, 0, 1, 1], [], []>} : vector<8x4xf32>, vector<4x256xf32>, vector<8x256xf32> -> vector<8x256xf32>
    %295 = arith.addf %291, %294 : vector<8x256xf32>
    %296 = vector.extract_strided_slice %248 {offsets = [0, 1], sizes = [4, 255], strides = [1, 1]} : vector<4x256xf32> to vector<4x255xf32>
    %297 = vector.extract_strided_slice %248 {offsets = [0, 0], sizes = [4, 1], strides = [1, 1]} : vector<4x256xf32> to vector<4x1xf32>
    %298 = tpu.concatenate %296, %297 in 1 : vector<4x255xf32>, vector<4x1xf32> -> vector<4x256xf32>
    %c5_174 = arith.constant 5 : index
    %c0_175 = arith.constant 0 : index
    %c0_176 = arith.constant 0 : index
    %299 = vector.load %arg1[%c5_174, %c0_175, %c0_176] : memref<9x1x256xf32, #tpu.memory_space<vmem>>, vector<1x1x256xf32>
    %300 = vector.shape_cast %299 : vector<1x1x256xf32> to vector<1x256xf32>
    %301 = vector.broadcast %300 : vector<1x256xf32> to vector<4x256xf32>
    %302 = arith.mulf %298, %301 : vector<4x256xf32>
    %c5_177 = arith.constant 5 : index
    %c0_178 = arith.constant 0 : index
    %c0_179 = arith.constant 0 : index
    %303 = vector.load %arg3[%c5_177, %c0_178, %c0_179] : memref<9x8x4xf32, #tpu.memory_space<vmem>>, vector<1x8x4xf32>
    %304 = vector.shape_cast %303 : vector<1x8x4xf32> to vector<8x4xf32>
    %cst_180 = arith.constant dense<0.000000e+00> : vector<8x256xf32>
    %305 = tpu.matmul %304, %302, %cst_180 {dimension_numbers = #tpu.dot_dimension_numbers<[1], [0], [0], [1], [0, 0, 1, 1], [], []>} : vector<8x4xf32>, vector<4x256xf32>, vector<8x256xf32> -> vector<8x256xf32>
    %306 = arith.addf %295, %305 : vector<8x256xf32>
    %307 = vector.extract_strided_slice %248 {offsets = [0, 15], sizes = [4, 241], strides = [1, 1]} : vector<4x256xf32> to vector<4x241xf32>
    %308 = vector.extract_strided_slice %248 {offsets = [0, 0], sizes = [4, 15], strides = [1, 1]} : vector<4x256xf32> to vector<4x15xf32>
    %309 = tpu.concatenate %307, %308 in 1 : vector<4x241xf32>, vector<4x15xf32> -> vector<4x256xf32>
    %c6_181 = arith.constant 6 : index
    %c0_182 = arith.constant 0 : index
    %c0_183 = arith.constant 0 : index
    %310 = vector.load %arg1[%c6_181, %c0_182, %c0_183] : memref<9x1x256xf32, #tpu.memory_space<vmem>>, vector<1x1x256xf32>
    %311 = vector.shape_cast %310 : vector<1x1x256xf32> to vector<1x256xf32>
    %312 = vector.broadcast %311 : vector<1x256xf32> to vector<4x256xf32>
    %313 = arith.mulf %309, %312 : vector<4x256xf32>
    %c6_184 = arith.constant 6 : index
    %c0_185 = arith.constant 0 : index
    %c0_186 = arith.constant 0 : index
    %314 = vector.load %arg3[%c6_184, %c0_185, %c0_186] : memref<9x8x4xf32, #tpu.memory_space<vmem>>, vector<1x8x4xf32>
    %315 = vector.shape_cast %314 : vector<1x8x4xf32> to vector<8x4xf32>
    %cst_187 = arith.constant dense<0.000000e+00> : vector<8x256xf32>
    %316 = tpu.matmul %315, %313, %cst_187 {dimension_numbers = #tpu.dot_dimension_numbers<[1], [0], [0], [1], [0, 0, 1, 1], [], []>} : vector<8x4xf32>, vector<4x256xf32>, vector<8x256xf32> -> vector<8x256xf32>
    %317 = arith.addf %306, %316 : vector<8x256xf32>
    %318 = vector.extract_strided_slice %248 {offsets = [0, 16], sizes = [4, 240], strides = [1, 1]} : vector<4x256xf32> to vector<4x240xf32>
    %319 = vector.extract_strided_slice %248 {offsets = [0, 0], sizes = [4, 16], strides = [1, 1]} : vector<4x256xf32> to vector<4x16xf32>
    %320 = tpu.concatenate %318, %319 in 1 : vector<4x240xf32>, vector<4x16xf32> -> vector<4x256xf32>
    %c7_188 = arith.constant 7 : index
    %c0_189 = arith.constant 0 : index
    %c0_190 = arith.constant 0 : index
    %321 = vector.load %arg1[%c7_188, %c0_189, %c0_190] : memref<9x1x256xf32, #tpu.memory_space<vmem>>, vector<1x1x256xf32>
    %322 = vector.shape_cast %321 : vector<1x1x256xf32> to vector<1x256xf32>
    %323 = vector.broadcast %322 : vector<1x256xf32> to vector<4x256xf32>
    %324 = arith.mulf %320, %323 : vector<4x256xf32>
    %c7_191 = arith.constant 7 : index
    %c0_192 = arith.constant 0 : index
    %c0_193 = arith.constant 0 : index
    %325 = vector.load %arg3[%c7_191, %c0_192, %c0_193] : memref<9x8x4xf32, #tpu.memory_space<vmem>>, vector<1x8x4xf32>
    %326 = vector.shape_cast %325 : vector<1x8x4xf32> to vector<8x4xf32>
    %cst_194 = arith.constant dense<0.000000e+00> : vector<8x256xf32>
    %327 = tpu.matmul %326, %324, %cst_194 {dimension_numbers = #tpu.dot_dimension_numbers<[1], [0], [0], [1], [0, 0, 1, 1], [], []>} : vector<8x4xf32>, vector<4x256xf32>, vector<8x256xf32> -> vector<8x256xf32>
    %328 = arith.addf %317, %327 : vector<8x256xf32>
    %329 = vector.extract_strided_slice %248 {offsets = [0, 17], sizes = [4, 239], strides = [1, 1]} : vector<4x256xf32> to vector<4x239xf32>
    %330 = vector.extract_strided_slice %248 {offsets = [0, 0], sizes = [4, 17], strides = [1, 1]} : vector<4x256xf32> to vector<4x17xf32>
    %331 = tpu.concatenate %329, %330 in 1 : vector<4x239xf32>, vector<4x17xf32> -> vector<4x256xf32>
    %c8_195 = arith.constant 8 : index
    %c0_196 = arith.constant 0 : index
    %c0_197 = arith.constant 0 : index
    %332 = vector.load %arg1[%c8_195, %c0_196, %c0_197] : memref<9x1x256xf32, #tpu.memory_space<vmem>>, vector<1x1x256xf32>
    %333 = vector.shape_cast %332 : vector<1x1x256xf32> to vector<1x256xf32>
    %334 = vector.broadcast %333 : vector<1x256xf32> to vector<4x256xf32>
    %335 = arith.mulf %331, %334 : vector<4x256xf32>
    %c8_198 = arith.constant 8 : index
    %c0_199 = arith.constant 0 : index
    %c0_200 = arith.constant 0 : index
    %336 = vector.load %arg3[%c8_198, %c0_199, %c0_200] : memref<9x8x4xf32, #tpu.memory_space<vmem>>, vector<1x8x4xf32>
    %337 = vector.shape_cast %336 : vector<1x8x4xf32> to vector<8x4xf32>
    %cst_201 = arith.constant dense<0.000000e+00> : vector<8x256xf32>
    %338 = tpu.matmul %337, %335, %cst_201 {dimension_numbers = #tpu.dot_dimension_numbers<[1], [0], [0], [1], [0, 0, 1, 1], [], []>} : vector<8x4xf32>, vector<4x256xf32>, vector<8x256xf32> -> vector<8x256xf32>
    %339 = arith.addf %328, %338 : vector<8x256xf32>
    %340 = vector.shape_cast %339 : vector<8x256xf32> to vector<1x8x256xf32>
    %cst_202 = arith.constant dense<0.000000e+00> : vector<1xf32>
    %341 = vector.multi_reduction <add>, %340, %cst_202 [1, 2] : vector<1x8x256xf32> to vector<1xf32>
    %342 = vector.shape_cast %341 : vector<1xf32> to vector<1x1x1xf32>
    %343 = vector.extract %342[0, 0, 0] : f32 from vector<1x1x1xf32>
    %cst_203 = arith.constant 2.048000e+03 : f32
    %344 = arith.divf %343, %cst_203 : f32
    %345 = arith.mulf %339, %339 : vector<8x256xf32>
    %346 = vector.shape_cast %345 : vector<8x256xf32> to vector<1x8x256xf32>
    %cst_204 = arith.constant dense<0.000000e+00> : vector<1xf32>
    %347 = vector.multi_reduction <add>, %346, %cst_204 [1, 2] : vector<1x8x256xf32> to vector<1xf32>
    %348 = vector.shape_cast %347 : vector<1xf32> to vector<1x1x1xf32>
    %349 = vector.extract %348[0, 0, 0] : f32 from vector<1x1x1xf32>
    %cst_205 = arith.constant 2.048000e+03 : f32
    %350 = arith.divf %349, %cst_205 : f32
    %351 = arith.mulf %344, %344 : f32
    %352 = arith.subf %350, %351 : f32
    %cst_206 = arith.constant 0.000000e+00 : f32
    %353 = arith.maximumf %352, %cst_206 : f32
    %354 = vector.broadcast %344 : f32 to vector<8x256xf32>
    %355 = arith.subf %339, %354 : vector<8x256xf32>
    %cst_207 = arith.constant 9.99999974E-6 : f32
    %356 = arith.addf %353, %cst_207 : f32
    %357 = math.rsqrt %356 : f32
    %358 = vector.broadcast %357 : f32 to vector<8x256xf32>
    %359 = arith.mulf %355, %358 : vector<8x256xf32>
    %360 = vector.broadcast %0 : vector<8x1xf32> to vector<8x256xf32>
    %361 = arith.mulf %359, %360 : vector<8x256xf32>
    %362 = vector.broadcast %1 : vector<8x1xf32> to vector<8x256xf32>
    %363 = arith.addf %361, %362 : vector<8x256xf32>
    %cst_208 = arith.constant 5.000000e-01 : f32
    %364 = vector.broadcast %cst_208 : f32 to vector<8x256xf32>
    %365 = arith.mulf %364, %363 : vector<8x256xf32>
    %cst_209 = arith.constant 0.707106769 : f32
    %366 = vector.broadcast %cst_209 : f32 to vector<8x256xf32>
    %367 = arith.mulf %363, %366 : vector<8x256xf32>
    %368 = math.erf %367 : vector<8x256xf32>
    %cst_210 = arith.constant 1.000000e+00 : f32
    %369 = vector.broadcast %cst_210 : f32 to vector<8x256xf32>
    %370 = arith.addf %369, %368 : vector<8x256xf32>
    %371 = arith.mulf %365, %370 : vector<8x256xf32>
    %372 = vector.extract_strided_slice %371 {offsets = [0, 239], sizes = [8, 17], strides = [1, 1]} : vector<8x256xf32> to vector<8x17xf32>
    %373 = vector.extract_strided_slice %371 {offsets = [0, 0], sizes = [8, 239], strides = [1, 1]} : vector<8x256xf32> to vector<8x239xf32>
    %374 = tpu.concatenate %372, %373 in 1 : vector<8x17xf32>, vector<8x239xf32> -> vector<8x256xf32>
    %c0_211 = arith.constant 0 : index
    %c0_212 = arith.constant 0 : index
    %c0_213 = arith.constant 0 : index
    %375 = vector.load %arg1[%c0_211, %c0_212, %c0_213] : memref<9x1x256xf32, #tpu.memory_space<vmem>>, vector<1x1x256xf32>
    %376 = vector.shape_cast %375 : vector<1x1x256xf32> to vector<1x256xf32>
    %377 = vector.broadcast %376 : vector<1x256xf32> to vector<8x256xf32>
    %378 = arith.mulf %374, %377 : vector<8x256xf32>
    %c0_214 = arith.constant 0 : index
    %c0_215 = arith.constant 0 : index
    %c0_216 = arith.constant 0 : index
    %379 = vector.load %arg6[%c0_214, %c0_215, %c0_216] : memref<9x8x8xf32, #tpu.memory_space<vmem>>, vector<1x8x8xf32>
    %380 = vector.shape_cast %379 : vector<1x8x8xf32> to vector<8x8xf32>
    %cst_217 = arith.constant dense<0.000000e+00> : vector<8x256xf32>
    %381 = tpu.matmul %380, %378, %cst_217 {dimension_numbers = #tpu.dot_dimension_numbers<[1], [0], [0], [1], [0, 0, 1, 1], [], []>} : vector<8x8xf32>, vector<8x256xf32>, vector<8x256xf32> -> vector<8x256xf32>
    %382 = vector.extract_strided_slice %371 {offsets = [0, 240], sizes = [8, 16], strides = [1, 1]} : vector<8x256xf32> to vector<8x16xf32>
    %383 = vector.extract_strided_slice %371 {offsets = [0, 0], sizes = [8, 240], strides = [1, 1]} : vector<8x256xf32> to vector<8x240xf32>
    %384 = tpu.concatenate %382, %383 in 1 : vector<8x16xf32>, vector<8x240xf32> -> vector<8x256xf32>
    %c1_218 = arith.constant 1 : index
    %c0_219 = arith.constant 0 : index
    %c0_220 = arith.constant 0 : index
    %385 = vector.load %arg1[%c1_218, %c0_219, %c0_220] : memref<9x1x256xf32, #tpu.memory_space<vmem>>, vector<1x1x256xf32>
    %386 = vector.shape_cast %385 : vector<1x1x256xf32> to vector<1x256xf32>
    %387 = vector.broadcast %386 : vector<1x256xf32> to vector<8x256xf32>
    %388 = arith.mulf %384, %387 : vector<8x256xf32>
    %c1_221 = arith.constant 1 : index
    %c0_222 = arith.constant 0 : index
    %c0_223 = arith.constant 0 : index
    %389 = vector.load %arg6[%c1_221, %c0_222, %c0_223] : memref<9x8x8xf32, #tpu.memory_space<vmem>>, vector<1x8x8xf32>
    %390 = vector.shape_cast %389 : vector<1x8x8xf32> to vector<8x8xf32>
    %cst_224 = arith.constant dense<0.000000e+00> : vector<8x256xf32>
    %391 = tpu.matmul %390, %388, %cst_224 {dimension_numbers = #tpu.dot_dimension_numbers<[1], [0], [0], [1], [0, 0, 1, 1], [], []>} : vector<8x8xf32>, vector<8x256xf32>, vector<8x256xf32> -> vector<8x256xf32>
    %392 = arith.addf %381, %391 : vector<8x256xf32>
    %393 = vector.extract_strided_slice %371 {offsets = [0, 241], sizes = [8, 15], strides = [1, 1]} : vector<8x256xf32> to vector<8x15xf32>
    %394 = vector.extract_strided_slice %371 {offsets = [0, 0], sizes = [8, 241], strides = [1, 1]} : vector<8x256xf32> to vector<8x241xf32>
    %395 = tpu.concatenate %393, %394 in 1 : vector<8x15xf32>, vector<8x241xf32> -> vector<8x256xf32>
    %c2_225 = arith.constant 2 : index
    %c0_226 = arith.constant 0 : index
    %c0_227 = arith.constant 0 : index
    %396 = vector.load %arg1[%c2_225, %c0_226, %c0_227] : memref<9x1x256xf32, #tpu.memory_space<vmem>>, vector<1x1x256xf32>
    %397 = vector.shape_cast %396 : vector<1x1x256xf32> to vector<1x256xf32>
    %398 = vector.broadcast %397 : vector<1x256xf32> to vector<8x256xf32>
    %399 = arith.mulf %395, %398 : vector<8x256xf32>
    %c2_228 = arith.constant 2 : index
    %c0_229 = arith.constant 0 : index
    %c0_230 = arith.constant 0 : index
    %400 = vector.load %arg6[%c2_228, %c0_229, %c0_230] : memref<9x8x8xf32, #tpu.memory_space<vmem>>, vector<1x8x8xf32>
    %401 = vector.shape_cast %400 : vector<1x8x8xf32> to vector<8x8xf32>
    %cst_231 = arith.constant dense<0.000000e+00> : vector<8x256xf32>
    %402 = tpu.matmul %401, %399, %cst_231 {dimension_numbers = #tpu.dot_dimension_numbers<[1], [0], [0], [1], [0, 0, 1, 1], [], []>} : vector<8x8xf32>, vector<8x256xf32>, vector<8x256xf32> -> vector<8x256xf32>
    %403 = arith.addf %392, %402 : vector<8x256xf32>
    %404 = vector.extract_strided_slice %371 {offsets = [0, 255], sizes = [8, 1], strides = [1, 1]} : vector<8x256xf32> to vector<8x1xf32>
    %405 = vector.extract_strided_slice %371 {offsets = [0, 0], sizes = [8, 255], strides = [1, 1]} : vector<8x256xf32> to vector<8x255xf32>
    %406 = tpu.concatenate %404, %405 in 1 : vector<8x1xf32>, vector<8x255xf32> -> vector<8x256xf32>
    %c3_232 = arith.constant 3 : index
    %c0_233 = arith.constant 0 : index
    %c0_234 = arith.constant 0 : index
    %407 = vector.load %arg1[%c3_232, %c0_233, %c0_234] : memref<9x1x256xf32, #tpu.memory_space<vmem>>, vector<1x1x256xf32>
    %408 = vector.shape_cast %407 : vector<1x1x256xf32> to vector<1x256xf32>
    %409 = vector.broadcast %408 : vector<1x256xf32> to vector<8x256xf32>
    %410 = arith.mulf %406, %409 : vector<8x256xf32>
    %c3_235 = arith.constant 3 : index
    %c0_236 = arith.constant 0 : index
    %c0_237 = arith.constant 0 : index
    %411 = vector.load %arg6[%c3_235, %c0_236, %c0_237] : memref<9x8x8xf32, #tpu.memory_space<vmem>>, vector<1x8x8xf32>
    %412 = vector.shape_cast %411 : vector<1x8x8xf32> to vector<8x8xf32>
    %cst_238 = arith.constant dense<0.000000e+00> : vector<8x256xf32>
    %413 = tpu.matmul %412, %410, %cst_238 {dimension_numbers = #tpu.dot_dimension_numbers<[1], [0], [0], [1], [0, 0, 1, 1], [], []>} : vector<8x8xf32>, vector<8x256xf32>, vector<8x256xf32> -> vector<8x256xf32>
    %414 = arith.addf %403, %413 : vector<8x256xf32>
    %c4_239 = arith.constant 4 : index
    %c0_240 = arith.constant 0 : index
    %c0_241 = arith.constant 0 : index
    %415 = vector.load %arg6[%c4_239, %c0_240, %c0_241] : memref<9x8x8xf32, #tpu.memory_space<vmem>>, vector<1x8x8xf32>
    %416 = vector.shape_cast %415 : vector<1x8x8xf32> to vector<8x8xf32>
    %cst_242 = arith.constant dense<0.000000e+00> : vector<8x256xf32>
    %417 = tpu.matmul %416, %371, %cst_242 {dimension_numbers = #tpu.dot_dimension_numbers<[1], [0], [0], [1], [0, 0, 1, 1], [], []>} : vector<8x8xf32>, vector<8x256xf32>, vector<8x256xf32> -> vector<8x256xf32>
    %418 = arith.addf %414, %417 : vector<8x256xf32>
    %419 = vector.extract_strided_slice %371 {offsets = [0, 1], sizes = [8, 255], strides = [1, 1]} : vector<8x256xf32> to vector<8x255xf32>
    %420 = vector.extract_strided_slice %371 {offsets = [0, 0], sizes = [8, 1], strides = [1, 1]} : vector<8x256xf32> to vector<8x1xf32>
    %421 = tpu.concatenate %419, %420 in 1 : vector<8x255xf32>, vector<8x1xf32> -> vector<8x256xf32>
    %c5_243 = arith.constant 5 : index
    %c0_244 = arith.constant 0 : index
    %c0_245 = arith.constant 0 : index
    %422 = vector.load %arg1[%c5_243, %c0_244, %c0_245] : memref<9x1x256xf32, #tpu.memory_space<vmem>>, vector<1x1x256xf32>
    %423 = vector.shape_cast %422 : vector<1x1x256xf32> to vector<1x256xf32>
    %424 = vector.broadcast %423 : vector<1x256xf32> to vector<8x256xf32>
    %425 = arith.mulf %421, %424 : vector<8x256xf32>
    %c5_246 = arith.constant 5 : index
    %c0_247 = arith.constant 0 : index
    %c0_248 = arith.constant 0 : index
    %426 = vector.load %arg6[%c5_246, %c0_247, %c0_248] : memref<9x8x8xf32, #tpu.memory_space<vmem>>, vector<1x8x8xf32>
    %427 = vector.shape_cast %426 : vector<1x8x8xf32> to vector<8x8xf32>
    %cst_249 = arith.constant dense<0.000000e+00> : vector<8x256xf32>
    %428 = tpu.matmul %427, %425, %cst_249 {dimension_numbers = #tpu.dot_dimension_numbers<[1], [0], [0], [1], [0, 0, 1, 1], [], []>} : vector<8x8xf32>, vector<8x256xf32>, vector<8x256xf32> -> vector<8x256xf32>
    %429 = arith.addf %418, %428 : vector<8x256xf32>
    %430 = vector.extract_strided_slice %371 {offsets = [0, 15], sizes = [8, 241], strides = [1, 1]} : vector<8x256xf32> to vector<8x241xf32>
    %431 = vector.extract_strided_slice %371 {offsets = [0, 0], sizes = [8, 15], strides = [1, 1]} : vector<8x256xf32> to vector<8x15xf32>
    %432 = tpu.concatenate %430, %431 in 1 : vector<8x241xf32>, vector<8x15xf32> -> vector<8x256xf32>
    %c6_250 = arith.constant 6 : index
    %c0_251 = arith.constant 0 : index
    %c0_252 = arith.constant 0 : index
    %433 = vector.load %arg1[%c6_250, %c0_251, %c0_252] : memref<9x1x256xf32, #tpu.memory_space<vmem>>, vector<1x1x256xf32>
    %434 = vector.shape_cast %433 : vector<1x1x256xf32> to vector<1x256xf32>
    %435 = vector.broadcast %434 : vector<1x256xf32> to vector<8x256xf32>
    %436 = arith.mulf %432, %435 : vector<8x256xf32>
    %c6_253 = arith.constant 6 : index
    %c0_254 = arith.constant 0 : index
    %c0_255 = arith.constant 0 : index
    %437 = vector.load %arg6[%c6_253, %c0_254, %c0_255] : memref<9x8x8xf32, #tpu.memory_space<vmem>>, vector<1x8x8xf32>
    %438 = vector.shape_cast %437 : vector<1x8x8xf32> to vector<8x8xf32>
    %cst_256 = arith.constant dense<0.000000e+00> : vector<8x256xf32>
    %439 = tpu.matmul %438, %436, %cst_256 {dimension_numbers = #tpu.dot_dimension_numbers<[1], [0], [0], [1], [0, 0, 1, 1], [], []>} : vector<8x8xf32>, vector<8x256xf32>, vector<8x256xf32> -> vector<8x256xf32>
    %440 = arith.addf %429, %439 : vector<8x256xf32>
    %441 = vector.extract_strided_slice %371 {offsets = [0, 16], sizes = [8, 240], strides = [1, 1]} : vector<8x256xf32> to vector<8x240xf32>
    %442 = vector.extract_strided_slice %371 {offsets = [0, 0], sizes = [8, 16], strides = [1, 1]} : vector<8x256xf32> to vector<8x16xf32>
    %443 = tpu.concatenate %441, %442 in 1 : vector<8x240xf32>, vector<8x16xf32> -> vector<8x256xf32>
    %c7_257 = arith.constant 7 : index
    %c0_258 = arith.constant 0 : index
    %c0_259 = arith.constant 0 : index
    %444 = vector.load %arg1[%c7_257, %c0_258, %c0_259] : memref<9x1x256xf32, #tpu.memory_space<vmem>>, vector<1x1x256xf32>
    %445 = vector.shape_cast %444 : vector<1x1x256xf32> to vector<1x256xf32>
    %446 = vector.broadcast %445 : vector<1x256xf32> to vector<8x256xf32>
    %447 = arith.mulf %443, %446 : vector<8x256xf32>
    %c7_260 = arith.constant 7 : index
    %c0_261 = arith.constant 0 : index
    %c0_262 = arith.constant 0 : index
    %448 = vector.load %arg6[%c7_260, %c0_261, %c0_262] : memref<9x8x8xf32, #tpu.memory_space<vmem>>, vector<1x8x8xf32>
    %449 = vector.shape_cast %448 : vector<1x8x8xf32> to vector<8x8xf32>
    %cst_263 = arith.constant dense<0.000000e+00> : vector<8x256xf32>
    %450 = tpu.matmul %449, %447, %cst_263 {dimension_numbers = #tpu.dot_dimension_numbers<[1], [0], [0], [1], [0, 0, 1, 1], [], []>} : vector<8x8xf32>, vector<8x256xf32>, vector<8x256xf32> -> vector<8x256xf32>
    %451 = arith.addf %440, %450 : vector<8x256xf32>
    %452 = vector.extract_strided_slice %371 {offsets = [0, 17], sizes = [8, 239], strides = [1, 1]} : vector<8x256xf32> to vector<8x239xf32>
    %453 = vector.extract_strided_slice %371 {offsets = [0, 0], sizes = [8, 17], strides = [1, 1]} : vector<8x256xf32> to vector<8x17xf32>
    %454 = tpu.concatenate %452, %453 in 1 : vector<8x239xf32>, vector<8x17xf32> -> vector<8x256xf32>
    %c8_264 = arith.constant 8 : index
    %c0_265 = arith.constant 0 : index
    %c0_266 = arith.constant 0 : index
    %455 = vector.load %arg1[%c8_264, %c0_265, %c0_266] : memref<9x1x256xf32, #tpu.memory_space<vmem>>, vector<1x1x256xf32>
    %456 = vector.shape_cast %455 : vector<1x1x256xf32> to vector<1x256xf32>
    %457 = vector.broadcast %456 : vector<1x256xf32> to vector<8x256xf32>
    %458 = arith.mulf %454, %457 : vector<8x256xf32>
    %c8_267 = arith.constant 8 : index
    %c0_268 = arith.constant 0 : index
    %c0_269 = arith.constant 0 : index
    %459 = vector.load %arg6[%c8_267, %c0_268, %c0_269] : memref<9x8x8xf32, #tpu.memory_space<vmem>>, vector<1x8x8xf32>
    %460 = vector.shape_cast %459 : vector<1x8x8xf32> to vector<8x8xf32>
    %cst_270 = arith.constant dense<0.000000e+00> : vector<8x256xf32>
    %461 = tpu.matmul %460, %458, %cst_270 {dimension_numbers = #tpu.dot_dimension_numbers<[1], [0], [0], [1], [0, 0, 1, 1], [], []>} : vector<8x8xf32>, vector<8x256xf32>, vector<8x256xf32> -> vector<8x256xf32>
    %462 = arith.addf %451, %461 : vector<8x256xf32>
    %463 = vector.shape_cast %462 : vector<8x256xf32> to vector<1x8x256xf32>
    %cst_271 = arith.constant dense<0.000000e+00> : vector<1xf32>
    %464 = vector.multi_reduction <add>, %463, %cst_271 [1, 2] : vector<1x8x256xf32> to vector<1xf32>
    %465 = vector.shape_cast %464 : vector<1xf32> to vector<1x1x1xf32>
    %466 = vector.extract %465[0, 0, 0] : f32 from vector<1x1x1xf32>
    %cst_272 = arith.constant 2.048000e+03 : f32
    %467 = arith.divf %466, %cst_272 : f32
    %468 = arith.mulf %462, %462 : vector<8x256xf32>
    %469 = vector.shape_cast %468 : vector<8x256xf32> to vector<1x8x256xf32>
    %cst_273 = arith.constant dense<0.000000e+00> : vector<1xf32>
    %470 = vector.multi_reduction <add>, %469, %cst_273 [1, 2] : vector<1x8x256xf32> to vector<1xf32>
    %471 = vector.shape_cast %470 : vector<1xf32> to vector<1x1x1xf32>
    %472 = vector.extract %471[0, 0, 0] : f32 from vector<1x1x1xf32>
    %cst_274 = arith.constant 2.048000e+03 : f32
    %473 = arith.divf %472, %cst_274 : f32
    %474 = arith.mulf %467, %467 : f32
    %475 = arith.subf %473, %474 : f32
    %cst_275 = arith.constant 0.000000e+00 : f32
    %476 = arith.maximumf %475, %cst_275 : f32
    %477 = vector.broadcast %467 : f32 to vector<8x256xf32>
    %478 = arith.subf %462, %477 : vector<8x256xf32>
    %cst_276 = arith.constant 9.99999974E-6 : f32
    %479 = arith.addf %476, %cst_276 : f32
    %480 = math.rsqrt %479 : f32
    %481 = vector.broadcast %480 : f32 to vector<8x256xf32>
    %482 = arith.mulf %478, %481 : vector<8x256xf32>
    %483 = vector.broadcast %2 : vector<8x1xf32> to vector<8x256xf32>
    %484 = arith.mulf %482, %483 : vector<8x256xf32>
    %485 = vector.broadcast %3 : vector<8x1xf32> to vector<8x256xf32>
    %486 = arith.addf %484, %485 : vector<8x256xf32>
    %c1_277 = arith.constant 1 : index
    %c0_278 = arith.constant 0 : index
    %c0_279 = arith.constant 0 : index
    %487 = vector.load %arg9[%c1_277, %c0_278, %c0_279] : memref<2x8x256xf32, #tpu.memory_space<vmem>>, vector<1x8x256xf32>
    %488 = vector.shape_cast %487 : vector<1x8x256xf32> to vector<8x256xf32>
    %489 = vector.shape_cast %486 : vector<8x256xf32> to vector<1x8x256xf32>
    tpu.vector_store %arg9[%c1_277, %c0_278, %c0_279], %489 {strides = array<i32>} : memref<2x8x256xf32, #tpu.memory_space<vmem>>, vector<1x8x256xf32>,
    return
  }
  func.func @transform_0(%arg0: i32) -> (i32, i32, i32) {
    %c0_i32 = arith.constant 0 : i32
    %c0_i32_0 = arith.constant 0 : i32
    %c0_i32_1 = arith.constant 0 : i32
    %c0_i32_2 = arith.constant 0 : i32
    return %c0_i32, %c0_i32_0, %c0_i32_1 : i32, i32, i32
  }
  func.func @transform_1(%arg0: i32) -> (i32, i32, i32) {
    %c0_i32 = arith.constant 0 : i32
    %c0_i32_0 = arith.constant 0 : i32
    %c0_i32_1 = arith.constant 0 : i32
    return %arg0, %c0_i32, %c0_i32_0 : i32, i32, i32
  }
  func.func @transform_2(%arg0: i32) -> (i32, i32, i32) {
    %c0_i32 = arith.constant 0 : i32
    %c0_i32_0 = arith.constant 0 : i32
    %c0_i32_1 = arith.constant 0 : i32
    %c0_i32_2 = arith.constant 0 : i32
    return %c0_i32, %c0_i32_0, %c0_i32_1 : i32, i32, i32
  }
  func.func @transform_3(%arg0: i32) -> (i32, i32) {
    %c0_i32 = arith.constant 0 : i32
    %c0_i32_0 = arith.constant 0 : i32
    %c0_i32_1 = arith.constant 0 : i32
    return %c0_i32, %c0_i32_0 : i32, i32
  }
  func.func @transform_4(%arg0: i32) -> (i32, i32) {
    %c0_i32 = arith.constant 0 : i32
    %c0_i32_0 = arith.constant 0 : i32
    %c0_i32_1 = arith.constant 0 : i32
    return %c0_i32, %c0_i32_0 : i32, i32
  }
  func.func @transform_5(%arg0: i32) -> (i32, i32, i32) {
    %c0_i32 = arith.constant 0 : i32
    %c0_i32_0 = arith.constant 0 : i32
    %c0_i32_1 = arith.constant 0 : i32
    %c0_i32_2 = arith.constant 0 : i32
    return %c0_i32, %c0_i32_0, %c0_i32_1 : i32, i32, i32
  }
  func.func @transform_6(%arg0: i32) -> (i32, i32) {
    %c0_i32 = arith.constant 0 : i32
    %c0_i32_0 = arith.constant 0 : i32
    %c0_i32_1 = arith.constant 0 : i32
    return %c0_i32, %c0_i32_0 : i32, i32
  }
  func.func @transform_7(%arg0: i32) -> (i32, i32) {
    %c0_i32 = arith.constant 0 : i32
    %c0_i32_0 = arith.constant 0 : i32
    %c0_i32_1 = arith.constant 0 : i32
    return %c0_i32, %c0_i32_0 : i32, i32
  }
  func.func @transform_8(%arg0: i32) -> (i32, i32, i32) {
    %c0_i32 = arith.constant 0 : i32
    %c0_i32_0 = arith.constant 0 : i32
    %c0_i32_1 = arith.constant 0 : i32
    return %arg0, %c0_i32, %c0_i32_0 : i32, i32, i32
  }
}

</mosaic_0001>

<llo_original>
// kernel: tpu_custom_call.1
$region0: #{tpu_custom_call.1}
  #allocation0 [shape = 'u32[]', space=smem, size = 0x4, offset = 0x4, fixed_abs, tag = 'smem constant byte address 0x4 - core index']
  #allocation1 [shape = 'u32[144,128]{1,0:T(1,128)}', space=vmem, size = 0x12000, scoped, tag = 'internal scratch']
  %s0 = inlined_call_operand.vmem [shape: f32[9,1,256], index: 0, kind: input, shape index: {}]
  %s1 = inlined_call_operand.vmem [shape: f32[2,4,256], index: 1, kind: input, shape index: {}]
  %s2 = inlined_call_operand.vmem [shape: f32[9,8,4], index: 2, kind: input, shape index: {}]
  %s3 = inlined_call_operand.vmem [shape: f32[8,1], index: 3, kind: input, shape index: {}]
  %s4 = inlined_call_operand.vmem [shape: f32[8,1], index: 4, kind: input, shape index: {}]
  %s5 = inlined_call_operand.vmem [shape: f32[9,8,8], index: 5, kind: input, shape index: {}]
  %s6 = inlined_call_operand.vmem [shape: f32[8,1], index: 6, kind: input, shape index: {}]
  %s7 = inlined_call_operand.vmem [shape: f32[8,1], index: 7, kind: input, shape index: {}]
  %s8 = inlined_call_operand.hbm [shape: f32[2,8,256], index: 8, kind: output, shape index: {}]
  %s9 = sld [smem:[#allocation0]]
  $region42: #{tpu_custom_call.1} parent=0
    _
  %s11 = ssub.s32 1, %s9
  %s12 = scalar_select 0, %s11, %s9
  $region1: #{tpu_custom_call.1} parent=0
    #allocation2 [shape = 'u8[16384]{0}', space=vmem, size = 0x4000, scoped, tag = 'output window, operand 0, single buffered']
    #allocation3 [shape = 's32[1]{0}', space=sflag, size = 0x4, scoped, tag = 'scoped memory for tpu_custom_call.1']
    %13 = vsyncpa [#allocation3], 0
    // Predicated region
    $region2: #{tpu_custom_call.1} parent=1 // pred_check
      _
    $region3: #{tpu_custom_call.1} parent=1 // pred_check_branch
      %15 = sbr.rel (0) target = $region5
    $region4: #{tpu_custom_call.1} parent=1 // pred_region
      _
    $region5: #{tpu_custom_call.1} parent=1 // pred_fallthru
      _
    // Predicated region
    $region6: #{tpu_custom_call.1} parent=1 // pred_check
      _
    $region7: #{tpu_custom_call.1} parent=1 // pred_check_branch
      %17 = sbr.rel (0) target = $region9
    $region8: #{tpu_custom_call.1} parent=1 // pred_region
      _
    $region9: #{tpu_custom_call.1} parent=1 // pred_fallthru
      _
    // Predicated region
    $region10: #{tpu_custom_call.1} parent=1 // pred_check
      _
    $region11: #{tpu_custom_call.1} parent=1 // pred_check_branch
      %19 = sbr.rel (0) target = $region13
    $region12: #{tpu_custom_call.1} parent=1 // pred_region
      _
    $region13: #{tpu_custom_call.1} parent=1 // pred_fallthru
      _
    // Predicated region
    $region14: #{tpu_custom_call.1} parent=1 // pred_check
      _
    $region15: #{tpu_custom_call.1} parent=1 // pred_check_branch
      %21 = sbr.rel (0) target = $region17
    $region16: #{tpu_custom_call.1} parent=1 // pred_region
      _
    $region17: #{tpu_custom_call.1} parent=1 // pred_fallthru
      _
    // Predicated region
    $region18: #{tpu_custom_call.1} parent=1 // pred_check
      _
    $region19: #{tpu_custom_call.1} parent=1 // pred_check_branch
      %23 = sbr.rel (0) target = $region21
    $region20: #{tpu_custom_call.1} parent=1 // pred_region
      _
    $region21: #{tpu_custom_call.1} parent=1 // pred_fallthru
      _
    // Predicated region
    $region22: #{tpu_custom_call.1} parent=1 // pred_check
      _
    $region23: #{tpu_custom_call.1} parent=1 // pred_check_branch
      %25 = sbr.rel (0) target = $region25
    $region24: #{tpu_custom_call.1} parent=1 // pred_region
      _
    $region25: #{tpu_custom_call.1} parent=1 // pred_fallthru
      _
    // Predicated region
    $region26: #{tpu_custom_call.1} parent=1 // pred_check
      _
    $region27: #{tpu_custom_call.1} parent=1 // pred_check_branch
      %27 = sbr.rel (0) target = $region29
    $region28: #{tpu_custom_call.1} parent=1 // pred_region
      _
    $region29: #{tpu_custom_call.1} parent=1 // pred_fallthru
      _
    // Predicated region
    $region30: #{tpu_custom_call.1} parent=1 // pred_check
      _
    $region31: #{tpu_custom_call.1} parent=1 // pred_check_branch
      %29 = sbr.rel (0) target = $region33
    $region32: #{tpu_custom_call.1} parent=1 // pred_region
      _
    $region33: #{tpu_custom_call.1} parent=1 // pred_fallthru
      _
    %v30 = vld [vmem:[%s3] sm:$0xff]
    %v31 = vld [vmem:[%s4] sm:$0xff]
    %v32 = vld [vmem:[%s6] sm:$0xff]
    %v33 = vld [vmem:[%s7] sm:$0xff]
    %v34 = vld [vmem:[%s1] sm:$0xff]
    %v36 = vcombine.high %v34, %v34
    %37 = vrot.lane.b32.xlu0 %v36, 17
    %v38 = vpop.permute.xlu0 %37
    %40 = vrot.lane.b32.xlu0 %v34, 17
    %v41 = vpop.permute.xlu0 %40
    %vm42 = vcmask 138240
    %v43 = vsel %vm42, %v41, %v38
    %v46 = vsel %vm42, %v38, %v41
    %v47 = vld [vmem:[%s0] sm:$0x3]
    %v49 = vlaneseq
    %v50 = vshrl.u32 %v49, 7
    %v51 = vsub.s32 0, %v50
    %v52 = vrot.slane %v47, %v51
    %v53 = vlaneseq
    %v54 = vshrl.u32 %v53, 7
    %v55 = vsub.s32 1, %v54
    %v56 = vrot.slane %v47, %v55
    %v59 = vmul.f32 %v46, %v52
    %v60 = vmul.f32 %v43, %v56
    %v61 = vld [vmem:[%s2] sm:$0xff]
    %62 = vrot.lane.b32.xlu0 %v36, 16
    %v63 = vpop.permute.xlu0 %62
    %65 = vrot.lane.b32.xlu0 %v34, 16
    %v66 = vpop.permute.xlu0 %65
    %vm67 = vcmask 130048
    %v68 = vsel %vm67, %v66, %v63
    %v71 = vsel %vm67, %v63, %v66
    %s72 = scalar_lea.vmem %s0, 2
    %v73 = vld [vmem:[%s72] sm:$0x3]
    %v75 = vlaneseq
    %v76 = vshrl.u32 %v75, 7
    %v77 = vsub.s32 0, %v76
    %v78 = vrot.slane %v73, %v77
    %v79 = vlaneseq
    %v80 = vshrl.u32 %v79, 7
    %v81 = vsub.s32 1, %v80
    %v82 = vrot.slane %v73, %v81
    %v85 = vmul.f32 %v71, %v78
    %v86 = vmul.f32 %v68, %v82
    %s87 = scalar_lea.vmem %s2, 8
    %v88 = vld [vmem:[%s87] sm:$0xff]
    %vm89 = vcmask 31744
    %v91 = vsel %vm89, %v88, 0
    %vm93 = vcmask 1043456
    %v95 = vsel %vm93, %v85, 0
    %v98 = vsel %vm93, %v86, 0
    %100 = vmatprep.subr.mxu0 %v98
    %101 = vmatpush1.msra.mxu0 %v95
    %102 = vmatprep.subr.mxu0 0.0
    %103 = vmatpush1.msra.mxu0 0.0
    %104 = vmatprep.subr.mxu0 0.0
    %105 = vmatpush1.msra.mxu0 0.0
    %106 = vmatprep.subr.mxu0 0.0
    %107 = vmatpush1.msra.mxu0 0.0
    %108 = vmatprep.subr.mxu0 0.0
    %109 = vmatpush1.msra.mxu0 0.0
    %110 = vmatprep.subr.mxu0 0.0
    %111 = vmatpush1.msra.mxu0 0.0
    %112 = vmatprep.subr.mxu0 0.0
    %113 = vmatpush1.msra.mxu0 0.0
    %114 = vmatprep.subr.mxu0 0.0
    %115 = vmatpush1.msra.mxu0 0.0
    %116 = vmatprep.subr.mxu0 0.0
    %117 = vmatpush1.msra.mxu0 0.0
    %118 = vmatprep.subr.mxu0 0.0
    %119 = vmatpush1.msra.mxu0 0.0
    %120 = vmatprep.subr.mxu0 0.0
    %121 = vmatpush1.msra.mxu0 0.0
    %122 = vmatprep.subr.mxu0 0.0
    %123 = vmatpush1.msra.mxu0 0.0
    %124 = vmatprep.subr.mxu0 0.0
    %125 = vmatpush1.msra.mxu0 0.0
    %126 = vmatprep.subr.mxu0 0.0
    %127 = vmatpush1.msra.mxu0 0.0
    %128 = vmatprep.subr.mxu0 0.0
    %129 = vmatpush1.msra.mxu0 0.0
    %130 = vmatprep.subr.mxu0 0.0
    %131 = vmatpush1.msra.mxu0 0.0
    %132 = vmatprep.subr.mxu0 0.0
    %133 = vmatpush1.msra.mxu0 0.0
    %134 = vmatprep.subr.mxu0 0.0
    %135 = vmatpush1.msra.mxu0 0.0
    %136 = vmatprep.subr.mxu0 0.0
    %137 = vmatpush1.msra.mxu0 0.0
    %138 = vmatprep.subr.mxu0 0.0
    %139 = vmatpush1.msra.mxu0 0.0
    %140 = vmatprep.subr.mxu0 0.0
    %141 = vmatpush1.msra.mxu0 0.0
    %142 = vmatprep.subr.mxu0 0.0
    %143 = vmatpush1.msra.mxu0 0.0
    %144 = vmatprep.subr.mxu0 0.0
    %145 = vmatpush1.msra.mxu0 0.0
    %146 = vmatprep.subr.mxu0 0.0
    %147 = vmatpush1.msra.mxu0 0.0
    %148 = vmatprep.subr.mxu0 0.0
    %149 = vmatpush1.msra.mxu0 0.0
    %150 = vmatprep.subr.mxu0 0.0
    %151 = vmatpush1.msra.mxu0 0.0
    %152 = vmatprep.subr.mxu0 0.0
    %153 = vmatpush1.msra.mxu0 0.0
    %154 = vmatprep.subr.mxu0 0.0
    %155 = vmatpush1.msra.mxu0 0.0
    %156 = vmatprep.subr.mxu0 0.0
    %157 = vmatpush1.msra.mxu0 0.0
    %158 = vmatprep.subr.mxu0 0.0
    %159 = vmatpush1.msra.mxu0 0.0
    %160 = vmatprep.subr.mxu0 0.0
    %161 = vmatpush1.msra.mxu0 0.0
    %162 = vmatprep.subr.mxu0 0.0
    %163 = vmatpush1.msra.mxu0 0.0
    %164 = vmatprep.mubr.f32.mxu0 0.0
    %165 = vmatmul.mubr.f32.gmra.mrb[0].mxu0 %v91
    %v166 = vpop.f32.mrb[0].mxu0
    %v167 = vadd.f32 0.0, %v166
    %v168 = vpop.f32.mrb[0].mxu0
    %v169 = vadd.f32 0.0, %v168
    %170 = vdwg.mxu0
    %v172 = vsel %vm89, %v61, 0
    %v175 = vsel %vm93, %v59, 0
    %v178 = vsel %vm93, %v60, 0
    %180 = vmatprep.subr.mxu0 %v178
    %181 = vmatpush1.msra.mxu0 %v175
    %182 = vmatprep.subr.mxu0 0.0
    %183 = vmatpush1.msra.mxu0 0.0
    %184 = vmatprep.subr.mxu0 0.0
    %185 = vmatpush1.msra.mxu0 0.0
    %186 = vmatprep.subr.mxu0 0.0
    %187 = vmatpush1.msra.mxu0 0.0
    %188 = vmatprep.subr.mxu0 0.0
    %189 = vmatpush1.msra.mxu0 0.0
    %190 = vmatprep.subr.mxu0 0.0
    %191 = vmatpush1.msra.mxu0 0.0
    %192 = vmatprep.subr.mxu0 0.0
    %193 = vmatpush1.msra.mxu0 0.0
    %194 = vmatprep.subr.mxu0 0.0
    %195 = vmatpush1.msra.mxu0 0.0
    %196 = vmatprep.subr.mxu0 0.0
    %197 = vmatpush1.msra.mxu0 0.0
    %198 = vmatprep.subr.mxu0 0.0
    %199 = vmatpush1.msra.mxu0 0.0
    %200 = vmatprep.subr.mxu0 0.0
    %201 = vmatpush1.msra.mxu0 0.0
    %202 = vmatprep.subr.mxu0 0.0
    %203 = vmatpush1.msra.mxu0 0.0
    %204 = vmatprep.subr.mxu0 0.0
    %205 = vmatpush1.msra.mxu0 0.0
    %206 = vmatprep.subr.mxu0 0.0
    %207 = vmatpush1.msra.mxu0 0.0
    %208 = vmatprep.subr.mxu0 0.0
    %209 = vmatpush1.msra.mxu0 0.0
    %210 = vmatprep.subr.mxu0 0.0
    %211 = vmatpush1.msra.mxu0 0.0
    %212 = vmatprep.subr.mxu0 0.0
    %213 = vmatpush1.msra.mxu0 0.0
    %214 = vmatprep.subr.mxu0 0.0
    %215 = vmatpush1.msra.mxu0 0.0
    %216 = vmatprep.subr.mxu0 0.0
    %217 = vmatpush1.msra.mxu0 0.0
    %218 = vmatprep.subr.mxu0 0.0
    %219 = vmatpush1.msra.mxu0 0.0
    %220 = vmatprep.subr.mxu0 0.0
    %221 = vmatpush1.msra.mxu0 0.0
    %222 = vmatprep.subr.mxu0 0.0
    %223 = vmatpush1.msra.mxu0 0.0
    %224 = vmatprep.subr.mxu0 0.0
    %225 = vmatpush1.msra.mxu0 0.0
    %226 = vmatprep.subr.mxu0 0.0
    %227 = vmatpush1.msra.mxu0 0.0
    %228 = vmatprep.subr.mxu0 0.0
    %229 = vmatpush1.msra.mxu0 0.0
    %230 = vmatprep.subr.mxu0 0.0
    %231 = vmatpush1.msra.mxu0 0.0
    %232 = vmatprep.subr.mxu0 0.0
    %233 = vmatpush1.msra.mxu0 0.0
    %234 = vmatprep.subr.mxu0 0.0
    %235 = vmatpush1.msra.mxu0 0.0
    %236 = vmatprep.subr.mxu0 0.0
    %237 = vmatpush1.msra.mxu0 0.0
    %238 = vmatprep.subr.mxu0 0.0
    %239 = vmatpush1.msra.mxu0 0.0
    %240 = vmatprep.subr.mxu0 0.0
    %241 = vmatpush1.msra.mxu0 0.0
    %242 = vmatprep.subr.mxu0 0.0
    %243 = vmatpush1.msra.mxu0 0.0
    %244 = vmatprep.mubr.f32.mxu0 0.0
    %245 = vmatmul.mubr.f32.gmra.mrb[0].mxu0 %v172
    %v246 = vpop.f32.mrb[0].mxu0
    %v247 = vadd.f32 %v167, %v246
    %v248 = vpop.f32.mrb[0].mxu0
    %v249 = vadd.f32 %v169, %v248
    %250 = vdwg.mxu0
    %251 = vrot.lane.b32.xlu0 %v36, 15
    %v252 = vpop.permute.xlu0 %251
    %254 = vrot.lane.b32.xlu0 %v34, 15
    %v255 = vpop.permute.xlu0 %254
    %vm256 = vcmask 121856
    %v257 = vsel %vm256, %v255, %v252
    %v260 = vsel %vm256, %v252, %v255
    %s261 = scalar_lea.vmem %s0, 4
    %v262 = vld [vmem:[%s261] sm:$0x3]
    %v264 = vlaneseq
    %v265 = vshrl.u32 %v264, 7
    %v266 = vsub.s32 0, %v265
    %v267 = vrot.slane %v262, %v266
    %v268 = vlaneseq
    %v269 = vshrl.u32 %v268, 7
    %v270 = vsub.s32 1, %v269
    %v271 = vrot.slane %v262, %v270
    %v274 = vmul.f32 %v260, %v267
    %v275 = vmul.f32 %v257, %v271
    %s276 = scalar_lea.vmem %s2, 16
    %v277 = vld [vmem:[%s276] sm:$0xff]
    %v279 = vsel %vm89, %v277, 0
    %v282 = vsel %vm93, %v274, 0
    %v285 = vsel %vm93, %v275, 0
    %287 = vmatprep.subr.mxu0 %v285
    %288 = vmatpush1.msra.mxu0 %v282
    %289 = vmatprep.subr.mxu0 0.0
    %290 = vmatpush1.msra.mxu0 0.0
    %291 = vmatprep.subr.mxu0 0.0
    %292 = vmatpush1.msra.mxu0 0.0
    %293 = vmatprep.subr.mxu0 0.0
    %294 = vmatpush1.msra.mxu0 0.0
    %295 = vmatprep.subr.mxu0 0.0
    %296 = vmatpush1.msra.mxu0 0.0
    %297 = vmatprep.subr.mxu0 0.0
    %298 = vmatpush1.msra.mxu0 0.0
    %299 = vmatprep.subr.mxu0 0.0
    %300 = vmatpush1.msra.mxu0 0.0
    %301 = vmatprep.subr.mxu0 0.0
    %302 = vmatpush1.msra.mxu0 0.0
    %303 = vmatprep.subr.mxu0 0.0
    %304 = vmatpush1.msra.mxu0 0.0
    %305 = vmatprep.subr.mxu0 0.0
    %306 = vmatpush1.msra.mxu0 0.0
    %307 = vmatprep.subr.mxu0 0.0
    %308 = vmatpush1.msra.mxu0 0.0
    %309 = vmatprep.subr.mxu0 0.0
    %310 = vmatpush1.msra.mxu0 0.0
    %311 = vmatprep.subr.mxu0 0.0
    %312 = vmatpush1.msra.mxu0 0.0
    %313 = vmatprep.subr.mxu0 0.0
    %314 = vmatpush1.msra.mxu0 0.0
    %315 = vmatprep.subr.mxu0 0.0
    %316 = vmatpush1.msra.mxu0 0.0
    %317 = vmatprep.subr.mxu0 0.0
    %318 = vmatpush1.msra.mxu0 0.0
    %319 = vmatprep.subr.mxu0 0.0
    %320 = vmatpush1.msra.mxu0 0.0
    %321 = vmatprep.subr.mxu0 0.0
    %322 = vmatpush1.msra.mxu0 0.0
    %323 = vmatprep.subr.mxu0 0.0
    %324 = vmatpush1.msra.mxu0 0.0
    %325 = vmatprep.subr.mxu0 0.0
    %326 = vmatpush1.msra.mxu0 0.0
    %327 = vmatprep.subr.mxu0 0.0
    %328 = vmatpush1.msra.mxu0 0.0
    %329 = vmatprep.subr.mxu0 0.0
    %330 = vmatpush1.msra.mxu0 0.0
    %331 = vmatprep.subr.mxu0 0.0
    %332 = vmatpush1.msra.mxu0 0.0
    %333 = vmatprep.subr.mxu0 0.0
    %334 = vmatpush1.msra.mxu0 0.0
    %335 = vmatprep.subr.mxu0 0.0
    %336 = vmatpush1.msra.mxu0 0.0
    %337 = vmatprep.subr.mxu0 0.0
    %338 = vmatpush1.msra.mxu0 0.0
    %339 = vmatprep.subr.mxu0 0.0
    %340 = vmatpush1.msra.mxu0 0.0
    %341 = vmatprep.subr.mxu0 0.0
    %342 = vmatpush1.msra.mxu0 0.0
    %343 = vmatprep.subr.mxu0 0.0
    %344 = vmatpush1.msra.mxu0 0.0
    %345 = vmatprep.subr.mxu0 0.0
    %346 = vmatpush1.msra.mxu0 0.0
    %347 = vmatprep.subr.mxu0 0.0
    %348 = vmatpush1.msra.mxu0 0.0
    %349 = vmatprep.subr.mxu0 0.0
    %350 = vmatpush1.msra.mxu0 0.0
    %351 = vmatprep.mubr.f32.mxu0 0.0
    %352 = vmatmul.mubr.f32.gmra.mrb[0].mxu0 %v279
    %v353 = vpop.f32.mrb[0].mxu0
    %v354 = vadd.f32 0.0, %v353
    %v355 = vpop.f32.mrb[0].mxu0
    %v356 = vadd.f32 0.0, %v355
    %357 = vdwg.mxu0
    %v358 = vadd.f32 %v247, %v354
    %v359 = vadd.f32 %v249, %v356
    %360 = vrot.lane.b32.xlu0 %v36, 1
    %v361 = vpop.permute.xlu0 %360
    %363 = vrot.lane.b32.xlu0 %v34, 1
    %v364 = vpop.permute.xlu0 %363
    %vm365 = vcmask 7168
    %v366 = vsel %vm365, %v364, %v361
    %v369 = vsel %vm365, %v361, %v364
    %s370 = scalar_lea.vmem %s0, 6
    %v371 = vld [vmem:[%s370] sm:$0x3]
    %v373 = vlaneseq
    %v374 = vshrl.u32 %v373, 7
    %v375 = vsub.s32 0, %v374
    %v376 = vrot.slane %v371, %v375
    %v377 = vlaneseq
    %v378 = vshrl.u32 %v377, 7
    %v379 = vsub.s32 1, %v378
    %v380 = vrot.slane %v371, %v379
    %v383 = vmul.f32 %v369, %v376
    %v384 = vmul.f32 %v366, %v380
    %s385 = scalar_lea.vmem %s2, 24
    %v386 = vld [vmem:[%s385] sm:$0xff]
    %v388 = vsel %vm89, %v386, 0
    %v391 = vsel %vm93, %v383, 0
    %v394 = vsel %vm93, %v384, 0
    %396 = vmatprep.subr.mxu0 %v394
    %397 = vmatpush1.msra.mxu0 %v391
    %398 = vmatprep.subr.mxu0 0.0
    %399 = vmatpush1.msra.mxu0 0.0
    %400 = vmatprep.subr.mxu0 0.0
    %401 = vmatpush1.msra.mxu0 0.0
    %402 = vmatprep.subr.mxu0 0.0
    %403 = vmatpush1.msra.mxu0 0.0
    %404 = vmatprep.subr.mxu0 0.0
    %405 = vmatpush1.msra.mxu0 0.0
    %406 = vmatprep.subr.mxu0 0.0
    %407 = vmatpush1.msra.mxu0 0.0
    %408 = vmatprep.subr.mxu0 0.0
    %409 = vmatpush1.msra.mxu0 0.0
    %410 = vmatprep.subr.mxu0 0.0
    %411 = vmatpush1.msra.mxu0 0.0
    %412 = vmatprep.subr.mxu0 0.0
    %413 = vmatpush1.msra.mxu0 0.0
    %414 = vmatprep.subr.mxu0 0.0
    %415 = vmatpush1.msra.mxu0 0.0
    %416 = vmatprep.subr.mxu0 0.0
    %417 = vmatpush1.msra.mxu0 0.0
    %418 = vmatprep.subr.mxu0 0.0
    %419 = vmatpush1.msra.mxu0 0.0
    %420 = vmatprep.subr.mxu0 0.0
    %421 = vmatpush1.msra.mxu0 0.0
    %422 = vmatprep.subr.mxu0 0.0
    %423 = vmatpush1.msra.mxu0 0.0
    %424 = vmatprep.subr.mxu0 0.0
    %425 = vmatpush1.msra.mxu0 0.0
    %426 = vmatprep.subr.mxu0 0.0
    %427 = vmatpush1.msra.mxu0 0.0
    %428 = vmatprep.subr.mxu0 0.0
    %429 = vmatpush1.msra.mxu0 0.0
    %430 = vmatprep.subr.mxu0 0.0
    %431 = vmatpush1.msra.mxu0 0.0
    %432 = vmatprep.subr.mxu0 0.0
    %433 = vmatpush1.msra.mxu0 0.0
    %434 = vmatprep.subr.mxu0 0.0
    %435 = vmatpush1.msra.mxu0 0.0
    %436 = vmatprep.subr.mxu0 0.0
    %437 = vmatpush1.msra.mxu0 0.0
    %438 = vmatprep.subr.mxu0 0.0
    %439 = vmatpush1.msra.mxu0 0.0
    %440 = vmatprep.subr.mxu0 0.0
    %441 = vmatpush1.msra.mxu0 0.0
    %442 = vmatprep.subr.mxu0 0.0
    %443 = vmatpush1.msra.mxu0 0.0
    %444 = vmatprep.subr.mxu0 0.0
    %445 = vmatpush1.msra.mxu0 0.0
    %446 = vmatprep.subr.mxu0 0.0
    %447 = vmatpush1.msra.mxu0 0.0
    %448 = vmatprep.subr.mxu0 0.0
    %449 = vmatpush1.msra.mxu0 0.0
    %450 = vmatprep.subr.mxu0 0.0
    %451 = vmatpush1.msra.mxu0 0.0
    %452 = vmatprep.subr.mxu0 0.0
    %453 = vmatpush1.msra.mxu0 0.0
    %454 = vmatprep.subr.mxu0 0.0
    %455 = vmatpush1.msra.mxu0 0.0
    %456 = vmatprep.subr.mxu0 0.0
    %457 = vmatpush1.msra.mxu0 0.0
    %458 = vmatprep.subr.mxu0 0.0
    %459 = vmatpush1.msra.mxu0 0.0
    %460 = vmatprep.mubr.f32.mxu0 0.0
    %461 = vmatmul.mubr.f32.gmra.mrb[0].mxu0 %v388
    %v462 = vpop.f32.mrb[0].mxu0
    %v463 = vadd.f32 0.0, %v462
    %v464 = vpop.f32.mrb[0].mxu0
    %v465 = vadd.f32 0.0, %v464
    %466 = vdwg.mxu0
    %v467 = vadd.f32 %v358, %v463
    %v468 = vadd.f32 %v359, %v465
    %s469 = scalar_lea.vmem %s2, 32
    %v470 = vld [vmem:[%s469] sm:$0xff]
    %v472 = vsel %vm89, %v470, 0
    %v474 = vsel %vm93, %v34, 0
    %v476 = vsel %vm93, %v36, 0
    %478 = vmatprep.subr.mxu0 %v476
    %479 = vmatpush1.msra.mxu0 %v474
    %480 = vmatprep.subr.mxu0 0.0
    %481 = vmatpush1.msra.mxu0 0.0
    %482 = vmatprep.subr.mxu0 0.0
    %483 = vmatpush1.msra.mxu0 0.0
    %484 = vmatprep.subr.mxu0 0.0
    %485 = vmatpush1.msra.mxu0 0.0
    %486 = vmatprep.subr.mxu0 0.0
    %487 = vmatpush1.msra.mxu0 0.0
    %488 = vmatprep.subr.mxu0 0.0
    %489 = vmatpush1.msra.mxu0 0.0
    %490 = vmatprep.subr.mxu0 0.0
    %491 = vmatpush1.msra.mxu0 0.0
    %492 = vmatprep.subr.mxu0 0.0
    %493 = vmatpush1.msra.mxu0 0.0
    %494 = vmatprep.subr.mxu0 0.0
    %495 = vmatpush1.msra.mxu0 0.0
    %496 = vmatprep.subr.mxu0 0.0
    %497 = vmatpush1.msra.mxu0 0.0
    %498 = vmatprep.subr.mxu0 0.0
    %499 = vmatpush1.msra.mxu0 0.0
    %500 = vmatprep.subr.mxu0 0.0
    %501 = vmatpush1.msra.mxu0 0.0
    %502 = vmatprep.subr.mxu0 0.0
    %503 = vmatpush1.msra.mxu0 0.0
    %504 = vmatprep.subr.mxu0 0.0
    %505 = vmatpush1.msra.mxu0 0.0
    %506 = vmatprep.subr.mxu0 0.0
    %507 = vmatpush1.msra.mxu0 0.0
    %508 = vmatprep.subr.mxu0 0.0
    %509 = vmatpush1.msra.mxu0 0.0
    %510 = vmatprep.subr.mxu0 0.0
    %511 = vmatpush1.msra.mxu0 0.0
    %512 = vmatprep.subr.mxu0 0.0
    %513 = vmatpush1.msra.mxu0 0.0
    %514 = vmatprep.subr.mxu0 0.0
    %515 = vmatpush1.msra.mxu0 0.0
    %516 = vmatprep.subr.mxu0 0.0
    %517 = vmatpush1.msra.mxu0 0.0
    %518 = vmatprep.subr.mxu0 0.0
    %519 = vmatpush1.msra.mxu0 0.0
    %520 = vmatprep.subr.mxu0 0.0
    %521 = vmatpush1.msra.mxu0 0.0
    %522 = vmatprep.subr.mxu0 0.0
    %523 = vmatpush1.msra.mxu0 0.0
    %524 = vmatprep.subr.mxu0 0.0
    %525 = vmatpush1.msra.mxu0 0.0
    %526 = vmatprep.subr.mxu0 0.0
    %527 = vmatpush1.msra.mxu0 0.0
    %528 = vmatprep.subr.mxu0 0.0
    %529 = vmatpush1.msra.mxu0 0.0
    %530 = vmatprep.subr.mxu0 0.0
    %531 = vmatpush1.msra.mxu0 0.0
    %532 = vmatprep.subr.mxu0 0.0
    %533 = vmatpush1.msra.mxu0 0.0
    %534 = vmatprep.subr.mxu0 0.0
    %535 = vmatpush1.msra.mxu0 0.0
    %536 = vmatprep.subr.mxu0 0.0
    %537 = vmatpush1.msra.mxu0 0.0
    %538 = vmatprep.subr.mxu0 0.0
    %539 = vmatpush1.msra.mxu0 0.0
    %540 = vmatprep.subr.mxu0 0.0
    %541 = vmatpush1.msra.mxu0 0.0
    %542 = vmatprep.mubr.f32.mxu0 0.0
    %543 = vmatmul.mubr.f32.gmra.mrb[0].mxu0 %v472
    %v544 = vpop.f32.mrb[0].mxu0
    %v545 = vadd.f32 0.0, %v544
    %v546 = vpop.f32.mrb[0].mxu0
    %v547 = vadd.f32 0.0, %v546
    %548 = vdwg.mxu0
    %v549 = vadd.f32 %v467, %v545
    %v550 = vadd.f32 %v468, %v547
    %551 = vrot.lane.b32.xlu0 %v34, 127
    %v552 = vpop.permute.xlu0 %551
    %553 = vrot.lane.b32.xlu0 %v36, 127
    %v554 = vpop.permute.xlu0 %553
    %vm555 = vcmask 1039360
    %v556 = vsel %vm555, %v552, %v554
    %v560 = vsel %vm555, %v554, %v552
    %s561 = scalar_lea.vmem %s0, 10
    %v562 = vld [vmem:[%s561] sm:$0x3]
    %v564 = vlaneseq
    %v565 = vshrl.u32 %v564, 7
    %v566 = vsub.s32 0, %v565
    %v567 = vrot.slane %v562, %v566
    %v568 = vlaneseq
    %v569 = vshrl.u32 %v568, 7
    %v570 = vsub.s32 1, %v569
    %v571 = vrot.slane %v562, %v570
    %v574 = vmul.f32 %v556, %v567
    %v575 = vmul.f32 %v560, %v571
    %s576 = scalar_lea.vmem %s2, 40
    %v577 = vld [vmem:[%s576] sm:$0xff]
    %v579 = vsel %vm89, %v577, 0
    %v582 = vsel %vm93, %v574, 0
    %v585 = vsel %vm93, %v575, 0
    %587 = vmatprep.subr.mxu0 %v585
    %588 = vmatpush1.msra.mxu0 %v582
    %589 = vmatprep.subr.mxu0 0.0
    %590 = vmatpush1.msra.mxu0 0.0
    %591 = vmatprep.subr.mxu0 0.0
    %592 = vmatpush1.msra.mxu0 0.0
    %593 = vmatprep.subr.mxu0 0.0
    %594 = vmatpush1.msra.mxu0 0.0
    %595 = vmatprep.subr.mxu0 0.0
    %596 = vmatpush1.msra.mxu0 0.0
    %597 = vmatprep.subr.mxu0 0.0
    %598 = vmatpush1.msra.mxu0 0.0
    %599 = vmatprep.subr.mxu0 0.0
    %600 = vmatpush1.msra.mxu0 0.0
    %601 = vmatprep.subr.mxu0 0.0
    %602 = vmatpush1.msra.mxu0 0.0
    %603 = vmatprep.subr.mxu0 0.0
    %604 = vmatpush1.msra.mxu0 0.0
    %605 = vmatprep.subr.mxu0 0.0
    %606 = vmatpush1.msra.mxu0 0.0
    %607 = vmatprep.subr.mxu0 0.0
    %608 = vmatpush1.msra.mxu0 0.0
    %609 = vmatprep.subr.mxu0 0.0
    %610 = vmatpush1.msra.mxu0 0.0
    %611 = vmatprep.subr.mxu0 0.0
    %612 = vmatpush1.msra.mxu0 0.0
    %613 = vmatprep.subr.mxu0 0.0
    %614 = vmatpush1.msra.mxu0 0.0
    %615 = vmatprep.subr.mxu0 0.0
    %616 = vmatpush1.msra.mxu0 0.0
    %617 = vmatprep.subr.mxu0 0.0
    %618 = vmatpush1.msra.mxu0 0.0
    %619 = vmatprep.subr.mxu0 0.0
    %620 = vmatpush1.msra.mxu0 0.0
    %621 = vmatprep.subr.mxu0 0.0
    %622 = vmatpush1.msra.mxu0 0.0
    %623 = vmatprep.subr.mxu0 0.0
    %624 = vmatpush1.msra.mxu0 0.0
    %625 = vmatprep.subr.mxu0 0.0
    %626 = vmatpush1.msra.mxu0 0.0
    %627 = vmatprep.subr.mxu0 0.0
    %628 = vmatpush1.msra.mxu0 0.0
    %629 = vmatprep.subr.mxu0 0.0
    %630 = vmatpush1.msra.mxu0 0.0
    %631 = vmatprep.subr.mxu0 0.0
    %632 = vmatpush1.msra.mxu0 0.0
    %633 = vmatprep.subr.mxu0 0.0
    %634 = vmatpush1.msra.mxu0 0.0
    %635 = vmatprep.subr.mxu0 0.0
    %636 = vmatpush1.msra.mxu0 0.0
    %637 = vmatprep.subr.mxu0 0.0
    %638 = vmatpush1.msra.mxu0 0.0
    %639 = vmatprep.subr.mxu0 0.0
    %640 = vmatpush1.msra.mxu0 0.0
    %641 = vmatprep.subr.mxu0 0.0
    %642 = vmatpush1.msra.mxu0 0.0
    %643 = vmatprep.subr.mxu0 0.0
    %644 = vmatpush1.msra.mxu0 0.0
    %645 = vmatprep.subr.mxu0 0.0
    %646 = vmatpush1.msra.mxu0 0.0
    %647 = vmatprep.subr.mxu0 0.0
    %648 = vmatpush1.msra.mxu0 0.0
    %649 = vmatprep.subr.mxu0 0.0
    %650 = vmatpush1.msra.mxu0 0.0
    %651 = vmatprep.mubr.f32.mxu0 0.0
    %652 = vmatmul.mubr.f32.gmra.mrb[0].mxu0 %v579
    %v653 = vpop.f32.mrb[0].mxu0
    %v654 = vadd.f32 0.0, %v653
    %v655 = vpop.f32.mrb[0].mxu0
    %v656 = vadd.f32 0.0, %v655
    %657 = vdwg.mxu0
    %v658 = vadd.f32 %v549, %v654
    %v659 = vadd.f32 %v550, %v656
    %660 = vrot.lane.b32.xlu0 %v34, 113
    %v661 = vpop.permute.xlu0 %660
    %662 = vrot.lane.b32.xlu0 %v36, 113
    %v663 = vpop.permute.xlu0 %662
    %vm664 = vcmask 924672
    %v665 = vsel %vm664, %v661, %v663
    %v669 = vsel %vm664, %v663, %v661
    %s670 = scalar_lea.vmem %s0, 12
    %v671 = vld [vmem:[%s670] sm:$0x3]
    %v673 = vlaneseq
    %v674 = vshrl.u32 %v673, 7
    %v675 = vsub.s32 0, %v674
    %v676 = vrot.slane %v671, %v675
    %v677 = vlaneseq
    %v678 = vshrl.u32 %v677, 7
    %v679 = vsub.s32 1, %v678
    %v680 = vrot.slane %v671, %v679
    %v683 = vmul.f32 %v665, %v676
    %v684 = vmul.f32 %v669, %v680
    %s685 = scalar_lea.vmem %s2, 48
    %v686 = vld [vmem:[%s685] sm:$0xff]
    %v688 = vsel %vm89, %v686, 0
    %v691 = vsel %vm93, %v683, 0
    %v694 = vsel %vm93, %v684, 0
    %696 = vmatprep.subr.mxu0 %v694
    %697 = vmatpush1.msra.mxu0 %v691
    %698 = vmatprep.subr.mxu0 0.0
    %699 = vmatpush1.msra.mxu0 0.0
    %700 = vmatprep.subr.mxu0 0.0
    %701 = vmatpush1.msra.mxu0 0.0
    %702 = vmatprep.subr.mxu0 0.0
    %703 = vmatpush1.msra.mxu0 0.0
    %704 = vmatprep.subr.mxu0 0.0
    %705 = vmatpush1.msra.mxu0 0.0
    %706 = vmatprep.subr.mxu0 0.0
    %707 = vmatpush1.msra.mxu0 0.0
    %708 = vmatprep.subr.mxu0 0.0
    %709 = vmatpush1.msra.mxu0 0.0
    %710 = vmatprep.subr.mxu0 0.0
    %711 = vmatpush1.msra.mxu0 0.0
    %712 = vmatprep.subr.mxu0 0.0
    %713 = vmatpush1.msra.mxu0 0.0
    %714 = vmatprep.subr.mxu0 0.0
    %715 = vmatpush1.msra.mxu0 0.0
    %716 = vmatprep.subr.mxu0 0.0
    %717 = vmatpush1.msra.mxu0 0.0
    %718 = vmatprep.subr.mxu0 0.0
    %719 = vmatpush1.msra.mxu0 0.0
    %720 = vmatprep.subr.mxu0 0.0
    %721 = vmatpush1.msra.mxu0 0.0
    %722 = vmatprep.subr.mxu0 0.0
    %723 = vmatpush1.msra.mxu0 0.0
    %724 = vmatprep.subr.mxu0 0.0
    %725 = vmatpush1.msra.mxu0 0.0
    %726 = vmatprep.subr.mxu0 0.0
    %727 = vmatpush1.msra.mxu0 0.0
    %728 = vmatprep.subr.mxu0 0.0
    %729 = vmatpush1.msra.mxu0 0.0
    %730 = vmatprep.subr.mxu0 0.0
    %731 = vmatpush1.msra.mxu0 0.0
    %732 = vmatprep.subr.mxu0 0.0
    %733 = vmatpush1.msra.mxu0 0.0
    %734 = vmatprep.subr.mxu0 0.0
    %735 = vmatpush1.msra.mxu0 0.0
    %736 = vmatprep.subr.mxu0 0.0
    %737 = vmatpush1.msra.mxu0 0.0
    %738 = vmatprep.subr.mxu0 0.0
    %739 = vmatpush1.msra.mxu0 0.0
    %740 = vmatprep.subr.mxu0 0.0
    %741 = vmatpush1.msra.mxu0 0.0
    %742 = vmatprep.subr.mxu0 0.0
    %743 = vmatpush1.msra.mxu0 0.0
    %744 = vmatprep.subr.mxu0 0.0
    %745 = vmatpush1.msra.mxu0 0.0
    %746 = vmatprep.subr.mxu0 0.0
    %747 = vmatpush1.msra.mxu0 0.0
    %748 = vmatprep.subr.mxu0 0.0
    %749 = vmatpush1.msra.mxu0 0.0
    %750 = vmatprep.subr.mxu0 0.0
    %751 = vmatpush1.msra.mxu0 0.0
    %752 = vmatprep.subr.mxu0 0.0
    %753 = vmatpush1.msra.mxu0 0.0
    %754 = vmatprep.subr.mxu0 0.0
    %755 = vmatpush1.msra.mxu0 0.0
    %756 = vmatprep.subr.mxu0 0.0
    %757 = vmatpush1.msra.mxu0 0.0
    %758 = vmatprep.subr.mxu0 0.0
    %759 = vmatpush1.msra.mxu0 0.0
    %760 = vmatprep.mubr.f32.mxu0 0.0
    %761 = vmatmul.mubr.f32.gmra.mrb[0].mxu0 %v688
    %v762 = vpop.f32.mrb[0].mxu0
    %v763 = vadd.f32 0.0, %v762
    %v764 = vpop.f32.mrb[0].mxu0
    %v765 = vadd.f32 0.0, %v764
    %766 = vdwg.mxu0
    %v767 = vadd.f32 %v658, %v763
    %v768 = vadd.f32 %v659, %v765
    %769 = vrot.lane.b32.xlu0 %v34, 112
    %v770 = vpop.permute.xlu0 %769
    %771 = vrot.lane.b32.xlu0 %v36, 112
    %v772 = vpop.permute.xlu0 %771
    %vm773 = vcmask 916480
    %v774 = vsel %vm773, %v770, %v772
    %v778 = vsel %vm773, %v772, %v770
    %s779 = scalar_lea.vmem %s0, 14
    %v780 = vld [vmem:[%s779] sm:$0x3]
    %v782 = vlaneseq
    %v783 = vshrl.u32 %v782, 7
    %v784 = vsub.s32 0, %v783
    %v785 = vrot.slane %v780, %v784
    %v786 = vlaneseq
    %v787 = vshrl.u32 %v786, 7
    %v788 = vsub.s32 1, %v787
    %v789 = vrot.slane %v780, %v788
    %v792 = vmul.f32 %v774, %v785
    %v793 = vmul.f32 %v778, %v789
    %s794 = scalar_lea.vmem %s2, 56
    %v795 = vld [vmem:[%s794] sm:$0xff]
    %v797 = vsel %vm89, %v795, 0
    %v800 = vsel %vm93, %v792, 0
    %v803 = vsel %vm93, %v793, 0
    %805 = vmatprep.subr.mxu0 %v803
    %806 = vmatpush1.msra.mxu0 %v800
    %807 = vmatprep.subr.mxu0 0.0
    %808 = vmatpush1.msra.mxu0 0.0
    %809 = vmatprep.subr.mxu0 0.0
    %810 = vmatpush1.msra.mxu0 0.0
    %811 = vmatprep.subr.mxu0 0.0
    %812 = vmatpush1.msra.mxu0 0.0
    %813 = vmatprep.subr.mxu0 0.0
    %814 = vmatpush1.msra.mxu0 0.0
    %815 = vmatprep.subr.mxu0 0.0
    %816 = vmatpush1.msra.mxu0 0.0
    %817 = vmatprep.subr.mxu0 0.0
    %818 = vmatpush1.msra.mxu0 0.0
    %819 = vmatprep.subr.mxu0 0.0
    %820 = vmatpush1.msra.mxu0 0.0
    %821 = vmatprep.subr.mxu0 0.0
    %822 = vmatpush1.msra.mxu0 0.0
    %823 = vmatprep.subr.mxu0 0.0
    %824 = vmatpush1.msra.mxu0 0.0
    %825 = vmatprep.subr.mxu0 0.0
    %826 = vmatpush1.msra.mxu0 0.0
    %827 = vmatprep.subr.mxu0 0.0
    %828 = vmatpush1.msra.mxu0 0.0
    %829 = vmatprep.subr.mxu0 0.0
    %830 = vmatpush1.msra.mxu0 0.0
    %831 = vmatprep.subr.mxu0 0.0
    %832 = vmatpush1.msra.mxu0 0.0
    %833 = vmatprep.subr.mxu0 0.0
    %834 = vmatpush1.msra.mxu0 0.0
    %835 = vmatprep.subr.mxu0 0.0
    %836 = vmatpush1.msra.mxu0 0.0
    %837 = vmatprep.subr.mxu0 0.0
    %838 = vmatpush1.msra.mxu0 0.0
    %839 = vmatprep.subr.mxu0 0.0
    %840 = vmatpush1.msra.mxu0 0.0
    %841 = vmatprep.subr.mxu0 0.0
    %842 = vmatpush1.msra.mxu0 0.0
    %843 = vmatprep.subr.mxu0 0.0
    %844 = vmatpush1.msra.mxu0 0.0
    %845 = vmatprep.subr.mxu0 0.0
    %846 = vmatpush1.msra.mxu0 0.0
    %847 = vmatprep.subr.mxu0 0.0
    %848 = vmatpush1.msra.mxu0 0.0
    %849 = vmatprep.subr.mxu0 0.0
    %850 = vmatpush1.msra.mxu0 0.0
    %851 = vmatprep.subr.mxu0 0.0
    %852 = vmatpush1.msra.mxu0 0.0
    %853 = vmatprep.subr.mxu0 0.0
    %854 = vmatpush1.msra.mxu0 0.0
    %855 = vmatprep.subr.mxu0 0.0
    %856 = vmatpush1.msra.mxu0 0.0
    %857 = vmatprep.subr.mxu0 0.0
    %858 = vmatpush1.msra.mxu0 0.0
    %859 = vmatprep.subr.mxu0 0.0
    %860 = vmatpush1.msra.mxu0 0.0
    %861 = vmatprep.subr.mxu0 0.0
    %862 = vmatpush1.msra.mxu0 0.0
    %863 = vmatprep.subr.mxu0 0.0
    %864 = vmatpush1.msra.mxu0 0.0
    %865 = vmatprep.subr.mxu0 0.0
    %866 = vmatpush1.msra.mxu0 0.0
    %867 = vmatprep.subr.mxu0 0.0
    %868 = vmatpush1.msra.mxu0 0.0
    %869 = vmatprep.mubr.f32.mxu0 0.0
    %870 = vmatmul.mubr.f32.gmra.mrb[0].mxu0 %v797
    %v871 = vpop.f32.mrb[0].mxu0
    %v872 = vadd.f32 0.0, %v871
    %v873 = vpop.f32.mrb[0].mxu0
    %v874 = vadd.f32 0.0, %v873
    %875 = vdwg.mxu0
    %v876 = vadd.f32 %v767, %v872
    %v877 = vadd.f32 %v768, %v874
    %878 = vrot.lane.b32.xlu0 %v34, 111
    %v879 = vpop.permute.xlu0 %878
    %880 = vrot.lane.b32.xlu0 %v36, 111
    %v881 = vpop.permute.xlu0 %880
    %vm882 = vcmask 908288
    %v883 = vsel %vm882, %v879, %v881
    %v887 = vsel %vm882, %v881, %v879
    %s888 = scalar_lea.vmem %s0, 16
    %v889 = vld [vmem:[%s888] sm:$0x3]
    %v891 = vlaneseq
    %v892 = vshrl.u32 %v891, 7
    %v893 = vsub.s32 0, %v892
    %v894 = vrot.slane %v889, %v893
    %v895 = vlaneseq
    %v896 = vshrl.u32 %v895, 7
    %v897 = vsub.s32 1, %v896
    %v898 = vrot.slane %v889, %v897
    %v901 = vmul.f32 %v883, %v894
    %v902 = vmul.f32 %v887, %v898
    %s903 = scalar_lea.vmem %s2, 64
    %v904 = vld [vmem:[%s903] sm:$0xff]
    %v906 = vsel %vm89, %v904, 0
    %v909 = vsel %vm93, %v901, 0
    %v912 = vsel %vm93, %v902, 0
    %914 = vmatprep.subr.mxu0 %v912
    %915 = vmatpush1.msra.mxu0 %v909
    %916 = vmatprep.subr.mxu0 0.0
    %917 = vmatpush1.msra.mxu0 0.0
    %918 = vmatprep.subr.mxu0 0.0
    %919 = vmatpush1.msra.mxu0 0.0
    %920 = vmatprep.subr.mxu0 0.0
    %921 = vmatpush1.msra.mxu0 0.0
    %922 = vmatprep.subr.mxu0 0.0
    %923 = vmatpush1.msra.mxu0 0.0
    %924 = vmatprep.subr.mxu0 0.0
    %925 = vmatpush1.msra.mxu0 0.0
    %926 = vmatprep.subr.mxu0 0.0
    %927 = vmatpush1.msra.mxu0 0.0
    %928 = vmatprep.subr.mxu0 0.0
    %929 = vmatpush1.msra.mxu0 0.0
    %930 = vmatprep.subr.mxu0 0.0
    %931 = vmatpush1.msra.mxu0 0.0
    %932 = vmatprep.subr.mxu0 0.0
    %933 = vmatpush1.msra.mxu0 0.0
    %934 = vmatprep.subr.mxu0 0.0
    %935 = vmatpush1.msra.mxu0 0.0
    %936 = vmatprep.subr.mxu0 0.0
    %937 = vmatpush1.msra.mxu0 0.0
    %938 = vmatprep.subr.mxu0 0.0
    %939 = vmatpush1.msra.mxu0 0.0
    %940 = vmatprep.subr.mxu0 0.0
    %941 = vmatpush1.msra.mxu0 0.0
    %942 = vmatprep.subr.mxu0 0.0
    %943 = vmatpush1.msra.mxu0 0.0
    %944 = vmatprep.subr.mxu0 0.0
    %945 = vmatpush1.msra.mxu0 0.0
    %946 = vmatprep.subr.mxu0 0.0
    %947 = vmatpush1.msra.mxu0 0.0
    %948 = vmatprep.subr.mxu0 0.0
    %949 = vmatpush1.msra.mxu0 0.0
    %950 = vmatprep.subr.mxu0 0.0
    %951 = vmatpush1.msra.mxu0 0.0
    %952 = vmatprep.subr.mxu0 0.0
    %953 = vmatpush1.msra.mxu0 0.0
    %954 = vmatprep.subr.mxu0 0.0
    %955 = vmatpush1.msra.mxu0 0.0
    %956 = vmatprep.subr.mxu0 0.0
    %957 = vmatpush1.msra.mxu0 0.0
    %958 = vmatprep.subr.mxu0 0.0
    %959 = vmatpush1.msra.mxu0 0.0
    %960 = vmatprep.subr.mxu0 0.0
    %961 = vmatpush1.msra.mxu0 0.0
    %962 = vmatprep.subr.mxu0 0.0
    %963 = vmatpush1.msra.mxu0 0.0
    %964 = vmatprep.subr.mxu0 0.0
    %965 = vmatpush1.msra.mxu0 0.0
    %966 = vmatprep.subr.mxu0 0.0
    %967 = vmatpush1.msra.mxu0 0.0
    %968 = vmatprep.subr.mxu0 0.0
    %969 = vmatpush1.msra.mxu0 0.0
    %970 = vmatprep.subr.mxu0 0.0
    %971 = vmatpush1.msra.mxu0 0.0
    %972 = vmatprep.subr.mxu0 0.0
    %973 = vmatpush1.msra.mxu0 0.0
    %974 = vmatprep.subr.mxu0 0.0
    %975 = vmatpush1.msra.mxu0 0.0
    %976 = vmatprep.subr.mxu0 0.0
    %977 = vmatpush1.msra.mxu0 0.0
    %978 = vmatprep.mubr.f32.mxu0 0.0
    %979 = vmatmul.mubr.f32.gmra.mrb[0].mxu0 %v906
    %v980 = vpop.f32.mrb[0].mxu0
    %v981 = vadd.f32 0.0, %v980
    %v982 = vpop.f32.mrb[0].mxu0
    %v983 = vadd.f32 0.0, %v982
    %984 = vdwg.mxu0
    %v985 = vadd.f32 %v876, %v981
    %v986 = vadd.f32 %v877, %v983
    %v987 = vadd.f32 %v985, %v986
    %988 = vadd.xlane.f32.xlu0 %v987
    %v989 = vpop.xlane.xlu0 %988
    %v990 = vrot.slane %v989, 4
    %v991 = vadd.f32 %v989, %v990
    %v992 = vrot.slane %v991, 2
    %v993 = vadd.f32 %v991, %v992
    %v994 = vrot.slane %v993, 1
    %v995 = vadd.f32 %v993, %v994
    %s996 = vtos %v995
    %v997 = vrcp.pop 2048.0
    %s998 = vtos %v997
    %s999 = smul.f32 %s996, %s998
    %v1000 = vmul.f32 %v985, %v985
    %v1001 = vmul.f32 %v986, %v986
    %v1002 = vadd.f32 %v1000, %v1001
    %1003 = vadd.xlane.f32.xlu0 %v1002
    %v1004 = vpop.xlane.xlu0 %1003
    %v1005 = vrot.slane %v1004, 4
    %v1006 = vadd.f32 %v1004, %v1005
    %v1007 = vrot.slane %v1006, 2
    %v1008 = vadd.f32 %v1006, %v1007
    %v1009 = vrot.slane %v1008, 1
    %v1010 = vadd.f32 %v1008, %v1009
    %s1011 = vtos %v1010
    %v1012 = vrcp.pop 2048.0
    %s1013 = vtos %v1012
    %s1014 = smul.f32 %s1011, %s1013
    %s1015 = smul.f32 %s999, %s999
    %s1016 = ssub.f32 %s1014, %s1015
    %s1017 = smax.f32 %s1016, 0.0
    %v1018 = vstv %s999
    %v1019 = vsub.f32 %v985, %v1018
    %v1020 = vsub.f32 %v986, %v1018
    %s1021 = sadd.f32 %s1017, 1e-05
    %v1022 = vstv %s1021
    %v1023 = vrsqrt.pop %v1022
    %s1024 = vtos %v1023
    %v1025 = vstv %s1024
    %v1026 = vmul.f32 %v1019, %v1025
    %v1027 = vmul.f32 %v1020, %v1025
    %1029 = vset.pattern.permute.xlu0 0
    %1030 = vperm.xlu0 %1029, %v30
    %v1031 = vpop.permute.xlu0 %1030
    %v1033 = vmul.f32 %v1026, %v1031
    %v1034 = vmul.f32 %v1027, %v1031
    %1036 = vset.pattern.permute.xlu0 0
    %1037 = vperm.xlu0 %1036, %v31
    %v1038 = vpop.permute.xlu0 %1037
    %v1040 = vadd.f32 %v1033, %v1038
    %v1041 = vadd.f32 %v1034, %v1038
    %v1042 = vmul.f32 %v1040, 0.5
    %v1043 = vmul.f32 %v1041, 0.5
    %v1044 = vmul.f32 %v1040, 0.70710677
    %v1045 = vmul.f32 %v1041, 0.70710677
    %v1046 = verf.f32.pop %v1044
    %v1047 = verf.f32.pop %v1045
    %v1048 = vadd.f32 %v1046, 1.0
    %v1049 = vadd.f32 %v1047, 1.0
    %v1050 = vmul.f32 %v1042, %v1048
    %v1051 = vmul.f32 %v1043, %v1049
    %1053 = vrot.lane.b32.xlu0 %v1051, 17
    %v1054 = vpop.permute.xlu0 %1053
    %1057 = vrot.lane.b32.xlu0 %v1050, 17
    %v1058 = vpop.permute.xlu0 %1057
    %v1059 = vsel %vm42, %v1058, %v1054
    %v1062 = vsel %vm42, %v1054, %v1058
    %v1063 = vmul.f32 %v1062, %v52
    %v1064 = vmul.f32 %v1059, %v56
    %v1065 = vld [vmem:[%s5] sm:$0xff]
    %1066 = vrot.lane.b32.xlu0 %v1051, 16
    %v1067 = vpop.permute.xlu0 %1066
    %1069 = vrot.lane.b32.xlu0 %v1050, 16
    %v1070 = vpop.permute.xlu0 %1069
    %v1071 = vsel %vm67, %v1070, %v1067
    %v1074 = vsel %vm67, %v1067, %v1070
    %v1075 = vmul.f32 %v1074, %v78
    %v1076 = vmul.f32 %v1071, %v82
    %s1077 = scalar_lea.vmem %s5, 8
    %v1078 = vld [vmem:[%s1077] sm:$0xff]
    %vm1079 = vcmask 64512
    %v1081 = vsel %vm1079, %v1078, 0
    %1083 = vmatprep.subr.mxu0 %v1076
    %1084 = vmatpush1.msra.mxu0 %v1075
    %1085 = vmatprep.subr.mxu0 0.0
    %1086 = vmatpush1.msra.mxu0 0.0
    %1087 = vmatprep.subr.mxu0 0.0
    %1088 = vmatpush1.msra.mxu0 0.0
    %1089 = vmatprep.subr.mxu0 0.0
    %1090 = vmatpush1.msra.mxu0 0.0
    %1091 = vmatprep.subr.mxu0 0.0
    %1092 = vmatpush1.msra.mxu0 0.0
    %1093 = vmatprep.subr.mxu0 0.0
    %1094 = vmatpush1.msra.mxu0 0.0
    %1095 = vmatprep.subr.mxu0 0.0
    %1096 = vmatpush1.msra.mxu0 0.0
    %1097 = vmatprep.subr.mxu0 0.0
    %1098 = vmatpush1.msra.mxu0 0.0
    %1099 = vmatprep.subr.mxu0 0.0
    %1100 = vmatpush1.msra.mxu0 0.0
    %1101 = vmatprep.subr.mxu0 0.0
    %1102 = vmatpush1.msra.mxu0 0.0
    %1103 = vmatprep.subr.mxu0 0.0
    %1104 = vmatpush1.msra.mxu0 0.0
    %1105 = vmatprep.subr.mxu0 0.0
    %1106 = vmatpush1.msra.mxu0 0.0
    %1107 = vmatprep.subr.mxu0 0.0
    %1108 = vmatpush1.msra.mxu0 0.0
    %1109 = vmatprep.subr.mxu0 0.0
    %1110 = vmatpush1.msra.mxu0 0.0
    %1111 = vmatprep.subr.mxu0 0.0
    %1112 = vmatpush1.msra.mxu0 0.0
    %1113 = vmatprep.subr.mxu0 0.0
    %1114 = vmatpush1.msra.mxu0 0.0
    %1115 = vmatprep.subr.mxu0 0.0
    %1116 = vmatpush1.msra.mxu0 0.0
    %1117 = vmatprep.subr.mxu0 0.0
    %1118 = vmatpush1.msra.mxu0 0.0
    %1119 = vmatprep.subr.mxu0 0.0
    %1120 = vmatpush1.msra.mxu0 0.0
    %1121 = vmatprep.subr.mxu0 0.0
    %1122 = vmatpush1.msra.mxu0 0.0
    %1123 = vmatprep.subr.mxu0 0.0
    %1124 = vmatpush1.msra.mxu0 0.0
    %1125 = vmatprep.subr.mxu0 0.0
    %1126 = vmatpush1.msra.mxu0 0.0
    %1127 = vmatprep.subr.mxu0 0.0
    %1128 = vmatpush1.msra.mxu0 0.0
    %1129 = vmatprep.subr.mxu0 0.0
    %1130 = vmatpush1.msra.mxu0 0.0
    %1131 = vmatprep.subr.mxu0 0.0
    %1132 = vmatpush1.msra.mxu0 0.0
    %1133 = vmatprep.subr.mxu0 0.0
    %1134 = vmatpush1.msra.mxu0 0.0
    %1135 = vmatprep.subr.mxu0 0.0
    %1136 = vmatpush1.msra.mxu0 0.0
    %1137 = vmatprep.subr.mxu0 0.0
    %1138 = vmatpush1.msra.mxu0 0.0
    %1139 = vmatprep.subr.mxu0 0.0
    %1140 = vmatpush1.msra.mxu0 0.0
    %1141 = vmatprep.subr.mxu0 0.0
    %1142 = vmatpush1.msra.mxu0 0.0
    %1143 = vmatprep.subr.mxu0 0.0
    %1144 = vmatpush1.msra.mxu0 0.0
    %1145 = vmatprep.subr.mxu0 0.0
    %1146 = vmatpush1.msra.mxu0 0.0
    %1147 = vmatprep.mubr.f32.mxu0 0.0
    %1148 = vmatmul.mubr.f32.gmra.mrb[0].mxu0 %v1081
    %v1149 = vpop.f32.mrb[0].mxu0
    %v1150 = vadd.f32 0.0, %v1149
    %v1151 = vpop.f32.mrb[0].mxu0
    %v1152 = vadd.f32 0.0, %v1151
    %1153 = vdwg.mxu0
    %v1155 = vsel %vm1079, %v1065, 0
    %1157 = vmatprep.subr.mxu0 %v1064
    %1158 = vmatpush1.msra.mxu0 %v1063
    %1159 = vmatprep.subr.mxu0 0.0
    %1160 = vmatpush1.msra.mxu0 0.0
    %1161 = vmatprep.subr.mxu0 0.0
    %1162 = vmatpush1.msra.mxu0 0.0
    %1163 = vmatprep.subr.mxu0 0.0
    %1164 = vmatpush1.msra.mxu0 0.0
    %1165 = vmatprep.subr.mxu0 0.0
    %1166 = vmatpush1.msra.mxu0 0.0
    %1167 = vmatprep.subr.mxu0 0.0
    %1168 = vmatpush1.msra.mxu0 0.0
    %1169 = vmatprep.subr.mxu0 0.0
    %1170 = vmatpush1.msra.mxu0 0.0
    %1171 = vmatprep.subr.mxu0 0.0
    %1172 = vmatpush1.msra.mxu0 0.0
    %1173 = vmatprep.subr.mxu0 0.0
    %1174 = vmatpush1.msra.mxu0 0.0
    %1175 = vmatprep.subr.mxu0 0.0
    %1176 = vmatpush1.msra.mxu0 0.0
    %1177 = vmatprep.subr.mxu0 0.0
    %1178 = vmatpush1.msra.mxu0 0.0
    %1179 = vmatprep.subr.mxu0 0.0
    %1180 = vmatpush1.msra.mxu0 0.0
    %1181 = vmatprep.subr.mxu0 0.0
    %1182 = vmatpush1.msra.mxu0 0.0
    %1183 = vmatprep.subr.mxu0 0.0
    %1184 = vmatpush1.msra.mxu0 0.0
    %1185 = vmatprep.subr.mxu0 0.0
    %1186 = vmatpush1.msra.mxu0 0.0
    %1187 = vmatprep.subr.mxu0 0.0
    %1188 = vmatpush1.msra.mxu0 0.0
    %1189 = vmatprep.subr.mxu0 0.0
    %1190 = vmatpush1.msra.mxu0 0.0
    %1191 = vmatprep.subr.mxu0 0.0
    %1192 = vmatpush1.msra.mxu0 0.0
    %1193 = vmatprep.subr.mxu0 0.0
    %1194 = vmatpush1.msra.mxu0 0.0
    %1195 = vmatprep.subr.mxu0 0.0
    %1196 = vmatpush1.msra.mxu0 0.0
    %1197 = vmatprep.subr.mxu0 0.0
    %1198 = vmatpush1.msra.mxu0 0.0
    %1199 = vmatprep.subr.mxu0 0.0
    %1200 = vmatpush1.msra.mxu0 0.0
    %1201 = vmatprep.subr.mxu0 0.0
    %1202 = vmatpush1.msra.mxu0 0.0
    %1203 = vmatprep.subr.mxu0 0.0
    %1204 = vmatpush1.msra.mxu0 0.0
    %1205 = vmatprep.subr.mxu0 0.0
    %1206 = vmatpush1.msra.mxu0 0.0
    %1207 = vmatprep.subr.mxu0 0.0
    %1208 = vmatpush1.msra.mxu0 0.0
    %1209 = vmatprep.subr.mxu0 0.0
    %1210 = vmatpush1.msra.mxu0 0.0
    %1211 = vmatprep.subr.mxu0 0.0
    %1212 = vmatpush1.msra.mxu0 0.0
    %1213 = vmatprep.subr.mxu0 0.0
    %1214 = vmatpush1.msra.mxu0 0.0
    %1215 = vmatprep.subr.mxu0 0.0
    %1216 = vmatpush1.msra.mxu0 0.0
    %1217 = vmatprep.subr.mxu0 0.0
    %1218 = vmatpush1.msra.mxu0 0.0
    %1219 = vmatprep.subr.mxu0 0.0
    %1220 = vmatpush1.msra.mxu0 0.0
    %1221 = vmatprep.mubr.f32.mxu0 0.0
    %1222 = vmatmul.mubr.f32.gmra.mrb[0].mxu0 %v1155
    %v1223 = vpop.f32.mrb[0].mxu0
    %v1224 = vadd.f32 %v1150, %v1223
    %v1225 = vpop.f32.mrb[0].mxu0
    %v1226 = vadd.f32 %v1152, %v1225
    %1227 = vdwg.mxu0
    %1228 = vrot.lane.b32.xlu0 %v1051, 15
    %v1229 = vpop.permute.xlu0 %1228
    %1231 = vrot.lane.b32.xlu0 %v1050, 15
    %v1232 = vpop.permute.xlu0 %1231
    %v1233 = vsel %vm256, %v1232, %v1229
    %v1236 = vsel %vm256, %v1229, %v1232
    %v1237 = vmul.f32 %v1236, %v267
    %v1238 = vmul.f32 %v1233, %v271
    %s1239 = scalar_lea.vmem %s5, 16
    %v1240 = vld [vmem:[%s1239] sm:$0xff]
    %v1242 = vsel %vm1079, %v1240, 0
    %1244 = vmatprep.subr.mxu0 %v1238
    %1245 = vmatpush1.msra.mxu0 %v1237
    %1246 = vmatprep.subr.mxu0 0.0
    %1247 = vmatpush1.msra.mxu0 0.0
    %1248 = vmatprep.subr.mxu0 0.0
    %1249 = vmatpush1.msra.mxu0 0.0
    %1250 = vmatprep.subr.mxu0 0.0
    %1251 = vmatpush1.msra.mxu0 0.0
    %1252 = vmatprep.subr.mxu0 0.0
    %1253 = vmatpush1.msra.mxu0 0.0
    %1254 = vmatprep.subr.mxu0 0.0
    %1255 = vmatpush1.msra.mxu0 0.0
    %1256 = vmatprep.subr.mxu0 0.0
    %1257 = vmatpush1.msra.mxu0 0.0
    %1258 = vmatprep.subr.mxu0 0.0
    %1259 = vmatpush1.msra.mxu0 0.0
    %1260 = vmatprep.subr.mxu0 0.0
    %1261 = vmatpush1.msra.mxu0 0.0
    %1262 = vmatprep.subr.mxu0 0.0
    %1263 = vmatpush1.msra.mxu0 0.0
    %1264 = vmatprep.subr.mxu0 0.0
    %1265 = vmatpush1.msra.mxu0 0.0
    %1266 = vmatprep.subr.mxu0 0.0
    %1267 = vmatpush1.msra.mxu0 0.0
    %1268 = vmatprep.subr.mxu0 0.0
    %1269 = vmatpush1.msra.mxu0 0.0
    %1270 = vmatprep.subr.mxu0 0.0
    %1271 = vmatpush1.msra.mxu0 0.0
    %1272 = vmatprep.subr.mxu0 0.0
    %1273 = vmatpush1.msra.mxu0 0.0
    %1274 = vmatprep.subr.mxu0 0.0
    %1275 = vmatpush1.msra.mxu0 0.0
    %1276 = vmatprep.subr.mxu0 0.0
    %1277 = vmatpush1.msra.mxu0 0.0
    %1278 = vmatprep.subr.mxu0 0.0
    %1279 = vmatpush1.msra.mxu0 0.0
    %1280 = vmatprep.subr.mxu0 0.0
    %1281 = vmatpush1.msra.mxu0 0.0
    %1282 = vmatprep.subr.mxu0 0.0
    %1283 = vmatpush1.msra.mxu0 0.0
    %1284 = vmatprep.subr.mxu0 0.0
    %1285 = vmatpush1.msra.mxu0 0.0
    %1286 = vmatprep.subr.mxu0 0.0
    %1287 = vmatpush1.msra.mxu0 0.0
    %1288 = vmatprep.subr.mxu0 0.0
    %1289 = vmatpush1.msra.mxu0 0.0
    %1290 = vmatprep.subr.mxu0 0.0
    %1291 = vmatpush1.msra.mxu0 0.0
    %1292 = vmatprep.subr.mxu0 0.0
    %1293 = vmatpush1.msra.mxu0 0.0
    %1294 = vmatprep.subr.mxu0 0.0
    %1295 = vmatpush1.msra.mxu0 0.0
    %1296 = vmatprep.subr.mxu0 0.0
    %1297 = vmatpush1.msra.mxu0 0.0
    %1298 = vmatprep.subr.mxu0 0.0
    %1299 = vmatpush1.msra.mxu0 0.0
    %1300 = vmatprep.subr.mxu0 0.0
    %1301 = vmatpush1.msra.mxu0 0.0
    %1302 = vmatprep.subr.mxu0 0.0
    %1303 = vmatpush1.msra.mxu0 0.0
    %1304 = vmatprep.subr.mxu0 0.0
    %1305 = vmatpush1.msra.mxu0 0.0
    %1306 = vmatprep.subr.mxu0 0.0
    %1307 = vmatpush1.msra.mxu0 0.0
    %1308 = vmatprep.mubr.f32.mxu0 0.0
    %1309 = vmatmul.mubr.f32.gmra.mrb[0].mxu0 %v1242
    %v1310 = vpop.f32.mrb[0].mxu0
    %v1311 = vadd.f32 0.0, %v1310
    %v1312 = vpop.f32.mrb[0].mxu0
    %v1313 = vadd.f32 0.0, %v1312
    %1314 = vdwg.mxu0
    %v1315 = vadd.f32 %v1224, %v1311
    %v1316 = vadd.f32 %v1226, %v1313
    %1317 = vrot.lane.b32.xlu0 %v1051, 1
    %v1318 = vpop.permute.xlu0 %1317
    %1320 = vrot.lane.b32.xlu0 %v1050, 1
    %v1321 = vpop.permute.xlu0 %1320
    %v1322 = vsel %vm365, %v1321, %v1318
    %v1325 = vsel %vm365, %v1318, %v1321
    %v1326 = vmul.f32 %v1325, %v376
    %v1327 = vmul.f32 %v1322, %v380
    %s1328 = scalar_lea.vmem %s5, 24
    %v1329 = vld [vmem:[%s1328] sm:$0xff]
    %v1331 = vsel %vm1079, %v1329, 0
    %1333 = vmatprep.subr.mxu0 %v1327
    %1334 = vmatpush1.msra.mxu0 %v1326
    %1335 = vmatprep.subr.mxu0 0.0
    %1336 = vmatpush1.msra.mxu0 0.0
    %1337 = vmatprep.subr.mxu0 0.0
    %1338 = vmatpush1.msra.mxu0 0.0
    %1339 = vmatprep.subr.mxu0 0.0
    %1340 = vmatpush1.msra.mxu0 0.0
    %1341 = vmatprep.subr.mxu0 0.0
    %1342 = vmatpush1.msra.mxu0 0.0
    %1343 = vmatprep.subr.mxu0 0.0
    %1344 = vmatpush1.msra.mxu0 0.0
    %1345 = vmatprep.subr.mxu0 0.0
    %1346 = vmatpush1.msra.mxu0 0.0
    %1347 = vmatprep.subr.mxu0 0.0
    %1348 = vmatpush1.msra.mxu0 0.0
    %1349 = vmatprep.subr.mxu0 0.0
    %1350 = vmatpush1.msra.mxu0 0.0
    %1351 = vmatprep.subr.mxu0 0.0
    %1352 = vmatpush1.msra.mxu0 0.0
    %1353 = vmatprep.subr.mxu0 0.0
    %1354 = vmatpush1.msra.mxu0 0.0
    %1355 = vmatprep.subr.mxu0 0.0
    %1356 = vmatpush1.msra.mxu0 0.0
    %1357 = vmatprep.subr.mxu0 0.0
    %1358 = vmatpush1.msra.mxu0 0.0
    %1359 = vmatprep.subr.mxu0 0.0
    %1360 = vmatpush1.msra.mxu0 0.0
    %1361 = vmatprep.subr.mxu0 0.0
    %1362 = vmatpush1.msra.mxu0 0.0
    %1363 = vmatprep.subr.mxu0 0.0
    %1364 = vmatpush1.msra.mxu0 0.0
    %1365 = vmatprep.subr.mxu0 0.0
    %1366 = vmatpush1.msra.mxu0 0.0
    %1367 = vmatprep.subr.mxu0 0.0
    %1368 = vmatpush1.msra.mxu0 0.0
    %1369 = vmatprep.subr.mxu0 0.0
    %1370 = vmatpush1.msra.mxu0 0.0
    %1371 = vmatprep.subr.mxu0 0.0
    %1372 = vmatpush1.msra.mxu0 0.0
    %1373 = vmatprep.subr.mxu0 0.0
    %1374 = vmatpush1.msra.mxu0 0.0
    %1375 = vmatprep.subr.mxu0 0.0
    %1376 = vmatpush1.msra.mxu0 0.0
    %1377 = vmatprep.subr.mxu0 0.0
    %1378 = vmatpush1.msra.mxu0 0.0
    %1379 = vmatprep.subr.mxu0 0.0
    %1380 = vmatpush1.msra.mxu0 0.0
    %1381 = vmatprep.subr.mxu0 0.0
    %1382 = vmatpush1.msra.mxu0 0.0
    %1383 = vmatprep.subr.mxu0 0.0
    %1384 = vmatpush1.msra.mxu0 0.0
    %1385 = vmatprep.subr.mxu0 0.0
    %1386 = vmatpush1.msra.mxu0 0.0
    %1387 = vmatprep.subr.mxu0 0.0
    %1388 = vmatpush1.msra.mxu0 0.0
    %1389 = vmatprep.subr.mxu0 0.0
    %1390 = vmatpush1.msra.mxu0 0.0
    %1391 = vmatprep.subr.mxu0 0.0
    %1392 = vmatpush1.msra.mxu0 0.0
    %1393 = vmatprep.subr.mxu0 0.0
    %1394 = vmatpush1.msra.mxu0 0.0
    %1395 = vmatprep.subr.mxu0 0.0
    %1396 = vmatpush1.msra.mxu0 0.0
    %1397 = vmatprep.mubr.f32.mxu0 0.0
    %1398 = vmatmul.mubr.f32.gmra.mrb[0].mxu0 %v1331
    %v1399 = vpop.f32.mrb[0].mxu0
    %v1400 = vadd.f32 0.0, %v1399
    %v1401 = vpop.f32.mrb[0].mxu0
    %v1402 = vadd.f32 0.0, %v1401
    %1403 = vdwg.mxu0
    %v1404 = vadd.f32 %v1315, %v1400
    %v1405 = vadd.f32 %v1316, %v1402
    %s1406 = scalar_lea.vmem %s5, 32
    %v1407 = vld [vmem:[%s1406] sm:$0xff]
    %v1409 = vsel %vm1079, %v1407, 0
    %1411 = vmatprep.subr.mxu0 %v1051
    %1412 = vmatpush1.msra.mxu0 %v1050
    %1413 = vmatprep.subr.mxu0 0.0
    %1414 = vmatpush1.msra.mxu0 0.0
    %1415 = vmatprep.subr.mxu0 0.0
    %1416 = vmatpush1.msra.mxu0 0.0
    %1417 = vmatprep.subr.mxu0 0.0
    %1418 = vmatpush1.msra.mxu0 0.0
    %1419 = vmatprep.subr.mxu0 0.0
    %1420 = vmatpush1.msra.mxu0 0.0
    %1421 = vmatprep.subr.mxu0 0.0
    %1422 = vmatpush1.msra.mxu0 0.0
    %1423 = vmatprep.subr.mxu0 0.0
    %1424 = vmatpush1.msra.mxu0 0.0
    %1425 = vmatprep.subr.mxu0 0.0
    %1426 = vmatpush1.msra.mxu0 0.0
    %1427 = vmatprep.subr.mxu0 0.0
    %1428 = vmatpush1.msra.mxu0 0.0
    %1429 = vmatprep.subr.mxu0 0.0
    %1430 = vmatpush1.msra.mxu0 0.0
    %1431 = vmatprep.subr.mxu0 0.0
    %1432 = vmatpush1.msra.mxu0 0.0
    %1433 = vmatprep.subr.mxu0 0.0
    %1434 = vmatpush1.msra.mxu0 0.0
    %1435 = vmatprep.subr.mxu0 0.0
    %1436 = vmatpush1.msra.mxu0 0.0
    %1437 = vmatprep.subr.mxu0 0.0
    %1438 = vmatpush1.msra.mxu0 0.0
    %1439 = vmatprep.subr.mxu0 0.0
    %1440 = vmatpush1.msra.mxu0 0.0
    %1441 = vmatprep.subr.mxu0 0.0
    %1442 = vmatpush1.msra.mxu0 0.0
    %1443 = vmatprep.subr.mxu0 0.0
    %1444 = vmatpush1.msra.mxu0 0.0
    %1445 = vmatprep.subr.mxu0 0.0
    %1446 = vmatpush1.msra.mxu0 0.0
    %1447 = vmatprep.subr.mxu0 0.0
    %1448 = vmatpush1.msra.mxu0 0.0
    %1449 = vmatprep.subr.mxu0 0.0
    %1450 = vmatpush1.msra.mxu0 0.0
    %1451 = vmatprep.subr.mxu0 0.0
    %1452 = vmatpush1.msra.mxu0 0.0
    %1453 = vmatprep.subr.mxu0 0.0
    %1454 = vmatpush1.msra.mxu0 0.0
    %1455 = vmatprep.subr.mxu0 0.0
    %1456 = vmatpush1.msra.mxu0 0.0
    %1457 = vmatprep.subr.mxu0 0.0
    %1458 = vmatpush1.msra.mxu0 0.0
    %1459 = vmatprep.subr.mxu0 0.0
    %1460 = vmatpush1.msra.mxu0 0.0
    %1461 = vmatprep.subr.mxu0 0.0
    %1462 = vmatpush1.msra.mxu0 0.0
    %1463 = vmatprep.subr.mxu0 0.0
    %1464 = vmatpush1.msra.mxu0 0.0
    %1465 = vmatprep.subr.mxu0 0.0
    %1466 = vmatpush1.msra.mxu0 0.0
    %1467 = vmatprep.subr.mxu0 0.0
    %1468 = vmatpush1.msra.mxu0 0.0
    %1469 = vmatprep.subr.mxu0 0.0
    %1470 = vmatpush1.msra.mxu0 0.0
    %1471 = vmatprep.subr.mxu0 0.0
    %1472 = vmatpush1.msra.mxu0 0.0
    %1473 = vmatprep.subr.mxu0 0.0
    %1474 = vmatpush1.msra.mxu0 0.0
    %1475 = vmatprep.mubr.f32.mxu0 0.0
    %1476 = vmatmul.mubr.f32.gmra.mrb[0].mxu0 %v1409
    %v1477 = vpop.f32.mrb[0].mxu0
    %v1478 = vadd.f32 0.0, %v1477
    %v1479 = vpop.f32.mrb[0].mxu0
    %v1480 = vadd.f32 0.0, %v1479
    %1481 = vdwg.mxu0
    %v1482 = vadd.f32 %v1404, %v1478
    %v1483 = vadd.f32 %v1405, %v1480
    %1484 = vrot.lane.b32.xlu0 %v1050, 127
    %v1485 = vpop.permute.xlu0 %1484
    %1486 = vrot.lane.b32.xlu0 %v1051, 127
    %v1487 = vpop.permute.xlu0 %1486
    %v1488 = vsel %vm555, %v1485, %v1487
    %v1492 = vsel %vm555, %v1487, %v1485
    %v1493 = vmul.f32 %v1488, %v567
    %v1494 = vmul.f32 %v1492, %v571
    %s1495 = scalar_lea.vmem %s5, 40
    %v1496 = vld [vmem:[%s1495] sm:$0xff]
    %v1498 = vsel %vm1079, %v1496, 0
    %1500 = vmatprep.subr.mxu0 %v1494
    %1501 = vmatpush1.msra.mxu0 %v1493
    %1502 = vmatprep.subr.mxu0 0.0
    %1503 = vmatpush1.msra.mxu0 0.0
    %1504 = vmatprep.subr.mxu0 0.0
    %1505 = vmatpush1.msra.mxu0 0.0
    %1506 = vmatprep.subr.mxu0 0.0
    %1507 = vmatpush1.msra.mxu0 0.0
    %1508 = vmatprep.subr.mxu0 0.0
    %1509 = vmatpush1.msra.mxu0 0.0
    %1510 = vmatprep.subr.mxu0 0.0
    %1511 = vmatpush1.msra.mxu0 0.0
    %1512 = vmatprep.subr.mxu0 0.0
    %1513 = vmatpush1.msra.mxu0 0.0
    %1514 = vmatprep.subr.mxu0 0.0
    %1515 = vmatpush1.msra.mxu0 0.0
    %1516 = vmatprep.subr.mxu0 0.0
    %1517 = vmatpush1.msra.mxu0 0.0
    %1518 = vmatprep.subr.mxu0 0.0
    %1519 = vmatpush1.msra.mxu0 0.0
    %1520 = vmatprep.subr.mxu0 0.0
    %1521 = vmatpush1.msra.mxu0 0.0
    %1522 = vmatprep.subr.mxu0 0.0
    %1523 = vmatpush1.msra.mxu0 0.0
    %1524 = vmatprep.subr.mxu0 0.0
    %1525 = vmatpush1.msra.mxu0 0.0
    %1526 = vmatprep.subr.mxu0 0.0
    %1527 = vmatpush1.msra.mxu0 0.0
    %1528 = vmatprep.subr.mxu0 0.0
    %1529 = vmatpush1.msra.mxu0 0.0
    %1530 = vmatprep.subr.mxu0 0.0
    %1531 = vmatpush1.msra.mxu0 0.0
    %1532 = vmatprep.subr.mxu0 0.0
    %1533 = vmatpush1.msra.mxu0 0.0
    %1534 = vmatprep.subr.mxu0 0.0
    %1535 = vmatpush1.msra.mxu0 0.0
    %1536 = vmatprep.subr.mxu0 0.0
    %1537 = vmatpush1.msra.mxu0 0.0
    %1538 = vmatprep.subr.mxu0 0.0
    %1539 = vmatpush1.msra.mxu0 0.0
    %1540 = vmatprep.subr.mxu0 0.0
    %1541 = vmatpush1.msra.mxu0 0.0
    %1542 = vmatprep.subr.mxu0 0.0
    %1543 = vmatpush1.msra.mxu0 0.0
    %1544 = vmatprep.subr.mxu0 0.0
    %1545 = vmatpush1.msra.mxu0 0.0
    %1546 = vmatprep.subr.mxu0 0.0
    %1547 = vmatpush1.msra.mxu0 0.0
    %1548 = vmatprep.subr.mxu0 0.0
    %1549 = vmatpush1.msra.mxu0 0.0
    %1550 = vmatprep.subr.mxu0 0.0
    %1551 = vmatpush1.msra.mxu0 0.0
    %1552 = vmatprep.subr.mxu0 0.0
    %1553 = vmatpush1.msra.mxu0 0.0
    %1554 = vmatprep.subr.mxu0 0.0
    %1555 = vmatpush1.msra.mxu0 0.0
    %1556 = vmatprep.subr.mxu0 0.0
    %1557 = vmatpush1.msra.mxu0 0.0
    %1558 = vmatprep.subr.mxu0 0.0
    %1559 = vmatpush1.msra.mxu0 0.0
    %1560 = vmatprep.subr.mxu0 0.0
    %1561 = vmatpush1.msra.mxu0 0.0
    %1562 = vmatprep.subr.mxu0 0.0
    %1563 = vmatpush1.msra.mxu0 0.0
    %1564 = vmatprep.mubr.f32.mxu0 0.0
    %1565 = vmatmul.mubr.f32.gmra.mrb[0].mxu0 %v1498
    %v1566 = vpop.f32.mrb[0].mxu0
    %v1567 = vadd.f32 0.0, %v1566
    %v1568 = vpop.f32.mrb[0].mxu0
    %v1569 = vadd.f32 0.0, %v1568
    %1570 = vdwg.mxu0
    %v1571 = vadd.f32 %v1482, %v1567
    %v1572 = vadd.f32 %v1483, %v1569
    %1573 = vrot.lane.b32.xlu0 %v1050, 113
    %v1574 = vpop.permute.xlu0 %1573
    %1575 = vrot.lane.b32.xlu0 %v1051, 113
    %v1576 = vpop.permute.xlu0 %1575
    %v1577 = vsel %vm664, %v1574, %v1576
    %v1581 = vsel %vm664, %v1576, %v1574
    %v1582 = vmul.f32 %v1577, %v676
    %v1583 = vmul.f32 %v1581, %v680
    %s1584 = scalar_lea.vmem %s5, 48
    %v1585 = vld [vmem:[%s1584] sm:$0xff]
    %v1587 = vsel %vm1079, %v1585, 0
    %1589 = vmatprep.subr.mxu0 %v1583
    %1590 = vmatpush1.msra.mxu0 %v1582
    %1591 = vmatprep.subr.mxu0 0.0
    %1592 = vmatpush1.msra.mxu0 0.0
    %1593 = vmatprep.subr.mxu0 0.0
    %1594 = vmatpush1.msra.mxu0 0.0
    %1595 = vmatprep.subr.mxu0 0.0
    %1596 = vmatpush1.msra.mxu0 0.0
    %1597 = vmatprep.subr.mxu0 0.0
    %1598 = vmatpush1.msra.mxu0 0.0
    %1599 = vmatprep.subr.mxu0 0.0
    %1600 = vmatpush1.msra.mxu0 0.0
    %1601 = vmatprep.subr.mxu0 0.0
    %1602 = vmatpush1.msra.mxu0 0.0
    %1603 = vmatprep.subr.mxu0 0.0
    %1604 = vmatpush1.msra.mxu0 0.0
    %1605 = vmatprep.subr.mxu0 0.0
    %1606 = vmatpush1.msra.mxu0 0.0
    %1607 = vmatprep.subr.mxu0 0.0
    %1608 = vmatpush1.msra.mxu0 0.0
    %1609 = vmatprep.subr.mxu0 0.0
    %1610 = vmatpush1.msra.mxu0 0.0
    %1611 = vmatprep.subr.mxu0 0.0
    %1612 = vmatpush1.msra.mxu0 0.0
    %1613 = vmatprep.subr.mxu0 0.0
    %1614 = vmatpush1.msra.mxu0 0.0
    %1615 = vmatprep.subr.mxu0 0.0
    %1616 = vmatpush1.msra.mxu0 0.0
    %1617 = vmatprep.subr.mxu0 0.0
    %1618 = vmatpush1.msra.mxu0 0.0
    %1619 = vmatprep.subr.mxu0 0.0
    %1620 = vmatpush1.msra.mxu0 0.0
    %1621 = vmatprep.subr.mxu0 0.0
    %1622 = vmatpush1.msra.mxu0 0.0
    %1623 = vmatprep.subr.mxu0 0.0
    %1624 = vmatpush1.msra.mxu0 0.0
    %1625 = vmatprep.subr.mxu0 0.0
    %1626 = vmatpush1.msra.mxu0 0.0
    %1627 = vmatprep.subr.mxu0 0.0
    %1628 = vmatpush1.msra.mxu0 0.0
    %1629 = vmatprep.subr.mxu0 0.0
    %1630 = vmatpush1.msra.mxu0 0.0
    %1631 = vmatprep.subr.mxu0 0.0
    %1632 = vmatpush1.msra.mxu0 0.0
    %1633 = vmatprep.subr.mxu0 0.0
    %1634 = vmatpush1.msra.mxu0 0.0
    %1635 = vmatprep.subr.mxu0 0.0
    %1636 = vmatpush1.msra.mxu0 0.0
    %1637 = vmatprep.subr.mxu0 0.0
    %1638 = vmatpush1.msra.mxu0 0.0
    %1639 = vmatprep.subr.mxu0 0.0
    %1640 = vmatpush1.msra.mxu0 0.0
    %1641 = vmatprep.subr.mxu0 0.0
    %1642 = vmatpush1.msra.mxu0 0.0
    %1643 = vmatprep.subr.mxu0 0.0
    %1644 = vmatpush1.msra.mxu0 0.0
    %1645 = vmatprep.subr.mxu0 0.0
    %1646 = vmatpush1.msra.mxu0 0.0
    %1647 = vmatprep.subr.mxu0 0.0
    %1648 = vmatpush1.msra.mxu0 0.0
    %1649 = vmatprep.subr.mxu0 0.0
    %1650 = vmatpush1.msra.mxu0 0.0
    %1651 = vmatprep.subr.mxu0 0.0
    %1652 = vmatpush1.msra.mxu0 0.0
    %1653 = vmatprep.mubr.f32.mxu0 0.0
    %1654 = vmatmul.mubr.f32.gmra.mrb[0].mxu0 %v1587
    %v1655 = vpop.f32.mrb[0].mxu0
    %v1656 = vadd.f32 0.0, %v1655
    %v1657 = vpop.f32.mrb[0].mxu0
    %v1658 = vadd.f32 0.0, %v1657
    %1659 = vdwg.mxu0
    %v1660 = vadd.f32 %v1571, %v1656
    %v1661 = vadd.f32 %v1572, %v1658
    %1662 = vrot.lane.b32.xlu0 %v1050, 112
    %v1663 = vpop.permute.xlu0 %1662
    %1664 = vrot.lane.b32.xlu0 %v1051, 112
    %v1665 = vpop.permute.xlu0 %1664
    %v1666 = vsel %vm773, %v1663, %v1665
    %v1670 = vsel %vm773, %v1665, %v1663
    %v1671 = vmul.f32 %v1666, %v785
    %v1672 = vmul.f32 %v1670, %v789
    %s1673 = scalar_lea.vmem %s5, 56
    %v1674 = vld [vmem:[%s1673] sm:$0xff]
    %v1676 = vsel %vm1079, %v1674, 0
    %1678 = vmatprep.subr.mxu0 %v1672
    %1679 = vmatpush1.msra.mxu0 %v1671
    %1680 = vmatprep.subr.mxu0 0.0
    %1681 = vmatpush1.msra.mxu0 0.0
    %1682 = vmatprep.subr.mxu0 0.0
    %1683 = vmatpush1.msra.mxu0 0.0
    %1684 = vmatprep.subr.mxu0 0.0
    %1685 = vmatpush1.msra.mxu0 0.0
    %1686 = vmatprep.subr.mxu0 0.0
    %1687 = vmatpush1.msra.mxu0 0.0
    %1688 = vmatprep.subr.mxu0 0.0
    %1689 = vmatpush1.msra.mxu0 0.0
    %1690 = vmatprep.subr.mxu0 0.0
    %1691 = vmatpush1.msra.mxu0 0.0
    %1692 = vmatprep.subr.mxu0 0.0
    %1693 = vmatpush1.msra.mxu0 0.0
    %1694 = vmatprep.subr.mxu0 0.0
    %1695 = vmatpush1.msra.mxu0 0.0
    %1696 = vmatprep.subr.mxu0 0.0
    %1697 = vmatpush1.msra.mxu0 0.0
    %1698 = vmatprep.subr.mxu0 0.0
    %1699 = vmatpush1.msra.mxu0 0.0
    %1700 = vmatprep.subr.mxu0 0.0
    %1701 = vmatpush1.msra.mxu0 0.0
    %1702 = vmatprep.subr.mxu0 0.0
    %1703 = vmatpush1.msra.mxu0 0.0
    %1704 = vmatprep.subr.mxu0 0.0
    %1705 = vmatpush1.msra.mxu0 0.0
    %1706 = vmatprep.subr.mxu0 0.0
    %1707 = vmatpush1.msra.mxu0 0.0
    %1708 = vmatprep.subr.mxu0 0.0
    %1709 = vmatpush1.msra.mxu0 0.0
    %1710 = vmatprep.subr.mxu0 0.0
    %1711 = vmatpush1.msra.mxu0 0.0
    %1712 = vmatprep.subr.mxu0 0.0
    %1713 = vmatpush1.msra.mxu0 0.0
    %1714 = vmatprep.subr.mxu0 0.0
    %1715 = vmatpush1.msra.mxu0 0.0
    %1716 = vmatprep.subr.mxu0 0.0
    %1717 = vmatpush1.msra.mxu0 0.0
    %1718 = vmatprep.subr.mxu0 0.0
    %1719 = vmatpush1.msra.mxu0 0.0
    %1720 = vmatprep.subr.mxu0 0.0
    %1721 = vmatpush1.msra.mxu0 0.0
    %1722 = vmatprep.subr.mxu0 0.0
    %1723 = vmatpush1.msra.mxu0 0.0
    %1724 = vmatprep.subr.mxu0 0.0
    %1725 = vmatpush1.msra.mxu0 0.0
    %1726 = vmatprep.subr.mxu0 0.0
    %1727 = vmatpush1.msra.mxu0 0.0
    %1728 = vmatprep.subr.mxu0 0.0
    %1729 = vmatpush1.msra.mxu0 0.0
    %1730 = vmatprep.subr.mxu0 0.0
    %1731 = vmatpush1.msra.mxu0 0.0
    %1732 = vmatprep.subr.mxu0 0.0
    %1733 = vmatpush1.msra.mxu0 0.0
    %1734 = vmatprep.subr.mxu0 0.0
    %1735 = vmatpush1.msra.mxu0 0.0
    %1736 = vmatprep.subr.mxu0 0.0
    %1737 = vmatpush1.msra.mxu0 0.0
    %1738 = vmatprep.subr.mxu0 0.0
    %1739 = vmatpush1.msra.mxu0 0.0
    %1740 = vmatprep.subr.mxu0 0.0
    %1741 = vmatpush1.msra.mxu0 0.0
    %1742 = vmatprep.mubr.f32.mxu0 0.0
    %1743 = vmatmul.mubr.f32.gmra.mrb[0].mxu0 %v1676
    %v1744 = vpop.f32.mrb[0].mxu0
    %v1745 = vadd.f32 0.0, %v1744
    %v1746 = vpop.f32.mrb[0].mxu0
    %v1747 = vadd.f32 0.0, %v1746
    %1748 = vdwg.mxu0
    %v1749 = vadd.f32 %v1660, %v1745
    %v1750 = vadd.f32 %v1661, %v1747
    %1751 = vrot.lane.b32.xlu0 %v1050, 111
    %v1752 = vpop.permute.xlu0 %1751
    %1753 = vrot.lane.b32.xlu0 %v1051, 111
    %v1754 = vpop.permute.xlu0 %1753
    %v1755 = vsel %vm882, %v1752, %v1754
    %v1759 = vsel %vm882, %v1754, %v1752
    %v1760 = vmul.f32 %v1755, %v894
    %v1761 = vmul.f32 %v1759, %v898
    %s1762 = scalar_lea.vmem %s5, 64
    %v1763 = vld [vmem:[%s1762] sm:$0xff]
    %v1765 = vsel %vm1079, %v1763, 0
    %1767 = vmatprep.subr.mxu0 %v1761
    %1768 = vmatpush1.msra.mxu0 %v1760
    %1769 = vmatprep.subr.mxu0 0.0
    %1770 = vmatpush1.msra.mxu0 0.0
    %1771 = vmatprep.subr.mxu0 0.0
    %1772 = vmatpush1.msra.mxu0 0.0
    %1773 = vmatprep.subr.mxu0 0.0
    %1774 = vmatpush1.msra.mxu0 0.0
    %1775 = vmatprep.subr.mxu0 0.0
    %1776 = vmatpush1.msra.mxu0 0.0
    %1777 = vmatprep.subr.mxu0 0.0
    %1778 = vmatpush1.msra.mxu0 0.0
    %1779 = vmatprep.subr.mxu0 0.0
    %1780 = vmatpush1.msra.mxu0 0.0
    %1781 = vmatprep.subr.mxu0 0.0
    %1782 = vmatpush1.msra.mxu0 0.0
    %1783 = vmatprep.subr.mxu0 0.0
    %1784 = vmatpush1.msra.mxu0 0.0
    %1785 = vmatprep.subr.mxu0 0.0
    %1786 = vmatpush1.msra.mxu0 0.0
    %1787 = vmatprep.subr.mxu0 0.0
    %1788 = vmatpush1.msra.mxu0 0.0
    %1789 = vmatprep.subr.mxu0 0.0
    %1790 = vmatpush1.msra.mxu0 0.0
    %1791 = vmatprep.subr.mxu0 0.0
    %1792 = vmatpush1.msra.mxu0 0.0
    %1793 = vmatprep.subr.mxu0 0.0
    %1794 = vmatpush1.msra.mxu0 0.0
    %1795 = vmatprep.subr.mxu0 0.0
    %1796 = vmatpush1.msra.mxu0 0.0
    %1797 = vmatprep.subr.mxu0 0.0
    %1798 = vmatpush1.msra.mxu0 0.0
    %1799 = vmatprep.subr.mxu0 0.0
    %1800 = vmatpush1.msra.mxu0 0.0
    %1801 = vmatprep.subr.mxu0 0.0
    %1802 = vmatpush1.msra.mxu0 0.0
    %1803 = vmatprep.subr.mxu0 0.0
    %1804 = vmatpush1.msra.mxu0 0.0
    %1805 = vmatprep.subr.mxu0 0.0
    %1806 = vmatpush1.msra.mxu0 0.0
    %1807 = vmatprep.subr.mxu0 0.0
    %1808 = vmatpush1.msra.mxu0 0.0
    %1809 = vmatprep.subr.mxu0 0.0
    %1810 = vmatpush1.msra.mxu0 0.0
    %1811 = vmatprep.subr.mxu0 0.0
    %1812 = vmatpush1.msra.mxu0 0.0
    %1813 = vmatprep.subr.mxu0 0.0
    %1814 = vmatpush1.msra.mxu0 0.0
    %1815 = vmatprep.subr.mxu0 0.0
    %1816 = vmatpush1.msra.mxu0 0.0
    %1817 = vmatprep.subr.mxu0 0.0
    %1818 = vmatpush1.msra.mxu0 0.0
    %1819 = vmatprep.subr.mxu0 0.0
    %1820 = vmatpush1.msra.mxu0 0.0
    %1821 = vmatprep.subr.mxu0 0.0
    %1822 = vmatpush1.msra.mxu0 0.0
    %1823 = vmatprep.subr.mxu0 0.0
    %1824 = vmatpush1.msra.mxu0 0.0
    %1825 = vmatprep.subr.mxu0 0.0
    %1826 = vmatpush1.msra.mxu0 0.0
    %1827 = vmatprep.subr.mxu0 0.0
    %1828 = vmatpush1.msra.mxu0 0.0
    %1829 = vmatprep.subr.mxu0 0.0
    %1830 = vmatpush1.msra.mxu0 0.0
    %1831 = vmatprep.mubr.f32.mxu0 0.0
    %1832 = vmatmul.mubr.f32.gmra.mrb[0].mxu0 %v1765
    %v1833 = vpop.f32.mrb[0].mxu0
    %v1834 = vadd.f32 0.0, %v1833
    %v1835 = vpop.f32.mrb[0].mxu0
    %v1836 = vadd.f32 0.0, %v1835
    %1837 = vdwg.mxu0
    %v1838 = vadd.f32 %v1749, %v1834
    %v1839 = vadd.f32 %v1750, %v1836
    %v1840 = vadd.f32 %v1838, %v1839
    %1841 = vadd.xlane.f32.xlu0 %v1840
    %v1842 = vpop.xlane.xlu0 %1841
    %v1843 = vrot.slane %v1842, 4
    %v1844 = vadd.f32 %v1842, %v1843
    %v1845 = vrot.slane %v1844, 2
    %v1846 = vadd.f32 %v1844, %v1845
    %v1847 = vrot.slane %v1846, 1
    %v1848 = vadd.f32 %v1846, %v1847
    %s1849 = vtos %v1848
    %v1850 = vrcp.pop 2048.0
    %s1851 = vtos %v1850
    %s1852 = smul.f32 %s1849, %s1851
    %v1853 = vmul.f32 %v1838, %v1838
    %v1854 = vmul.f32 %v1839, %v1839
    %v1855 = vadd.f32 %v1853, %v1854
    %1856 = vadd.xlane.f32.xlu0 %v1855
    %v1857 = vpop.xlane.xlu0 %1856
    %v1858 = vrot.slane %v1857, 4
    %v1859 = vadd.f32 %v1857, %v1858
    %v1860 = vrot.slane %v1859, 2
    %v1861 = vadd.f32 %v1859, %v1860
    %v1862 = vrot.slane %v1861, 1
    %v1863 = vadd.f32 %v1861, %v1862
    %s1864 = vtos %v1863
    %v1865 = vrcp.pop 2048.0
    %s1866 = vtos %v1865
    %s1867 = smul.f32 %s1864, %s1866
    %s1868 = smul.f32 %s1852, %s1852
    %s1869 = ssub.f32 %s1867, %s1868
    %s1870 = smax.f32 %s1869, 0.0
    %v1871 = vstv %s1852
    %v1872 = vsub.f32 %v1838, %v1871
    %v1873 = vsub.f32 %v1839, %v1871
    %s1874 = sadd.f32 %s1870, 1e-05
    %v1875 = vstv %s1874
    %v1876 = vrsqrt.pop %v1875
    %s1877 = vtos %v1876
    %v1878 = vstv %s1877
    %v1879 = vmul.f32 %v1872, %v1878
    %v1880 = vmul.f32 %v1873, %v1878
    %1882 = vset.pattern.permute.xlu0 0
    %1883 = vperm.xlu0 %1882, %v32
    %v1884 = vpop.permute.xlu0 %1883
    %v1886 = vmul.f32 %v1879, %v1884
    %v1887 = vmul.f32 %v1880, %v1884
    %1889 = vset.pattern.permute.xlu0 0
    %1890 = vperm.xlu0 %1889, %v33
    %v1891 = vpop.permute.xlu0 %1890
    %v1893 = vadd.f32 %v1886, %v1891
    %v1894 = vadd.f32 %v1887, %v1891
    %1895 = vst [vmem:[#allocation2] sm:$0xff] %v1893
    %1896 = vst [vmem:[#allocation2 + $0x8] sm:$0xff] %v1894
    %s1897 = scalar_lea.vmem %s1, 8
    %v1898 = vld [vmem:[%s1897] sm:$0xff]
    %v1900 = vcombine.high %v1898, %v1898
    %1901 = vrot.lane.b32.xlu0 %v1900, 17
    %v1902 = vpop.permute.xlu0 %1901
    %1904 = vrot.lane.b32.xlu0 %v1898, 17
    %v1905 = vpop.permute.xlu0 %1904
    %v1906 = vsel %vm42, %v1905, %v1902
    %v1909 = vsel %vm42, %v1902, %v1905
    %v1910 = vld [vmem:[%s0] sm:$0x3]
    %v1912 = vlaneseq
    %v1913 = vshrl.u32 %v1912, 7
    %v1914 = vsub.s32 0, %v1913
    %v1915 = vrot.slane %v1910, %v1914
    %v1916 = vlaneseq
    %v1917 = vshrl.u32 %v1916, 7
    %v1918 = vsub.s32 1, %v1917
    %v1919 = vrot.slane %v1910, %v1918
    %v1922 = vmul.f32 %v1909, %v1915
    %v1923 = vmul.f32 %v1906, %v1919
    %v1924 = vld [vmem:[%s2] sm:$0xff]
    %1925 = vrot.lane.b32.xlu0 %v1900, 16
    %v1926 = vpop.permute.xlu0 %1925
    %1928 = vrot.lane.b32.xlu0 %v1898, 16
    %v1929 = vpop.permute.xlu0 %1928
    %v1930 = vsel %vm67, %v1929, %v1926
    %v1933 = vsel %vm67, %v1926, %v1929
    %v1934 = vld [vmem:[%s72] sm:$0x3]
    %v1936 = vlaneseq
    %v1937 = vshrl.u32 %v1936, 7
    %v1938 = vsub.s32 0, %v1937
    %v1939 = vrot.slane %v1934, %v1938
    %v1940 = vlaneseq
    %v1941 = vshrl.u32 %v1940, 7
    %v1942 = vsub.s32 1, %v1941
    %v1943 = vrot.slane %v1934, %v1942
    %v1946 = vmul.f32 %v1933, %v1939
    %v1947 = vmul.f32 %v1930, %v1943
    %v1948 = vld [vmem:[%s87] sm:$0xff]
    %v1950 = vsel %vm89, %v1948, 0
    %v1953 = vsel %vm93, %v1946, 0
    %v1956 = vsel %vm93, %v1947, 0
    %1958 = vmatprep.subr.mxu0 %v1956
    %1959 = vmatpush1.msra.mxu0 %v1953
    %1960 = vmatprep.subr.mxu0 0.0
    %1961 = vmatpush1.msra.mxu0 0.0
    %1962 = vmatprep.subr.mxu0 0.0
    %1963 = vmatpush1.msra.mxu0 0.0
    %1964 = vmatprep.subr.mxu0 0.0
    %1965 = vmatpush1.msra.mxu0 0.0
    %1966 = vmatprep.subr.mxu0 0.0
    %1967 = vmatpush1.msra.mxu0 0.0
    %1968 = vmatprep.subr.mxu0 0.0
    %1969 = vmatpush1.msra.mxu0 0.0
    %1970 = vmatprep.subr.mxu0 0.0
    %1971 = vmatpush1.msra.mxu0 0.0
    %1972 = vmatprep.subr.mxu0 0.0
    %1973 = vmatpush1.msra.mxu0 0.0
    %1974 = vmatprep.subr.mxu0 0.0
    %1975 = vmatpush1.msra.mxu0 0.0
    %1976 = vmatprep.subr.mxu0 0.0
    %1977 = vmatpush1.msra.mxu0 0.0
    %1978 = vmatprep.subr.mxu0 0.0
    %1979 = vmatpush1.msra.mxu0 0.0
    %1980 = vmatprep.subr.mxu0 0.0
    %1981 = vmatpush1.msra.mxu0 0.0
    %1982 = vmatprep.subr.mxu0 0.0
    %1983 = vmatpush1.msra.mxu0 0.0
    %1984 = vmatprep.subr.mxu0 0.0
    %1985 = vmatpush1.msra.mxu0 0.0
    %1986 = vmatprep.subr.mxu0 0.0
    %1987 = vmatpush1.msra.mxu0 0.0
    %1988 = vmatprep.subr.mxu0 0.0
    %1989 = vmatpush1.msra.mxu0 0.0
    %1990 = vmatprep.subr.mxu0 0.0
    %1991 = vmatpush1.msra.mxu0 0.0
    %1992 = vmatprep.subr.mxu0 0.0
    %1993 = vmatpush1.msra.mxu0 0.0
    %1994 = vmatprep.subr.mxu0 0.0
    %1995 = vmatpush1.msra.mxu0 0.0
    %1996 = vmatprep.subr.mxu0 0.0
    %1997 = vmatpush1.msra.mxu0 0.0
    %1998 = vmatprep.subr.mxu0 0.0
    %1999 = vmatpush1.msra.mxu0 0.0
    %2000 = vmatprep.subr.mxu0 0.0
    %2001 = vmatpush1.msra.mxu0 0.0
    %2002 = vmatprep.subr.mxu0 0.0
    %2003 = vmatpush1.msra.mxu0 0.0
    %2004 = vmatprep.subr.mxu0 0.0
    %2005 = vmatpush1.msra.mxu0 0.0
    %2006 = vmatprep.subr.mxu0 0.0
    %2007 = vmatpush1.msra.mxu0 0.0
    %2008 = vmatprep.subr.mxu0 0.0
    %2009 = vmatpush1.msra.mxu0 0.0
    %2010 = vmatprep.subr.mxu0 0.0
    %2011 = vmatpush1.msra.mxu0 0.0
    %2012 = vmatprep.subr.mxu0 0.0
    %2013 = vmatpush1.msra.mxu0 0.0
    %2014 = vmatprep.subr.mxu0 0.0
    %2015 = vmatpush1.msra.mxu0 0.0
    %2016 = vmatprep.subr.mxu0 0.0
    %2017 = vmatpush1.msra.mxu0 0.0
    %2018 = vmatprep.subr.mxu0 0.0
    %2019 = vmatpush1.msra.mxu0 0.0
    %2020 = vmatprep.subr.mxu0 0.0
    %2021 = vmatpush1.msra.mxu0 0.0
    %2022 = vmatprep.mubr.f32.mxu0 0.0
    %2023 = vmatmul.mubr.f32.gmra.mrb[0].mxu0 %v1950
    %v2024 = vpop.f32.mrb[0].mxu0
    %v2025 = vadd.f32 0.0, %v2024
    %v2026 = vpop.f32.mrb[0].mxu0
    %v2027 = vadd.f32 0.0, %v2026
    %2028 = vdwg.mxu0
    %v2030 = vsel %vm89, %v1924, 0
    %v2033 = vsel %vm93, %v1922, 0
    %v2036 = vsel %vm93, %v1923, 0
    %2038 = vmatprep.subr.mxu0 %v2036
    %2039 = vmatpush1.msra.mxu0 %v2033
    %2040 = vmatprep.subr.mxu0 0.0
    %2041 = vmatpush1.msra.mxu0 0.0
    %2042 = vmatprep.subr.mxu0 0.0
    %2043 = vmatpush1.msra.mxu0 0.0
    %2044 = vmatprep.subr.mxu0 0.0
    %2045 = vmatpush1.msra.mxu0 0.0
    %2046 = vmatprep.subr.mxu0 0.0
    %2047 = vmatpush1.msra.mxu0 0.0
    %2048 = vmatprep.subr.mxu0 0.0
    %2049 = vmatpush1.msra.mxu0 0.0
    %2050 = vmatprep.subr.mxu0 0.0
    %2051 = vmatpush1.msra.mxu0 0.0
    %2052 = vmatprep.subr.mxu0 0.0
    %2053 = vmatpush1.msra.mxu0 0.0
    %2054 = vmatprep.subr.mxu0 0.0
    %2055 = vmatpush1.msra.mxu0 0.0
    %2056 = vmatprep.subr.mxu0 0.0
    %2057 = vmatpush1.msra.mxu0 0.0
    %2058 = vmatprep.subr.mxu0 0.0
    %2059 = vmatpush1.msra.mxu0 0.0
    %2060 = vmatprep.subr.mxu0 0.0
    %2061 = vmatpush1.msra.mxu0 0.0
    %2062 = vmatprep.subr.mxu0 0.0
    %2063 = vmatpush1.msra.mxu0 0.0
    %2064 = vmatprep.subr.mxu0 0.0
    %2065 = vmatpush1.msra.mxu0 0.0
    %2066 = vmatprep.subr.mxu0 0.0
    %2067 = vmatpush1.msra.mxu0 0.0
    %2068 = vmatprep.subr.mxu0 0.0
    %2069 = vmatpush1.msra.mxu0 0.0
    %2070 = vmatprep.subr.mxu0 0.0
    %2071 = vmatpush1.msra.mxu0 0.0
    %2072 = vmatprep.subr.mxu0 0.0
    %2073 = vmatpush1.msra.mxu0 0.0
    %2074 = vmatprep.subr.mxu0 0.0
    %2075 = vmatpush1.msra.mxu0 0.0
    %2076 = vmatprep.subr.mxu0 0.0
    %2077 = vmatpush1.msra.mxu0 0.0
    %2078 = vmatprep.subr.mxu0 0.0
    %2079 = vmatpush1.msra.mxu0 0.0
    %2080 = vmatprep.subr.mxu0 0.0
    %2081 = vmatpush1.msra.mxu0 0.0
    %2082 = vmatprep.subr.mxu0 0.0
    %2083 = vmatpush1.msra.mxu0 0.0
    %2084 = vmatprep.subr.mxu0 0.0
    %2085 = vmatpush1.msra.mxu0 0.0
    %2086 = vmatprep.subr.mxu0 0.0
    %2087 = vmatpush1.msra.mxu0 0.0
    %2088 = vmatprep.subr.mxu0 0.0
    %2089 = vmatpush1.msra.mxu0 0.0
    %2090 = vmatprep.subr.mxu0 0.0
    %2091 = vmatpush1.msra.mxu0 0.0
    %2092 = vmatprep.subr.mxu0 0.0
    %2093 = vmatpush1.msra.mxu0 0.0
    %2094 = vmatprep.subr.mxu0 0.0
    %2095 = vmatpush1.msra.mxu0 0.0
    %2096 = vmatprep.subr.mxu0 0.0
    %2097 = vmatpush1.msra.mxu0 0.0
    %2098 = vmatprep.subr.mxu0 0.0
    %2099 = vmatpush1.msra.mxu0 0.0
    %2100 = vmatprep.subr.mxu0 0.0
    %2101 = vmatpush1.msra.mxu0 0.0
    %2102 = vmatprep.mubr.f32.mxu0 0.0
    %2103 = vmatmul.mubr.f32.gmra.mrb[0].mxu0 %v2030
    %v2104 = vpop.f32.mrb[0].mxu0
    %v2105 = vadd.f32 %v2025, %v2104
    %v2106 = vpop.f32.mrb[0].mxu0
    %v2107 = vadd.f32 %v2027, %v2106
    %2108 = vdwg.mxu0
    %2109 = vrot.lane.b32.xlu0 %v1900, 15
    %v2110 = vpop.permute.xlu0 %2109
    %2112 = vrot.lane.b32.xlu0 %v1898, 15
    %v2113 = vpop.permute.xlu0 %2112
    %v2114 = vsel %vm256, %v2113, %v2110
    %v2117 = vsel %vm256, %v2110, %v2113
    %v2118 = vld [vmem:[%s261] sm:$0x3]
    %v2120 = vlaneseq
    %v2121 = vshrl.u32 %v2120, 7
    %v2122 = vsub.s32 0, %v2121
    %v2123 = vrot.slane %v2118, %v2122
    %v2124 = vlaneseq
    %v2125 = vshrl.u32 %v2124, 7
    %v2126 = vsub.s32 1, %v2125
    %v2127 = vrot.slane %v2118, %v2126
    %v2130 = vmul.f32 %v2117, %v2123
    %v2131 = vmul.f32 %v2114, %v2127
    %v2132 = vld [vmem:[%s276] sm:$0xff]
    %v2134 = vsel %vm89, %v2132, 0
    %v2137 = vsel %vm93, %v2130, 0
    %v2140 = vsel %vm93, %v2131, 0
    %2142 = vmatprep.subr.mxu0 %v2140
    %2143 = vmatpush1.msra.mxu0 %v2137
    %2144 = vmatprep.subr.mxu0 0.0
    %2145 = vmatpush1.msra.mxu0 0.0
    %2146 = vmatprep.subr.mxu0 0.0
    %2147 = vmatpush1.msra.mxu0 0.0
    %2148 = vmatprep.subr.mxu0 0.0
    %2149 = vmatpush1.msra.mxu0 0.0
    %2150 = vmatprep.subr.mxu0 0.0
    %2151 = vmatpush1.msra.mxu0 0.0
    %2152 = vmatprep.subr.mxu0 0.0
    %2153 = vmatpush1.msra.mxu0 0.0
    %2154 = vmatprep.subr.mxu0 0.0
    %2155 = vmatpush1.msra.mxu0 0.0
    %2156 = vmatprep.subr.mxu0 0.0
    %2157 = vmatpush1.msra.mxu0 0.0
    %2158 = vmatprep.subr.mxu0 0.0
    %2159 = vmatpush1.msra.mxu0 0.0
    %2160 = vmatprep.subr.mxu0 0.0
    %2161 = vmatpush1.msra.mxu0 0.0
    %2162 = vmatprep.subr.mxu0 0.0
    %2163 = vmatpush1.msra.mxu0 0.0
    %2164 = vmatprep.subr.mxu0 0.0
    %2165 = vmatpush1.msra.mxu0 0.0
    %2166 = vmatprep.subr.mxu0 0.0
    %2167 = vmatpush1.msra.mxu0 0.0
    %2168 = vmatprep.subr.mxu0 0.0
    %2169 = vmatpush1.msra.mxu0 0.0
    %2170 = vmatprep.subr.mxu0 0.0
    %2171 = vmatpush1.msra.mxu0 0.0
    %2172 = vmatprep.subr.mxu0 0.0
    %2173 = vmatpush1.msra.mxu0 0.0
    %2174 = vmatprep.subr.mxu0 0.0
    %2175 = vmatpush1.msra.mxu0 0.0
    %2176 = vmatprep.subr.mxu0 0.0
    %2177 = vmatpush1.msra.mxu0 0.0
    %2178 = vmatprep.subr.mxu0 0.0
    %2179 = vmatpush1.msra.mxu0 0.0
    %2180 = vmatprep.subr.mxu0 0.0
    %2181 = vmatpush1.msra.mxu0 0.0
    %2182 = vmatprep.subr.mxu0 0.0
    %2183 = vmatpush1.msra.mxu0 0.0
    %2184 = vmatprep.subr.mxu0 0.0
    %2185 = vmatpush1.msra.mxu0 0.0
    %2186 = vmatprep.subr.mxu0 0.0
    %2187 = vmatpush1.msra.mxu0 0.0
    %2188 = vmatprep.subr.mxu0 0.0
    %2189 = vmatpush1.msra.mxu0 0.0
    %2190 = vmatprep.subr.mxu0 0.0
    %2191 = vmatpush1.msra.mxu0 0.0
    %2192 = vmatprep.subr.mxu0 0.0
    %2193 = vmatpush1.msra.mxu0 0.0
    %2194 = vmatprep.subr.mxu0 0.0
    %2195 = vmatpush1.msra.mxu0 0.0
    %2196 = vmatprep.subr.mxu0 0.0
    %2197 = vmatpush1.msra.mxu0 0.0
    %2198 = vmatprep.subr.mxu0 0.0
    %2199 = vmatpush1.msra.mxu0 0.0
    %2200 = vmatprep.subr.mxu0 0.0
    %2201 = vmatpush1.msra.mxu0 0.0
    %2202 = vmatprep.subr.mxu0 0.0
    %2203 = vmatpush1.msra.mxu0 0.0
    %2204 = vmatprep.subr.mxu0 0.0
    %2205 = vmatpush1.msra.mxu0 0.0
    %2206 = vmatprep.mubr.f32.mxu0 0.0
    %2207 = vmatmul.mubr.f32.gmra.mrb[0].mxu0 %v2134
    %v2208 = vpop.f32.mrb[0].mxu0
    %v2209 = vadd.f32 0.0, %v2208
    %v2210 = vpop.f32.mrb[0].mxu0
    %v2211 = vadd.f32 0.0, %v2210
    %2212 = vdwg.mxu0
    %v2213 = vadd.f32 %v2105, %v2209
    %v2214 = vadd.f32 %v2107, %v2211
    %2215 = vrot.lane.b32.xlu0 %v1900, 1
    %v2216 = vpop.permute.xlu0 %2215
    %2218 = vrot.lane.b32.xlu0 %v1898, 1
    %v2219 = vpop.permute.xlu0 %2218
    %v2220 = vsel %vm365, %v2219, %v2216
    %v2223 = vsel %vm365, %v2216, %v2219
    %v2224 = vld [vmem:[%s370] sm:$0x3]
    %v2226 = vlaneseq
    %v2227 = vshrl.u32 %v2226, 7
    %v2228 = vsub.s32 0, %v2227
    %v2229 = vrot.slane %v2224, %v2228
    %v2230 = vlaneseq
    %v2231 = vshrl.u32 %v2230, 7
    %v2232 = vsub.s32 1, %v2231
    %v2233 = vrot.slane %v2224, %v2232
    %v2236 = vmul.f32 %v2223, %v2229
    %v2237 = vmul.f32 %v2220, %v2233
    %v2238 = vld [vmem:[%s385] sm:$0xff]
    %v2240 = vsel %vm89, %v2238, 0
    %v2243 = vsel %vm93, %v2236, 0
    %v2246 = vsel %vm93, %v2237, 0
    %2248 = vmatprep.subr.mxu0 %v2246
    %2249 = vmatpush1.msra.mxu0 %v2243
    %2250 = vmatprep.subr.mxu0 0.0
    %2251 = vmatpush1.msra.mxu0 0.0
    %2252 = vmatprep.subr.mxu0 0.0
    %2253 = vmatpush1.msra.mxu0 0.0
    %2254 = vmatprep.subr.mxu0 0.0
    %2255 = vmatpush1.msra.mxu0 0.0
    %2256 = vmatprep.subr.mxu0 0.0
    %2257 = vmatpush1.msra.mxu0 0.0
    %2258 = vmatprep.subr.mxu0 0.0
    %2259 = vmatpush1.msra.mxu0 0.0
    %2260 = vmatprep.subr.mxu0 0.0
    %2261 = vmatpush1.msra.mxu0 0.0
    %2262 = vmatprep.subr.mxu0 0.0
    %2263 = vmatpush1.msra.mxu0 0.0
    %2264 = vmatprep.subr.mxu0 0.0
    %2265 = vmatpush1.msra.mxu0 0.0
    %2266 = vmatprep.subr.mxu0 0.0
    %2267 = vmatpush1.msra.mxu0 0.0
    %2268 = vmatprep.subr.mxu0 0.0
    %2269 = vmatpush1.msra.mxu0 0.0
    %2270 = vmatprep.subr.mxu0 0.0
    %2271 = vmatpush1.msra.mxu0 0.0
    %2272 = vmatprep.subr.mxu0 0.0
    %2273 = vmatpush1.msra.mxu0 0.0
    %2274 = vmatprep.subr.mxu0 0.0
    %2275 = vmatpush1.msra.mxu0 0.0
    %2276 = vmatprep.subr.mxu0 0.0
    %2277 = vmatpush1.msra.mxu0 0.0
    %2278 = vmatprep.subr.mxu0 0.0
    %2279 = vmatpush1.msra.mxu0 0.0
    %2280 = vmatprep.subr.mxu0 0.0
    %2281 = vmatpush1.msra.mxu0 0.0
    %2282 = vmatprep.subr.mxu0 0.0
    %2283 = vmatpush1.msra.mxu0 0.0
    %2284 = vmatprep.subr.mxu0 0.0
    %2285 = vmatpush1.msra.mxu0 0.0
    %2286 = vmatprep.subr.mxu0 0.0
    %2287 = vmatpush1.msra.mxu0 0.0
    %2288 = vmatprep.subr.mxu0 0.0
    %2289 = vmatpush1.msra.mxu0 0.0
    %2290 = vmatprep.subr.mxu0 0.0
    %2291 = vmatpush1.msra.mxu0 0.0
    %2292 = vmatprep.subr.mxu0 0.0
    %2293 = vmatpush1.msra.mxu0 0.0
    %2294 = vmatprep.subr.mxu0 0.0
    %2295 = vmatpush1.msra.mxu0 0.0
    %2296 = vmatprep.subr.mxu0 0.0
    %2297 = vmatpush1.msra.mxu0 0.0
    %2298 = vmatprep.subr.mxu0 0.0
    %2299 = vmatpush1.msra.mxu0 0.0
    %2300 = vmatprep.subr.mxu0 0.0
    %2301 = vmatpush1.msra.mxu0 0.0
    %2302 = vmatprep.subr.mxu0 0.0
    %2303 = vmatpush1.msra.mxu0 0.0
    %2304 = vmatprep.subr.mxu0 0.0
    %2305 = vmatpush1.msra.mxu0 0.0
    %2306 = vmatprep.subr.mxu0 0.0
    %2307 = vmatpush1.msra.mxu0 0.0
    %2308 = vmatprep.subr.mxu0 0.0
    %2309 = vmatpush1.msra.mxu0 0.0
    %2310 = vmatprep.subr.mxu0 0.0
    %2311 = vmatpush1.msra.mxu0 0.0
    %2312 = vmatprep.mubr.f32.mxu0 0.0
    %2313 = vmatmul.mubr.f32.gmra.mrb[0].mxu0 %v2240
    %v2314 = vpop.f32.mrb[0].mxu0
    %v2315 = vadd.f32 0.0, %v2314
    %v2316 = vpop.f32.mrb[0].mxu0
    %v2317 = vadd.f32 0.0, %v2316
    %2318 = vdwg.mxu0
    %v2319 = vadd.f32 %v2213, %v2315
    %v2320 = vadd.f32 %v2214, %v2317
    %v2321 = vld [vmem:[%s469] sm:$0xff]
    %v2323 = vsel %vm89, %v2321, 0
    %v2325 = vsel %vm93, %v1898, 0
    %v2327 = vsel %vm93, %v1900, 0
    %2329 = vmatprep.subr.mxu0 %v2327
    %2330 = vmatpush1.msra.mxu0 %v2325
    %2331 = vmatprep.subr.mxu0 0.0
    %2332 = vmatpush1.msra.mxu0 0.0
    %2333 = vmatprep.subr.mxu0 0.0
    %2334 = vmatpush1.msra.mxu0 0.0
    %2335 = vmatprep.subr.mxu0 0.0
    %2336 = vmatpush1.msra.mxu0 0.0
    %2337 = vmatprep.subr.mxu0 0.0
    %2338 = vmatpush1.msra.mxu0 0.0
    %2339 = vmatprep.subr.mxu0 0.0
    %2340 = vmatpush1.msra.mxu0 0.0
    %2341 = vmatprep.subr.mxu0 0.0
    %2342 = vmatpush1.msra.mxu0 0.0
    %2343 = vmatprep.subr.mxu0 0.0
    %2344 = vmatpush1.msra.mxu0 0.0
    %2345 = vmatprep.subr.mxu0 0.0
    %2346 = vmatpush1.msra.mxu0 0.0
    %2347 = vmatprep.subr.mxu0 0.0
    %2348 = vmatpush1.msra.mxu0 0.0
    %2349 = vmatprep.subr.mxu0 0.0
    %2350 = vmatpush1.msra.mxu0 0.0
    %2351 = vmatprep.subr.mxu0 0.0
    %2352 = vmatpush1.msra.mxu0 0.0
    %2353 = vmatprep.subr.mxu0 0.0
    %2354 = vmatpush1.msra.mxu0 0.0
    %2355 = vmatprep.subr.mxu0 0.0
    %2356 = vmatpush1.msra.mxu0 0.0
    %2357 = vmatprep.subr.mxu0 0.0
    %2358 = vmatpush1.msra.mxu0 0.0
    %2359 = vmatprep.subr.mxu0 0.0
    %2360 = vmatpush1.msra.mxu0 0.0
    %2361 = vmatprep.subr.mxu0 0.0
    %2362 = vmatpush1.msra.mxu0 0.0
    %2363 = vmatprep.subr.mxu0 0.0
    %2364 = vmatpush1.msra.mxu0 0.0
    %2365 = vmatprep.subr.mxu0 0.0
    %2366 = vmatpush1.msra.mxu0 0.0
    %2367 = vmatprep.subr.mxu0 0.0
    %2368 = vmatpush1.msra.mxu0 0.0
    %2369 = vmatprep.subr.mxu0 0.0
    %2370 = vmatpush1.msra.mxu0 0.0
    %2371 = vmatprep.subr.mxu0 0.0
    %2372 = vmatpush1.msra.mxu0 0.0
    %2373 = vmatprep.subr.mxu0 0.0
    %2374 = vmatpush1.msra.mxu0 0.0
    %2375 = vmatprep.subr.mxu0 0.0
    %2376 = vmatpush1.msra.mxu0 0.0
    %2377 = vmatprep.subr.mxu0 0.0
    %2378 = vmatpush1.msra.mxu0 0.0
    %2379 = vmatprep.subr.mxu0 0.0
    %2380 = vmatpush1.msra.mxu0 0.0
    %2381 = vmatprep.subr.mxu0 0.0
    %2382 = vmatpush1.msra.mxu0 0.0
    %2383 = vmatprep.subr.mxu0 0.0
    %2384 = vmatpush1.msra.mxu0 0.0
    %2385 = vmatprep.subr.mxu0 0.0
    %2386 = vmatpush1.msra.mxu0 0.0
    %2387 = vmatprep.subr.mxu0 0.0
    %2388 = vmatpush1.msra.mxu0 0.0
    %2389 = vmatprep.subr.mxu0 0.0
    %2390 = vmatpush1.msra.mxu0 0.0
    %2391 = vmatprep.subr.mxu0 0.0
    %2392 = vmatpush1.msra.mxu0 0.0
    %2393 = vmatprep.mubr.f32.mxu0 0.0
    %2394 = vmatmul.mubr.f32.gmra.mrb[0].mxu0 %v2323
    %v2395 = vpop.f32.mrb[0].mxu0
    %v2396 = vadd.f32 0.0, %v2395
    %v2397 = vpop.f32.mrb[0].mxu0
    %v2398 = vadd.f32 0.0, %v2397
    %2399 = vdwg.mxu0
    %v2400 = vadd.f32 %v2319, %v2396
    %v2401 = vadd.f32 %v2320, %v2398
    %2402 = vrot.lane.b32.xlu0 %v1898, 127
    %v2403 = vpop.permute.xlu0 %2402
    %2404 = vrot.lane.b32.xlu0 %v1900, 127
    %v2405 = vpop.permute.xlu0 %2404
    %v2406 = vsel %vm555, %v2403, %v2405
    %v2410 = vsel %vm555, %v2405, %v2403
    %v2411 = vld [vmem:[%s561] sm:$0x3]
    %v2413 = vlaneseq
    %v2414 = vshrl.u32 %v2413, 7
    %v2415 = vsub.s32 0, %v2414
    %v2416 = vrot.slane %v2411, %v2415
    %v2417 = vlaneseq
    %v2418 = vshrl.u32 %v2417, 7
    %v2419 = vsub.s32 1, %v2418
    %v2420 = vrot.slane %v2411, %v2419
    %v2423 = vmul.f32 %v2406, %v2416
    %v2424 = vmul.f32 %v2410, %v2420
    %v2425 = vld [vmem:[%s576] sm:$0xff]
    %v2427 = vsel %vm89, %v2425, 0
    %v2430 = vsel %vm93, %v2423, 0
    %v2433 = vsel %vm93, %v2424, 0
    %2435 = vmatprep.subr.mxu0 %v2433
    %2436 = vmatpush1.msra.mxu0 %v2430
    %2437 = vmatprep.subr.mxu0 0.0
    %2438 = vmatpush1.msra.mxu0 0.0
    %2439 = vmatprep.subr.mxu0 0.0
    %2440 = vmatpush1.msra.mxu0 0.0
    %2441 = vmatprep.subr.mxu0 0.0
    %2442 = vmatpush1.msra.mxu0 0.0
    %2443 = vmatprep.subr.mxu0 0.0
    %2444 = vmatpush1.msra.mxu0 0.0
    %2445 = vmatprep.subr.mxu0 0.0
    %2446 = vmatpush1.msra.mxu0 0.0
    %2447 = vmatprep.subr.mxu0 0.0
    %2448 = vmatpush1.msra.mxu0 0.0
    %2449 = vmatprep.subr.mxu0 0.0
    %2450 = vmatpush1.msra.mxu0 0.0
    %2451 = vmatprep.subr.mxu0 0.0
    %2452 = vmatpush1.msra.mxu0 0.0
    %2453 = vmatprep.subr.mxu0 0.0
    %2454 = vmatpush1.msra.mxu0 0.0
    %2455 = vmatprep.subr.mxu0 0.0
    %2456 = vmatpush1.msra.mxu0 0.0
    %2457 = vmatprep.subr.mxu0 0.0
    %2458 = vmatpush1.msra.mxu0 0.0
    %2459 = vmatprep.subr.mxu0 0.0
    %2460 = vmatpush1.msra.mxu0 0.0
    %2461 = vmatprep.subr.mxu0 0.0
    %2462 = vmatpush1.msra.mxu0 0.0
    %2463 = vmatprep.subr.mxu0 0.0
    %2464 = vmatpush1.msra.mxu0 0.0
    %2465 = vmatprep.subr.mxu0 0.0
    %2466 = vmatpush1.msra.mxu0 0.0
    %2467 = vmatprep.subr.mxu0 0.0
    %2468 = vmatpush1.msra.mxu0 0.0
    %2469 = vmatprep.subr.mxu0 0.0
    %2470 = vmatpush1.msra.mxu0 0.0
    %2471 = vmatprep.subr.mxu0 0.0
    %2472 = vmatpush1.msra.mxu0 0.0
    %2473 = vmatprep.subr.mxu0 0.0
    %2474 = vmatpush1.msra.mxu0 0.0
    %2475 = vmatprep.subr.mxu0 0.0
    %2476 = vmatpush1.msra.mxu0 0.0
    %2477 = vmatprep.subr.mxu0 0.0
    %2478 = vmatpush1.msra.mxu0 0.0
    %2479 = vmatprep.subr.mxu0 0.0
    %2480 = vmatpush1.msra.mxu0 0.0
    %2481 = vmatprep.subr.mxu0 0.0
    %2482 = vmatpush1.msra.mxu0 0.0
    %2483 = vmatprep.subr.mxu0 0.0
    %2484 = vmatpush1.msra.mxu0 0.0
    %2485 = vmatprep.subr.mxu0 0.0
    %2486 = vmatpush1.msra.mxu0 0.0
    %2487 = vmatprep.subr.mxu0 0.0
    %2488 = vmatpush1.msra.mxu0 0.0
    %2489 = vmatprep.subr.mxu0 0.0
    %2490 = vmatpush1.msra.mxu0 0.0
    %2491 = vmatprep.subr.mxu0 0.0
    %2492 = vmatpush1.msra.mxu0 0.0
    %2493 = vmatprep.subr.mxu0 0.0
    %2494 = vmatpush1.msra.mxu0 0.0
    %2495 = vmatprep.subr.mxu0 0.0
    %2496 = vmatpush1.msra.mxu0 0.0
    %2497 = vmatprep.subr.mxu0 0.0
    %2498 = vmatpush1.msra.mxu0 0.0
    %2499 = vmatprep.mubr.f32.mxu0 0.0
    %2500 = vmatmul.mubr.f32.gmra.mrb[0].mxu0 %v2427
    %v2501 = vpop.f32.mrb[0].mxu0
    %v2502 = vadd.f32 0.0, %v2501
    %v2503 = vpop.f32.mrb[0].mxu0
    %v2504 = vadd.f32 0.0, %v2503
    %2505 = vdwg.mxu0
    %v2506 = vadd.f32 %v2400, %v2502
    %v2507 = vadd.f32 %v2401, %v2504
    %2508 = vrot.lane.b32.xlu0 %v1898, 113
    %v2509 = vpop.permute.xlu0 %2508
    %2510 = vrot.lane.b32.xlu0 %v1900, 113
    %v2511 = vpop.permute.xlu0 %2510
    %v2512 = vsel %vm664, %v2509, %v2511
    %v2516 = vsel %vm664, %v2511, %v2509
    %v2517 = vld [vmem:[%s670] sm:$0x3]
    %v2519 = vlaneseq
    %v2520 = vshrl.u32 %v2519, 7
    %v2521 = vsub.s32 0, %v2520
    %v2522 = vrot.slane %v2517, %v2521
    %v2523 = vlaneseq
    %v2524 = vshrl.u32 %v2523, 7
    %v2525 = vsub.s32 1, %v2524
    %v2526 = vrot.slane %v2517, %v2525
    %v2529 = vmul.f32 %v2512, %v2522
    %v2530 = vmul.f32 %v2516, %v2526
    %v2531 = vld [vmem:[%s685] sm:$0xff]
    %v2533 = vsel %vm89, %v2531, 0
    %v2536 = vsel %vm93, %v2529, 0
    %v2539 = vsel %vm93, %v2530, 0
    %2541 = vmatprep.subr.mxu0 %v2539
    %2542 = vmatpush1.msra.mxu0 %v2536
    %2543 = vmatprep.subr.mxu0 0.0
    %2544 = vmatpush1.msra.mxu0 0.0
    %2545 = vmatprep.subr.mxu0 0.0
    %2546 = vmatpush1.msra.mxu0 0.0
    %2547 = vmatprep.subr.mxu0 0.0
    %2548 = vmatpush1.msra.mxu0 0.0
    %2549 = vmatprep.subr.mxu0 0.0
    %2550 = vmatpush1.msra.mxu0 0.0
    %2551 = vmatprep.subr.mxu0 0.0
    %2552 = vmatpush1.msra.mxu0 0.0
    %2553 = vmatprep.subr.mxu0 0.0
    %2554 = vmatpush1.msra.mxu0 0.0
    %2555 = vmatprep.subr.mxu0 0.0
    %2556 = vmatpush1.msra.mxu0 0.0
    %2557 = vmatprep.subr.mxu0 0.0
    %2558 = vmatpush1.msra.mxu0 0.0
    %2559 = vmatprep.subr.mxu0 0.0
    %2560 = vmatpush1.msra.mxu0 0.0
    %2561 = vmatprep.subr.mxu0 0.0
    %2562 = vmatpush1.msra.mxu0 0.0
    %2563 = vmatprep.subr.mxu0 0.0
    %2564 = vmatpush1.msra.mxu0 0.0
    %2565 = vmatprep.subr.mxu0 0.0
    %2566 = vmatpush1.msra.mxu0 0.0
    %2567 = vmatprep.subr.mxu0 0.0
    %2568 = vmatpush1.msra.mxu0 0.0
    %2569 = vmatprep.subr.mxu0 0.0
    %2570 = vmatpush1.msra.mxu0 0.0
    %2571 = vmatprep.subr.mxu0 0.0
    %2572 = vmatpush1.msra.mxu0 0.0
    %2573 = vmatprep.subr.mxu0 0.0
    %2574 = vmatpush1.msra.mxu0 0.0
    %2575 = vmatprep.subr.mxu0 0.0
    %2576 = vmatpush1.msra.mxu0 0.0
    %2577 = vmatprep.subr.mxu0 0.0
    %2578 = vmatpush1.msra.mxu0 0.0
    %2579 = vmatprep.subr.mxu0 0.0
    %2580 = vmatpush1.msra.mxu0 0.0
    %2581 = vmatprep.subr.mxu0 0.0
    %2582 = vmatpush1.msra.mxu0 0.0
    %2583 = vmatprep.subr.mxu0 0.0
    %2584 = vmatpush1.msra.mxu0 0.0
    %2585 = vmatprep.subr.mxu0 0.0
    %2586 = vmatpush1.msra.mxu0 0.0
    %2587 = vmatprep.subr.mxu0 0.0
    %2588 = vmatpush1.msra.mxu0 0.0
    %2589 = vmatprep.subr.mxu0 0.0
    %2590 = vmatpush1.msra.mxu0 0.0
    %2591 = vmatprep.subr.mxu0 0.0
    %2592 = vmatpush1.msra.mxu0 0.0
    %2593 = vmatprep.subr.mxu0 0.0
    %2594 = vmatpush1.msra.mxu0 0.0
    %2595 = vmatprep.subr.mxu0 0.0
    %2596 = vmatpush1.msra.mxu0 0.0
    %2597 = vmatprep.subr.mxu0 0.0
    %2598 = vmatpush1.msra.mxu0 0.0
    %2599 = vmatprep.subr.mxu0 0.0
    %2600 = vmatpush1.msra.mxu0 0.0
    %2601 = vmatprep.subr.mxu0 0.0
    %2602 = vmatpush1.msra.mxu0 0.0
    %2603 = vmatprep.subr.mxu0 0.0
    %2604 = vmatpush1.msra.mxu0 0.0
    %2605 = vmatprep.mubr.f32.mxu0 0.0
    %2606 = vmatmul.mubr.f32.gmra.mrb[0].mxu0 %v2533
    %v2607 = vpop.f32.mrb[0].mxu0
    %v2608 = vadd.f32 0.0, %v2607
    %v2609 = vpop.f32.mrb[0].mxu0
    %v2610 = vadd.f32 0.0, %v2609
    %2611 = vdwg.mxu0
    %v2612 = vadd.f32 %v2506, %v2608
    %v2613 = vadd.f32 %v2507, %v2610
    %2614 = vrot.lane.b32.xlu0 %v1898, 112
    %v2615 = vpop.permute.xlu0 %2614
    %2616 = vrot.lane.b32.xlu0 %v1900, 112
    %v2617 = vpop.permute.xlu0 %2616
    %v2618 = vsel %vm773, %v2615, %v2617
    %v2622 = vsel %vm773, %v2617, %v2615
    %v2623 = vld [vmem:[%s779] sm:$0x3]
    %v2625 = vlaneseq
    %v2626 = vshrl.u32 %v2625, 7
    %v2627 = vsub.s32 0, %v2626
    %v2628 = vrot.slane %v2623, %v2627
    %v2629 = vlaneseq
    %v2630 = vshrl.u32 %v2629, 7
    %v2631 = vsub.s32 1, %v2630
    %v2632 = vrot.slane %v2623, %v2631
    %v2635 = vmul.f32 %v2618, %v2628
    %v2636 = vmul.f32 %v2622, %v2632
    %v2637 = vld [vmem:[%s794] sm:$0xff]
    %v2639 = vsel %vm89, %v2637, 0
    %v2642 = vsel %vm93, %v2635, 0
    %v2645 = vsel %vm93, %v2636, 0
    %2647 = vmatprep.subr.mxu0 %v2645
    %2648 = vmatpush1.msra.mxu0 %v2642
    %2649 = vmatprep.subr.mxu0 0.0
    %2650 = vmatpush1.msra.mxu0 0.0
    %2651 = vmatprep.subr.mxu0 0.0
    %2652 = vmatpush1.msra.mxu0 0.0
    %2653 = vmatprep.subr.mxu0 0.0
    %2654 = vmatpush1.msra.mxu0 0.0
    %2655 = vmatprep.subr.mxu0 0.0
    %2656 = vmatpush1.msra.mxu0 0.0
    %2657 = vmatprep.subr.mxu0 0.0
    %2658 = vmatpush1.msra.mxu0 0.0
    %2659 = vmatprep.subr.mxu0 0.0
    %2660 = vmatpush1.msra.mxu0 0.0
    %2661 = vmatprep.subr.mxu0 0.0
    %2662 = vmatpush1.msra.mxu0 0.0
    %2663 = vmatprep.subr.mxu0 0.0
    %2664 = vmatpush1.msra.mxu0 0.0
    %2665 = vmatprep.subr.mxu0 0.0
    %2666 = vmatpush1.msra.mxu0 0.0
    %2667 = vmatprep.subr.mxu0 0.0
    %2668 = vmatpush1.msra.mxu0 0.0
    %2669 = vmatprep.subr.mxu0 0.0
    %2670 = vmatpush1.msra.mxu0 0.0
    %2671 = vmatprep.subr.mxu0 0.0
    %2672 = vmatpush1.msra.mxu0 0.0
    %2673 = vmatprep.subr.mxu0 0.0
    %2674 = vmatpush1.msra.mxu0 0.0
    %2675 = vmatprep.subr.mxu0 0.0
    %2676 = vmatpush1.msra.mxu0 0.0
    %2677 = vmatprep.subr.mxu0 0.0
    %2678 = vmatpush1.msra.mxu0 0.0
    %2679 = vmatprep.subr.mxu0 0.0
    %2680 = vmatpush1.msra.mxu0 0.0
    %2681 = vmatprep.subr.mxu0 0.0
    %2682 = vmatpush1.msra.mxu0 0.0
    %2683 = vmatprep.subr.mxu0 0.0
    %2684 = vmatpush1.msra.mxu0 0.0
    %2685 = vmatprep.subr.mxu0 0.0
    %2686 = vmatpush1.msra.mxu0 0.0
    %2687 = vmatprep.subr.mxu0 0.0
    %2688 = vmatpush1.msra.mxu0 0.0
    %2689 = vmatprep.subr.mxu0 0.0
    %2690 = vmatpush1.msra.mxu0 0.0
    %2691 = vmatprep.subr.mxu0 0.0
    %2692 = vmatpush1.msra.mxu0 0.0
    %2693 = vmatprep.subr.mxu0 0.0
    %2694 = vmatpush1.msra.mxu0 0.0
    %2695 = vmatprep.subr.mxu0 0.0
    %2696 = vmatpush1.msra.mxu0 0.0
    %2697 = vmatprep.subr.mxu0 0.0
    %2698 = vmatpush1.msra.mxu0 0.0
    %2699 = vmatprep.subr.mxu0 0.0
    %2700 = vmatpush1.msra.mxu0 0.0
    %2701 = vmatprep.subr.mxu0 0.0
    %2702 = vmatpush1.msra.mxu0 0.0
    %2703 = vmatprep.subr.mxu0 0.0
    %2704 = vmatpush1.msra.mxu0 0.0
    %2705 = vmatprep.subr.mxu0 0.0
    %2706 = vmatpush1.msra.mxu0 0.0
    %2707 = vmatprep.subr.mxu0 0.0
    %2708 = vmatpush1.msra.mxu0 0.0
    %2709 = vmatprep.subr.mxu0 0.0
    %2710 = vmatpush1.msra.mxu0 0.0
    %2711 = vmatprep.mubr.f32.mxu0 0.0
    %2712 = vmatmul.mubr.f32.gmra.mrb[0].mxu0 %v2639
    %v2713 = vpop.f32.mrb[0].mxu0
    %v2714 = vadd.f32 0.0, %v2713
    %v2715 = vpop.f32.mrb[0].mxu0
    %v2716 = vadd.f32 0.0, %v2715
    %2717 = vdwg.mxu0
    %v2718 = vadd.f32 %v2612, %v2714
    %v2719 = vadd.f32 %v2613, %v2716
    %2720 = vrot.lane.b32.xlu0 %v1898, 111
    %v2721 = vpop.permute.xlu0 %2720
    %2722 = vrot.lane.b32.xlu0 %v1900, 111
    %v2723 = vpop.permute.xlu0 %2722
    %v2724 = vsel %vm882, %v2721, %v2723
    %v2728 = vsel %vm882, %v2723, %v2721
    %v2729 = vld [vmem:[%s888] sm:$0x3]
    %v2731 = vlaneseq
    %v2732 = vshrl.u32 %v2731, 7
    %v2733 = vsub.s32 0, %v2732
    %v2734 = vrot.slane %v2729, %v2733
    %v2735 = vlaneseq
    %v2736 = vshrl.u32 %v2735, 7
    %v2737 = vsub.s32 1, %v2736
    %v2738 = vrot.slane %v2729, %v2737
    %v2741 = vmul.f32 %v2724, %v2734
    %v2742 = vmul.f32 %v2728, %v2738
    %v2743 = vld [vmem:[%s903] sm:$0xff]
    %v2745 = vsel %vm89, %v2743, 0
    %v2748 = vsel %vm93, %v2741, 0
    %v2751 = vsel %vm93, %v2742, 0
    %2753 = vmatprep.subr.mxu0 %v2751
    %2754 = vmatpush1.msra.mxu0 %v2748
    %2755 = vmatprep.subr.mxu0 0.0
    %2756 = vmatpush1.msra.mxu0 0.0
    %2757 = vmatprep.subr.mxu0 0.0
    %2758 = vmatpush1.msra.mxu0 0.0
    %2759 = vmatprep.subr.mxu0 0.0
    %2760 = vmatpush1.msra.mxu0 0.0
    %2761 = vmatprep.subr.mxu0 0.0
    %2762 = vmatpush1.msra.mxu0 0.0
    %2763 = vmatprep.subr.mxu0 0.0
    %2764 = vmatpush1.msra.mxu0 0.0
    %2765 = vmatprep.subr.mxu0 0.0
    %2766 = vmatpush1.msra.mxu0 0.0
    %2767 = vmatprep.subr.mxu0 0.0
    %2768 = vmatpush1.msra.mxu0 0.0
    %2769 = vmatprep.subr.mxu0 0.0
    %2770 = vmatpush1.msra.mxu0 0.0
    %2771 = vmatprep.subr.mxu0 0.0
    %2772 = vmatpush1.msra.mxu0 0.0
    %2773 = vmatprep.subr.mxu0 0.0
    %2774 = vmatpush1.msra.mxu0 0.0
    %2775 = vmatprep.subr.mxu0 0.0
    %2776 = vmatpush1.msra.mxu0 0.0
    %2777 = vmatprep.subr.mxu0 0.0
    %2778 = vmatpush1.msra.mxu0 0.0
    %2779 = vmatprep.subr.mxu0 0.0
    %2780 = vmatpush1.msra.mxu0 0.0
    %2781 = vmatprep.subr.mxu0 0.0
    %2782 = vmatpush1.msra.mxu0 0.0
    %2783 = vmatprep.subr.mxu0 0.0
    %2784 = vmatpush1.msra.mxu0 0.0
    %2785 = vmatprep.subr.mxu0 0.0
    %2786 = vmatpush1.msra.mxu0 0.0
    %2787 = vmatprep.subr.mxu0 0.0
    %2788 = vmatpush1.msra.mxu0 0.0
    %2789 = vmatprep.subr.mxu0 0.0
    %2790 = vmatpush1.msra.mxu0 0.0
    %2791 = vmatprep.subr.mxu0 0.0
    %2792 = vmatpush1.msra.mxu0 0.0
    %2793 = vmatprep.subr.mxu0 0.0
    %2794 = vmatpush1.msra.mxu0 0.0
    %2795 = vmatprep.subr.mxu0 0.0
    %2796 = vmatpush1.msra.mxu0 0.0
    %2797 = vmatprep.subr.mxu0 0.0
    %2798 = vmatpush1.msra.mxu0 0.0
    %2799 = vmatprep.subr.mxu0 0.0
    %2800 = vmatpush1.msra.mxu0 0.0
    %2801 = vmatprep.subr.mxu0 0.0
    %2802 = vmatpush1.msra.mxu0 0.0
    %2803 = vmatprep.subr.mxu0 0.0
    %2804 = vmatpush1.msra.mxu0 0.0
    %2805 = vmatprep.subr.mxu0 0.0
    %2806 = vmatpush1.msra.mxu0 0.0
    %2807 = vmatprep.subr.mxu0 0.0
    %2808 = vmatpush1.msra.mxu0 0.0
    %2809 = vmatprep.subr.mxu0 0.0
    %2810 = vmatpush1.msra.mxu0 0.0
    %2811 = vmatprep.subr.mxu0 0.0
    %2812 = vmatpush1.msra.mxu0 0.0
    %2813 = vmatprep.subr.mxu0 0.0
    %2814 = vmatpush1.msra.mxu0 0.0
    %2815 = vmatprep.subr.mxu0 0.0
    %2816 = vmatpush1.msra.mxu0 0.0
    %2817 = vmatprep.mubr.f32.mxu0 0.0
    %2818 = vmatmul.mubr.f32.gmra.mrb[0].mxu0 %v2745
    %v2819 = vpop.f32.mrb[0].mxu0
    %v2820 = vadd.f32 0.0, %v2819
    %v2821 = vpop.f32.mrb[0].mxu0
    %v2822 = vadd.f32 0.0, %v2821
    %2823 = vdwg.mxu0
    %v2824 = vadd.f32 %v2718, %v2820
    %v2825 = vadd.f32 %v2719, %v2822
    %v2826 = vadd.f32 %v2824, %v2825
    %2827 = vadd.xlane.f32.xlu0 %v2826
    %v2828 = vpop.xlane.xlu0 %2827
    %v2829 = vrot.slane %v2828, 4
    %v2830 = vadd.f32 %v2828, %v2829
    %v2831 = vrot.slane %v2830, 2
    %v2832 = vadd.f32 %v2830, %v2831
    %v2833 = vrot.slane %v2832, 1
    %v2834 = vadd.f32 %v2832, %v2833
    %s2835 = vtos %v2834
    %v2836 = vrcp.pop 2048.0
    %s2837 = vtos %v2836
    %s2838 = smul.f32 %s2835, %s2837
    %v2839 = vmul.f32 %v2824, %v2824
    %v2840 = vmul.f32 %v2825, %v2825
    %v2841 = vadd.f32 %v2839, %v2840
    %2842 = vadd.xlane.f32.xlu0 %v2841
    %v2843 = vpop.xlane.xlu0 %2842
    %v2844 = vrot.slane %v2843, 4
    %v2845 = vadd.f32 %v2843, %v2844
    %v2846 = vrot.slane %v2845, 2
    %v2847 = vadd.f32 %v2845, %v2846
    %v2848 = vrot.slane %v2847, 1
    %v2849 = vadd.f32 %v2847, %v2848
    %s2850 = vtos %v2849
    %v2851 = vrcp.pop 2048.0
    %s2852 = vtos %v2851
    %s2853 = smul.f32 %s2850, %s2852
    %s2854 = smul.f32 %s2838, %s2838
    %s2855 = ssub.f32 %s2853, %s2854
    %s2856 = smax.f32 %s2855, 0.0
    %v2857 = vstv %s2838
    %v2858 = vsub.f32 %v2824, %v2857
    %v2859 = vsub.f32 %v2825, %v2857
    %s2860 = sadd.f32 %s2856, 1e-05
    %v2861 = vstv %s2860
    %v2862 = vrsqrt.pop %v2861
    %s2863 = vtos %v2862
    %v2864 = vstv %s2863
    %v2865 = vmul.f32 %v2858, %v2864
    %v2866 = vmul.f32 %v2859, %v2864
    %v2867 = vmul.f32 %v2865, %v1031
    %v2868 = vmul.f32 %v2866, %v1031
    %v2869 = vadd.f32 %v2867, %v1038
    %v2870 = vadd.f32 %v2868, %v1038
    %v2871 = vmul.f32 %v2869, 0.5
    %v2872 = vmul.f32 %v2870, 0.5
    %v2873 = vmul.f32 %v2869, 0.70710677
    %v2874 = vmul.f32 %v2870, 0.70710677
    %v2875 = verf.f32.pop %v2873
    %v2876 = verf.f32.pop %v2874
    %v2877 = vadd.f32 %v2875, 1.0
    %v2878 = vadd.f32 %v2876, 1.0
    %v2879 = vmul.f32 %v2871, %v2877
    %v2880 = vmul.f32 %v2872, %v2878
    %2882 = vrot.lane.b32.xlu0 %v2880, 17
    %v2883 = vpop.permute.xlu0 %2882
    %2886 = vrot.lane.b32.xlu0 %v2879, 17
    %v2887 = vpop.permute.xlu0 %2886
    %v2888 = vsel %vm42, %v2887, %v2883
    %v2891 = vsel %vm42, %v2883, %v2887
    %v2892 = vmul.f32 %v2891, %v1915
    %v2893 = vmul.f32 %v2888, %v1919
    %v2894 = vld [vmem:[%s5] sm:$0xff]
    %2895 = vrot.lane.b32.xlu0 %v2880, 16
    %v2896 = vpop.permute.xlu0 %2895
    %2898 = vrot.lane.b32.xlu0 %v2879, 16
    %v2899 = vpop.permute.xlu0 %2898
    %v2900 = vsel %vm67, %v2899, %v2896
    %v2903 = vsel %vm67, %v2896, %v2899
    %v2904 = vmul.f32 %v2903, %v1939
    %v2905 = vmul.f32 %v2900, %v1943
    %v2906 = vld [vmem:[%s1077] sm:$0xff]
    %v2908 = vsel %vm1079, %v2906, 0
    %2910 = vmatprep.subr.mxu0 %v2905
    %2911 = vmatpush1.msra.mxu0 %v2904
    %2912 = vmatprep.subr.mxu0 0.0
    %2913 = vmatpush1.msra.mxu0 0.0
    %2914 = vmatprep.subr.mxu0 0.0
    %2915 = vmatpush1.msra.mxu0 0.0
    %2916 = vmatprep.subr.mxu0 0.0
    %2917 = vmatpush1.msra.mxu0 0.0
    %2918 = vmatprep.subr.mxu0 0.0
    %2919 = vmatpush1.msra.mxu0 0.0
    %2920 = vmatprep.subr.mxu0 0.0
    %2921 = vmatpush1.msra.mxu0 0.0
    %2922 = vmatprep.subr.mxu0 0.0
    %2923 = vmatpush1.msra.mxu0 0.0
    %2924 = vmatprep.subr.mxu0 0.0
    %2925 = vmatpush1.msra.mxu0 0.0
    %2926 = vmatprep.subr.mxu0 0.0
    %2927 = vmatpush1.msra.mxu0 0.0
    %2928 = vmatprep.subr.mxu0 0.0
    %2929 = vmatpush1.msra.mxu0 0.0
    %2930 = vmatprep.subr.mxu0 0.0
    %2931 = vmatpush1.msra.mxu0 0.0
    %2932 = vmatprep.subr.mxu0 0.0
    %2933 = vmatpush1.msra.mxu0 0.0
    %2934 = vmatprep.subr.mxu0 0.0
    %2935 = vmatpush1.msra.mxu0 0.0
    %2936 = vmatprep.subr.mxu0 0.0
    %2937 = vmatpush1.msra.mxu0 0.0
    %2938 = vmatprep.subr.mxu0 0.0
    %2939 = vmatpush1.msra.mxu0 0.0
    %2940 = vmatprep.subr.mxu0 0.0
    %2941 = vmatpush1.msra.mxu0 0.0
    %2942 = vmatprep.subr.mxu0 0.0
    %2943 = vmatpush1.msra.mxu0 0.0
    %2944 = vmatprep.subr.mxu0 0.0
    %2945 = vmatpush1.msra.mxu0 0.0
    %2946 = vmatprep.subr.mxu0 0.0
    %2947 = vmatpush1.msra.mxu0 0.0
    %2948 = vmatprep.subr.mxu0 0.0
    %2949 = vmatpush1.msra.mxu0 0.0
    %2950 = vmatprep.subr.mxu0 0.0
    %2951 = vmatpush1.msra.mxu0 0.0
    %2952 = vmatprep.subr.mxu0 0.0
    %2953 = vmatpush1.msra.mxu0 0.0
    %2954 = vmatprep.subr.mxu0 0.0
    %2955 = vmatpush1.msra.mxu0 0.0
    %2956 = vmatprep.subr.mxu0 0.0
    %2957 = vmatpush1.msra.mxu0 0.0
    %2958 = vmatprep.subr.mxu0 0.0
    %2959 = vmatpush1.msra.mxu0 0.0
    %2960 = vmatprep.subr.mxu0 0.0
    %2961 = vmatpush1.msra.mxu0 0.0
    %2962 = vmatprep.subr.mxu0 0.0
    %2963 = vmatpush1.msra.mxu0 0.0
    %2964 = vmatprep.subr.mxu0 0.0
    %2965 = vmatpush1.msra.mxu0 0.0
    %2966 = vmatprep.subr.mxu0 0.0
    %2967 = vmatpush1.msra.mxu0 0.0
    %2968 = vmatprep.subr.mxu0 0.0
    %2969 = vmatpush1.msra.mxu0 0.0
    %2970 = vmatprep.subr.mxu0 0.0
    %2971 = vmatpush1.msra.mxu0 0.0
    %2972 = vmatprep.subr.mxu0 0.0
    %2973 = vmatpush1.msra.mxu0 0.0
    %2974 = vmatprep.mubr.f32.mxu0 0.0
    %2975 = vmatmul.mubr.f32.gmra.mrb[0].mxu0 %v2908
    %v2976 = vpop.f32.mrb[0].mxu0
    %v2977 = vadd.f32 0.0, %v2976
    %v2978 = vpop.f32.mrb[0].mxu0
    %v2979 = vadd.f32 0.0, %v2978
    %2980 = vdwg.mxu0
    %v2982 = vsel %vm1079, %v2894, 0
    %2984 = vmatprep.subr.mxu0 %v2893
    %2985 = vmatpush1.msra.mxu0 %v2892
    %2986 = vmatprep.subr.mxu0 0.0
    %2987 = vmatpush1.msra.mxu0 0.0
    %2988 = vmatprep.subr.mxu0 0.0
    %2989 = vmatpush1.msra.mxu0 0.0
    %2990 = vmatprep.subr.mxu0 0.0
    %2991 = vmatpush1.msra.mxu0 0.0
    %2992 = vmatprep.subr.mxu0 0.0
    %2993 = vmatpush1.msra.mxu0 0.0
    %2994 = vmatprep.subr.mxu0 0.0
    %2995 = vmatpush1.msra.mxu0 0.0
    %2996 = vmatprep.subr.mxu0 0.0
    %2997 = vmatpush1.msra.mxu0 0.0
    %2998 = vmatprep.subr.mxu0 0.0
    %2999 = vmatpush1.msra.mxu0 0.0
    %3000 = vmatprep.subr.mxu0 0.0
    %3001 = vmatpush1.msra.mxu0 0.0
    %3002 = vmatprep.subr.mxu0 0.0
    %3003 = vmatpush1.msra.mxu0 0.0
    %3004 = vmatprep.subr.mxu0 0.0
    %3005 = vmatpush1.msra.mxu0 0.0
    %3006 = vmatprep.subr.mxu0 0.0
    %3007 = vmatpush1.msra.mxu0 0.0
    %3008 = vmatprep.subr.mxu0 0.0
    %3009 = vmatpush1.msra.mxu0 0.0
    %3010 = vmatprep.subr.mxu0 0.0
    %3011 = vmatpush1.msra.mxu0 0.0
    %3012 = vmatprep.subr.mxu0 0.0
    %3013 = vmatpush1.msra.mxu0 0.0
    %3014 = vmatprep.subr.mxu0 0.0
    %3015 = vmatpush1.msra.mxu0 0.0
    %3016 = vmatprep.subr.mxu0 0.0
    %3017 = vmatpush1.msra.mxu0 0.0
    %3018 = vmatprep.subr.mxu0 0.0
    %3019 = vmatpush1.msra.mxu0 0.0
    %3020 = vmatprep.subr.mxu0 0.0
    %3021 = vmatpush1.msra.mxu0 0.0
    %3022 = vmatprep.subr.mxu0 0.0
    %3023 = vmatpush1.msra.mxu0 0.0
    %3024 = vmatprep.subr.mxu0 0.0
    %3025 = vmatpush1.msra.mxu0 0.0
    %3026 = vmatprep.subr.mxu0 0.0
    %3027 = vmatpush1.msra.mxu0 0.0
    %3028 = vmatprep.subr.mxu0 0.0
    %3029 = vmatpush1.msra.mxu0 0.0
    %3030 = vmatprep.subr.mxu0 0.0
    %3031 = vmatpush1.msra.mxu0 0.0
    %3032 = vmatprep.subr.mxu0 0.0
    %3033 = vmatpush1.msra.mxu0 0.0
    %3034 = vmatprep.subr.mxu0 0.0
    %3035 = vmatpush1.msra.mxu0 0.0
    %3036 = vmatprep.subr.mxu0 0.0
    %3037 = vmatpush1.msra.mxu0 0.0
    %3038 = vmatprep.subr.mxu0 0.0
    %3039 = vmatpush1.msra.mxu0 0.0
    %3040 = vmatprep.subr.mxu0 0.0
    %3041 = vmatpush1.msra.mxu0 0.0
    %3042 = vmatprep.subr.mxu0 0.0
    %3043 = vmatpush1.msra.mxu0 0.0
    %3044 = vmatprep.subr.mxu0 0.0
    %3045 = vmatpush1.msra.mxu0 0.0
    %3046 = vmatprep.subr.mxu0 0.0
    %3047 = vmatpush1.msra.mxu0 0.0
    %3048 = vmatprep.mubr.f32.mxu0 0.0
    %3049 = vmatmul.mubr.f32.gmra.mrb[0].mxu0 %v2982
    %v3050 = vpop.f32.mrb[0].mxu0
    %v3051 = vadd.f32 %v2977, %v3050
    %v3052 = vpop.f32.mrb[0].mxu0
    %v3053 = vadd.f32 %v2979, %v3052
    %3054 = vdwg.mxu0
    %3055 = vrot.lane.b32.xlu0 %v2880, 15
    %v3056 = vpop.permute.xlu0 %3055
    %3058 = vrot.lane.b32.xlu0 %v2879, 15
    %v3059 = vpop.permute.xlu0 %3058
    %v3060 = vsel %vm256, %v3059, %v3056
    %v3063 = vsel %vm256, %v3056, %v3059
    %v3064 = vmul.f32 %v3063, %v2123
    %v3065 = vmul.f32 %v3060, %v2127
    %v3066 = vld [vmem:[%s1239] sm:$0xff]
    %v3068 = vsel %vm1079, %v3066, 0
    %3070 = vmatprep.subr.mxu0 %v3065
    %3071 = vmatpush1.msra.mxu0 %v3064
    %3072 = vmatprep.subr.mxu0 0.0
    %3073 = vmatpush1.msra.mxu0 0.0
    %3074 = vmatprep.subr.mxu0 0.0
    %3075 = vmatpush1.msra.mxu0 0.0
    %3076 = vmatprep.subr.mxu0 0.0
    %3077 = vmatpush1.msra.mxu0 0.0
    %3078 = vmatprep.subr.mxu0 0.0
    %3079 = vmatpush1.msra.mxu0 0.0
    %3080 = vmatprep.subr.mxu0 0.0
    %3081 = vmatpush1.msra.mxu0 0.0
    %3082 = vmatprep.subr.mxu0 0.0
    %3083 = vmatpush1.msra.mxu0 0.0
    %3084 = vmatprep.subr.mxu0 0.0
    %3085 = vmatpush1.msra.mxu0 0.0
    %3086 = vmatprep.subr.mxu0 0.0
    %3087 = vmatpush1.msra.mxu0 0.0
    %3088 = vmatprep.subr.mxu0 0.0
    %3089 = vmatpush1.msra.mxu0 0.0
    %3090 = vmatprep.subr.mxu0 0.0
    %3091 = vmatpush1.msra.mxu0 0.0
    %3092 = vmatprep.subr.mxu0 0.0
    %3093 = vmatpush1.msra.mxu0 0.0
    %3094 = vmatprep.subr.mxu0 0.0
    %3095 = vmatpush1.msra.mxu0 0.0
    %3096 = vmatprep.subr.mxu0 0.0
    %3097 = vmatpush1.msra.mxu0 0.0
    %3098 = vmatprep.subr.mxu0 0.0
    %3099 = vmatpush1.msra.mxu0 0.0
    %3100 = vmatprep.subr.mxu0 0.0
    %3101 = vmatpush1.msra.mxu0 0.0
    %3102 = vmatprep.subr.mxu0 0.0
    %3103 = vmatpush1.msra.mxu0 0.0
    %3104 = vmatprep.subr.mxu0 0.0
    %3105 = vmatpush1.msra.mxu0 0.0
    %3106 = vmatprep.subr.mxu0 0.0
    %3107 = vmatpush1.msra.mxu0 0.0
    %3108 = vmatprep.subr.mxu0 0.0
    %3109 = vmatpush1.msra.mxu0 0.0
    %3110 = vmatprep.subr.mxu0 0.0
    %3111 = vmatpush1.msra.mxu0 0.0
    %3112 = vmatprep.subr.mxu0 0.0
    %3113 = vmatpush1.msra.mxu0 0.0
    %3114 = vmatprep.subr.mxu0 0.0
    %3115 = vmatpush1.msra.mxu0 0.0
    %3116 = vmatprep.subr.mxu0 0.0
    %3117 = vmatpush1.msra.mxu0 0.0
    %3118 = vmatprep.subr.mxu0 0.0
    %3119 = vmatpush1.msra.mxu0 0.0
    %3120 = vmatprep.subr.mxu0 0.0
    %3121 = vmatpush1.msra.mxu0 0.0
    %3122 = vmatprep.subr.mxu0 0.0
    %3123 = vmatpush1.msra.mxu0 0.0
    %3124 = vmatprep.subr.mxu0 0.0
    %3125 = vmatpush1.msra.mxu0 0.0
    %3126 = vmatprep.subr.mxu0 0.0
    %3127 = vmatpush1.msra.mxu0 0.0
    %3128 = vmatprep.subr.mxu0 0.0
    %3129 = vmatpush1.msra.mxu0 0.0
    %3130 = vmatprep.subr.mxu0 0.0
    %3131 = vmatpush1.msra.mxu0 0.0
    %3132 = vmatprep.subr.mxu0 0.0
    %3133 = vmatpush1.msra.mxu0 0.0
    %3134 = vmatprep.mubr.f32.mxu0 0.0
    %3135 = vmatmul.mubr.f32.gmra.mrb[0].mxu0 %v3068
    %v3136 = vpop.f32.mrb[0].mxu0
    %v3137 = vadd.f32 0.0, %v3136
    %v3138 = vpop.f32.mrb[0].mxu0
    %v3139 = vadd.f32 0.0, %v3138
    %3140 = vdwg.mxu0
    %v3141 = vadd.f32 %v3051, %v3137
    %v3142 = vadd.f32 %v3053, %v3139
    %3143 = vrot.lane.b32.xlu0 %v2880, 1
    %v3144 = vpop.permute.xlu0 %3143
    %3146 = vrot.lane.b32.xlu0 %v2879, 1
    %v3147 = vpop.permute.xlu0 %3146
    %v3148 = vsel %vm365, %v3147, %v3144
    %v3151 = vsel %vm365, %v3144, %v3147
    %v3152 = vmul.f32 %v3151, %v2229
    %v3153 = vmul.f32 %v3148, %v2233
    %v3154 = vld [vmem:[%s1328] sm:$0xff]
    %v3156 = vsel %vm1079, %v3154, 0
    %3158 = vmatprep.subr.mxu0 %v3153
    %3159 = vmatpush1.msra.mxu0 %v3152
    %3160 = vmatprep.subr.mxu0 0.0
    %3161 = vmatpush1.msra.mxu0 0.0
    %3162 = vmatprep.subr.mxu0 0.0
    %3163 = vmatpush1.msra.mxu0 0.0
    %3164 = vmatprep.subr.mxu0 0.0
    %3165 = vmatpush1.msra.mxu0 0.0
    %3166 = vmatprep.subr.mxu0 0.0
    %3167 = vmatpush1.msra.mxu0 0.0
    %3168 = vmatprep.subr.mxu0 0.0
    %3169 = vmatpush1.msra.mxu0 0.0
    %3170 = vmatprep.subr.mxu0 0.0
    %3171 = vmatpush1.msra.mxu0 0.0
    %3172 = vmatprep.subr.mxu0 0.0
    %3173 = vmatpush1.msra.mxu0 0.0
    %3174 = vmatprep.subr.mxu0 0.0
    %3175 = vmatpush1.msra.mxu0 0.0
    %3176 = vmatprep.subr.mxu0 0.0
    %3177 = vmatpush1.msra.mxu0 0.0
    %3178 = vmatprep.subr.mxu0 0.0
    %3179 = vmatpush1.msra.mxu0 0.0
    %3180 = vmatprep.subr.mxu0 0.0
    %3181 = vmatpush1.msra.mxu0 0.0
    %3182 = vmatprep.subr.mxu0 0.0
    %3183 = vmatpush1.msra.mxu0 0.0
    %3184 = vmatprep.subr.mxu0 0.0
    %3185 = vmatpush1.msra.mxu0 0.0
    %3186 = vmatprep.subr.mxu0 0.0
    %3187 = vmatpush1.msra.mxu0 0.0
    %3188 = vmatprep.subr.mxu0 0.0
    %3189 = vmatpush1.msra.mxu0 0.0
    %3190 = vmatprep.subr.mxu0 0.0
    %3191 = vmatpush1.msra.mxu0 0.0
    %3192 = vmatprep.subr.mxu0 0.0
    %3193 = vmatpush1.msra.mxu0 0.0
    %3194 = vmatprep.subr.mxu0 0.0
    %3195 = vmatpush1.msra.mxu0 0.0
    %3196 = vmatprep.subr.mxu0 0.0
    %3197 = vmatpush1.msra.mxu0 0.0
    %3198 = vmatprep.subr.mxu0 0.0
    %3199 = vmatpush1.msra.mxu0 0.0
    %3200 = vmatprep.subr.mxu0 0.0
    %3201 = vmatpush1.msra.mxu0 0.0
    %3202 = vmatprep.subr.mxu0 0.0
    %3203 = vmatpush1.msra.mxu0 0.0
    %3204 = vmatprep.subr.mxu0 0.0
    %3205 = vmatpush1.msra.mxu0 0.0
    %3206 = vmatprep.subr.mxu0 0.0
    %3207 = vmatpush1.msra.mxu0 0.0
    %3208 = vmatprep.subr.mxu0 0.0
    %3209 = vmatpush1.msra.mxu0 0.0
    %3210 = vmatprep.subr.mxu0 0.0
    %3211 = vmatpush1.msra.mxu0 0.0
    %3212 = vmatprep.subr.mxu0 0.0
    %3213 = vmatpush1.msra.mxu0 0.0
    %3214 = vmatprep.subr.mxu0 0.0
    %3215 = vmatpush1.msra.mxu0 0.0
    %3216 = vmatprep.subr.mxu0 0.0
    %3217 = vmatpush1.msra.mxu0 0.0
    %3218 = vmatprep.subr.mxu0 0.0
    %3219 = vmatpush1.msra.mxu0 0.0
    %3220 = vmatprep.subr.mxu0 0.0
    %3221 = vmatpush1.msra.mxu0 0.0
    %3222 = vmatprep.mubr.f32.mxu0 0.0
    %3223 = vmatmul.mubr.f32.gmra.mrb[0].mxu0 %v3156
    %v3224 = vpop.f32.mrb[0].mxu0
    %v3225 = vadd.f32 0.0, %v3224
    %v3226 = vpop.f32.mrb[0].mxu0
    %v3227 = vadd.f32 0.0, %v3226
    %3228 = vdwg.mxu0
    %v3229 = vadd.f32 %v3141, %v3225
    %v3230 = vadd.f32 %v3142, %v3227
    %v3231 = vld [vmem:[%s1406] sm:$0xff]
    %v3233 = vsel %vm1079, %v3231, 0
    %3235 = vmatprep.subr.mxu0 %v2880
    %3236 = vmatpush1.msra.mxu0 %v2879
    %3237 = vmatprep.subr.mxu0 0.0
    %3238 = vmatpush1.msra.mxu0 0.0
    %3239 = vmatprep.subr.mxu0 0.0
    %3240 = vmatpush1.msra.mxu0 0.0
    %3241 = vmatprep.subr.mxu0 0.0
    %3242 = vmatpush1.msra.mxu0 0.0
    %3243 = vmatprep.subr.mxu0 0.0
    %3244 = vmatpush1.msra.mxu0 0.0
    %3245 = vmatprep.subr.mxu0 0.0
    %3246 = vmatpush1.msra.mxu0 0.0
    %3247 = vmatprep.subr.mxu0 0.0
    %3248 = vmatpush1.msra.mxu0 0.0
    %3249 = vmatprep.subr.mxu0 0.0
    %3250 = vmatpush1.msra.mxu0 0.0
    %3251 = vmatprep.subr.mxu0 0.0
    %3252 = vmatpush1.msra.mxu0 0.0
    %3253 = vmatprep.subr.mxu0 0.0
    %3254 = vmatpush1.msra.mxu0 0.0
    %3255 = vmatprep.subr.mxu0 0.0
    %3256 = vmatpush1.msra.mxu0 0.0
    %3257 = vmatprep.subr.mxu0 0.0
    %3258 = vmatpush1.msra.mxu0 0.0
    %3259 = vmatprep.subr.mxu0 0.0
    %3260 = vmatpush1.msra.mxu0 0.0
    %3261 = vmatprep.subr.mxu0 0.0
    %3262 = vmatpush1.msra.mxu0 0.0
    %3263 = vmatprep.subr.mxu0 0.0
    %3264 = vmatpush1.msra.mxu0 0.0
    %3265 = vmatprep.subr.mxu0 0.0
    %3266 = vmatpush1.msra.mxu0 0.0
    %3267 = vmatprep.subr.mxu0 0.0
    %3268 = vmatpush1.msra.mxu0 0.0
    %3269 = vmatprep.subr.mxu0 0.0
    %3270 = vmatpush1.msra.mxu0 0.0
    %3271 = vmatprep.subr.mxu0 0.0
    %3272 = vmatpush1.msra.mxu0 0.0
    %3273 = vmatprep.subr.mxu0 0.0
    %3274 = vmatpush1.msra.mxu0 0.0
    %3275 = vmatprep.subr.mxu0 0.0
    %3276 = vmatpush1.msra.mxu0 0.0
    %3277 = vmatprep.subr.mxu0 0.0
    %3278 = vmatpush1.msra.mxu0 0.0
    %3279 = vmatprep.subr.mxu0 0.0
    %3280 = vmatpush1.msra.mxu0 0.0
    %3281 = vmatprep.subr.mxu0 0.0
    %3282 = vmatpush1.msra.mxu0 0.0
    %3283 = vmatprep.subr.mxu0 0.0
    %3284 = vmatpush1.msra.mxu0 0.0
    %3285 = vmatprep.subr.mxu0 0.0
    %3286 = vmatpush1.msra.mxu0 0.0
    %3287 = vmatprep.subr.mxu0 0.0
    %3288 = vmatpush1.msra.mxu0 0.0
    %3289 = vmatprep.subr.mxu0 0.0
    %3290 = vmatpush1.msra.mxu0 0.0
    %3291 = vmatprep.subr.mxu0 0.0
    %3292 = vmatpush1.msra.mxu0 0.0
    %3293 = vmatprep.subr.mxu0 0.0
    %3294 = vmatpush1.msra.mxu0 0.0
    %3295 = vmatprep.subr.mxu0 0.0
    %3296 = vmatpush1.msra.mxu0 0.0
    %3297 = vmatprep.subr.mxu0 0.0
    %3298 = vmatpush1.msra.mxu0 0.0
    %3299 = vmatprep.mubr.f32.mxu0 0.0
    %3300 = vmatmul.mubr.f32.gmra.mrb[0].mxu0 %v3233
    %v3301 = vpop.f32.mrb[0].mxu0
    %v3302 = vadd.f32 0.0, %v3301
    %v3303 = vpop.f32.mrb[0].mxu0
    %v3304 = vadd.f32 0.0, %v3303
    %3305 = vdwg.mxu0
    %v3306 = vadd.f32 %v3229, %v3302
    %v3307 = vadd.f32 %v3230, %v3304
    %3308 = vrot.lane.b32.xlu0 %v2879, 127
    %v3309 = vpop.permute.xlu0 %3308
    %3310 = vrot.lane.b32.xlu0 %v2880, 127
    %v3311 = vpop.permute.xlu0 %3310
    %v3312 = vsel %vm555, %v3309, %v3311
    %v3316 = vsel %vm555, %v3311, %v3309
    %v3317 = vmul.f32 %v3312, %v2416
    %v3318 = vmul.f32 %v3316, %v2420
    %v3319 = vld [vmem:[%s1495] sm:$0xff]
    %v3321 = vsel %vm1079, %v3319, 0
    %3323 = vmatprep.subr.mxu0 %v3318
    %3324 = vmatpush1.msra.mxu0 %v3317
    %3325 = vmatprep.subr.mxu0 0.0
    %3326 = vmatpush1.msra.mxu0 0.0
    %3327 = vmatprep.subr.mxu0 0.0
    %3328 = vmatpush1.msra.mxu0 0.0
    %3329 = vmatprep.subr.mxu0 0.0
    %3330 = vmatpush1.msra.mxu0 0.0
    %3331 = vmatprep.subr.mxu0 0.0
    %3332 = vmatpush1.msra.mxu0 0.0
    %3333 = vmatprep.subr.mxu0 0.0
    %3334 = vmatpush1.msra.mxu0 0.0
    %3335 = vmatprep.subr.mxu0 0.0
    %3336 = vmatpush1.msra.mxu0 0.0
    %3337 = vmatprep.subr.mxu0 0.0
    %3338 = vmatpush1.msra.mxu0 0.0
    %3339 = vmatprep.subr.mxu0 0.0
    %3340 = vmatpush1.msra.mxu0 0.0
    %3341 = vmatprep.subr.mxu0 0.0
    %3342 = vmatpush1.msra.mxu0 0.0
    %3343 = vmatprep.subr.mxu0 0.0
    %3344 = vmatpush1.msra.mxu0 0.0
    %3345 = vmatprep.subr.mxu0 0.0
    %3346 = vmatpush1.msra.mxu0 0.0
    %3347 = vmatprep.subr.mxu0 0.0
    %3348 = vmatpush1.msra.mxu0 0.0
    %3349 = vmatprep.subr.mxu0 0.0
    %3350 = vmatpush1.msra.mxu0 0.0
    %3351 = vmatprep.subr.mxu0 0.0
    %3352 = vmatpush1.msra.mxu0 0.0
    %3353 = vmatprep.subr.mxu0 0.0
    %3354 = vmatpush1.msra.mxu0 0.0
    %3355 = vmatprep.subr.mxu0 0.0
    %3356 = vmatpush1.msra.mxu0 0.0
    %3357 = vmatprep.subr.mxu0 0.0
    %3358 = vmatpush1.msra.mxu0 0.0
    %3359 = vmatprep.subr.mxu0 0.0
    %3360 = vmatpush1.msra.mxu0 0.0
    %3361 = vmatprep.subr.mxu0 0.0
    %3362 = vmatpush1.msra.mxu0 0.0
    %3363 = vmatprep.subr.mxu0 0.0
    %3364 = vmatpush1.msra.mxu0 0.0
    %3365 = vmatprep.subr.mxu0 0.0
    %3366 = vmatpush1.msra.mxu0 0.0
    %3367 = vmatprep.subr.mxu0 0.0
    %3368 = vmatpush1.msra.mxu0 0.0
    %3369 = vmatprep.subr.mxu0 0.0
    %3370 = vmatpush1.msra.mxu0 0.0
    %3371 = vmatprep.subr.mxu0 0.0
    %3372 = vmatpush1.msra.mxu0 0.0
    %3373 = vmatprep.subr.mxu0 0.0
    %3374 = vmatpush1.msra.mxu0 0.0
    %3375 = vmatprep.subr.mxu0 0.0
    %3376 = vmatpush1.msra.mxu0 0.0
    %3377 = vmatprep.subr.mxu0 0.0
    %3378 = vmatpush1.msra.mxu0 0.0
    %3379 = vmatprep.subr.mxu0 0.0
    %3380 = vmatpush1.msra.mxu0 0.0
    %3381 = vmatprep.subr.mxu0 0.0
    %3382 = vmatpush1.msra.mxu0 0.0
    %3383 = vmatprep.subr.mxu0 0.0
    %3384 = vmatpush1.msra.mxu0 0.0
    %3385 = vmatprep.subr.mxu0 0.0
    %3386 = vmatpush1.msra.mxu0 0.0
    %3387 = vmatprep.mubr.f32.mxu0 0.0
    %3388 = vmatmul.mubr.f32.gmra.mrb[0].mxu0 %v3321
    %v3389 = vpop.f32.mrb[0].mxu0
    %v3390 = vadd.f32 0.0, %v3389
    %v3391 = vpop.f32.mrb[0].mxu0
    %v3392 = vadd.f32 0.0, %v3391
    %3393 = vdwg.mxu0
    %v3394 = vadd.f32 %v3306, %v3390
    %v3395 = vadd.f32 %v3307, %v3392
    %3396 = vrot.lane.b32.xlu0 %v2879, 113
    %v3397 = vpop.permute.xlu0 %3396
    %3398 = vrot.lane.b32.xlu0 %v2880, 113
    %v3399 = vpop.permute.xlu0 %3398
    %v3400 = vsel %vm664, %v3397, %v3399
    %v3404 = vsel %vm664, %v3399, %v3397
    %v3405 = vmul.f32 %v3400, %v2522
    %v3406 = vmul.f32 %v3404, %v2526
    %v3407 = vld [vmem:[%s1584] sm:$0xff]
    %v3409 = vsel %vm1079, %v3407, 0
    %3411 = vmatprep.subr.mxu0 %v3406
    %3412 = vmatpush1.msra.mxu0 %v3405
    %3413 = vmatprep.subr.mxu0 0.0
    %3414 = vmatpush1.msra.mxu0 0.0
    %3415 = vmatprep.subr.mxu0 0.0
    %3416 = vmatpush1.msra.mxu0 0.0
    %3417 = vmatprep.subr.mxu0 0.0
    %3418 = vmatpush1.msra.mxu0 0.0
    %3419 = vmatprep.subr.mxu0 0.0
    %3420 = vmatpush1.msra.mxu0 0.0
    %3421 = vmatprep.subr.mxu0 0.0
    %3422 = vmatpush1.msra.mxu0 0.0
    %3423 = vmatprep.subr.mxu0 0.0
    %3424 = vmatpush1.msra.mxu0 0.0
    %3425 = vmatprep.subr.mxu0 0.0
    %3426 = vmatpush1.msra.mxu0 0.0
    %3427 = vmatprep.subr.mxu0 0.0
    %3428 = vmatpush1.msra.mxu0 0.0
    %3429 = vmatprep.subr.mxu0 0.0
    %3430 = vmatpush1.msra.mxu0 0.0
    %3431 = vmatprep.subr.mxu0 0.0
    %3432 = vmatpush1.msra.mxu0 0.0
    %3433 = vmatprep.subr.mxu0 0.0
    %3434 = vmatpush1.msra.mxu0 0.0
    %3435 = vmatprep.subr.mxu0 0.0
    %3436 = vmatpush1.msra.mxu0 0.0
    %3437 = vmatprep.subr.mxu0 0.0
    %3438 = vmatpush1.msra.mxu0 0.0
    %3439 = vmatprep.subr.mxu0 0.0
    %3440 = vmatpush1.msra.mxu0 0.0
    %3441 = vmatprep.subr.mxu0 0.0
    %3442 = vmatpush1.msra.mxu0 0.0
    %3443 = vmatprep.subr.mxu0 0.0
    %3444 = vmatpush1.msra.mxu0 0.0
    %3445 = vmatprep.subr.mxu0 0.0
    %3446 = vmatpush1.msra.mxu0 0.0
    %3447 = vmatprep.subr.mxu0 0.0
    %3448 = vmatpush1.msra.mxu0 0.0
    %3449 = vmatprep.subr.mxu0 0.0
    %3450 = vmatpush1.msra.mxu0 0.0
    %3451 = vmatprep.subr.mxu0 0.0
    %3452 = vmatpush1.msra.mxu0 0.0
    %3453 = vmatprep.subr.mxu0 0.0
    %3454 = vmatpush1.msra.mxu0 0.0
    %3455 = vmatprep.subr.mxu0 0.0
    %3456 = vmatpush1.msra.mxu0 0.0
    %3457 = vmatprep.subr.mxu0 0.0
    %3458 = vmatpush1.msra.mxu0 0.0
    %3459 = vmatprep.subr.mxu0 0.0
    %3460 = vmatpush1.msra.mxu0 0.0
    %3461 = vmatprep.subr.mxu0 0.0
    %3462 = vmatpush1.msra.mxu0 0.0
    %3463 = vmatprep.subr.mxu0 0.0
    %3464 = vmatpush1.msra.mxu0 0.0
    %3465 = vmatprep.subr.mxu0 0.0
    %3466 = vmatpush1.msra.mxu0 0.0
    %3467 = vmatprep.subr.mxu0 0.0
    %3468 = vmatpush1.msra.mxu0 0.0
    %3469 = vmatprep.subr.mxu0 0.0
    %3470 = vmatpush1.msra.mxu0 0.0
    %3471 = vmatprep.subr.mxu0 0.0
    %3472 = vmatpush1.msra.mxu0 0.0
    %3473 = vmatprep.subr.mxu0 0.0
    %3474 = vmatpush1.msra.mxu0 0.0
    %3475 = vmatprep.mubr.f32.mxu0 0.0
    %3476 = vmatmul.mubr.f32.gmra.mrb[0].mxu0 %v3409
    %v3477 = vpop.f32.mrb[0].mxu0
    %v3478 = vadd.f32 0.0, %v3477
    %v3479 = vpop.f32.mrb[0].mxu0
    %v3480 = vadd.f32 0.0, %v3479
    %3481 = vdwg.mxu0
    %v3482 = vadd.f32 %v3394, %v3478
    %v3483 = vadd.f32 %v3395, %v3480
    %3484 = vrot.lane.b32.xlu0 %v2879, 112
    %v3485 = vpop.permute.xlu0 %3484
    %3486 = vrot.lane.b32.xlu0 %v2880, 112
    %v3487 = vpop.permute.xlu0 %3486
    %v3488 = vsel %vm773, %v3485, %v3487
    %v3492 = vsel %vm773, %v3487, %v3485
    %v3493 = vmul.f32 %v3488, %v2628
    %v3494 = vmul.f32 %v3492, %v2632
    %v3495 = vld [vmem:[%s1673] sm:$0xff]
    %v3497 = vsel %vm1079, %v3495, 0
    %3499 = vmatprep.subr.mxu0 %v3494
    %3500 = vmatpush1.msra.mxu0 %v3493
    %3501 = vmatprep.subr.mxu0 0.0
    %3502 = vmatpush1.msra.mxu0 0.0
    %3503 = vmatprep.subr.mxu0 0.0
    %3504 = vmatpush1.msra.mxu0 0.0
    %3505 = vmatprep.subr.mxu0 0.0
    %3506 = vmatpush1.msra.mxu0 0.0
    %3507 = vmatprep.subr.mxu0 0.0
    %3508 = vmatpush1.msra.mxu0 0.0
    %3509 = vmatprep.subr.mxu0 0.0
    %3510 = vmatpush1.msra.mxu0 0.0
    %3511 = vmatprep.subr.mxu0 0.0
    %3512 = vmatpush1.msra.mxu0 0.0
    %3513 = vmatprep.subr.mxu0 0.0
    %3514 = vmatpush1.msra.mxu0 0.0
    %3515 = vmatprep.subr.mxu0 0.0
    %3516 = vmatpush1.msra.mxu0 0.0
    %3517 = vmatprep.subr.mxu0 0.0
    %3518 = vmatpush1.msra.mxu0 0.0
    %3519 = vmatprep.subr.mxu0 0.0
    %3520 = vmatpush1.msra.mxu0 0.0
    %3521 = vmatprep.subr.mxu0 0.0
    %3522 = vmatpush1.msra.mxu0 0.0
    %3523 = vmatprep.subr.mxu0 0.0
    %3524 = vmatpush1.msra.mxu0 0.0
    %3525 = vmatprep.subr.mxu0 0.0
    %3526 = vmatpush1.msra.mxu0 0.0
    %3527 = vmatprep.subr.mxu0 0.0
    %3528 = vmatpush1.msra.mxu0 0.0
    %3529 = vmatprep.subr.mxu0 0.0
    %3530 = vmatpush1.msra.mxu0 0.0
    %3531 = vmatprep.subr.mxu0 0.0
    %3532 = vmatpush1.msra.mxu0 0.0
    %3533 = vmatprep.subr.mxu0 0.0
    %3534 = vmatpush1.msra.mxu0 0.0
    %3535 = vmatprep.subr.mxu0 0.0
    %3536 = vmatpush1.msra.mxu0 0.0
    %3537 = vmatprep.subr.mxu0 0.0
    %3538 = vmatpush1.msra.mxu0 0.0
    %3539 = vmatprep.subr.mxu0 0.0
    %3540 = vmatpush1.msra.mxu0 0.0
    %3541 = vmatprep.subr.mxu0 0.0
    %3542 = vmatpush1.msra.mxu0 0.0
    %3543 = vmatprep.subr.mxu0 0.0
    %3544 = vmatpush1.msra.mxu0 0.0
    %3545 = vmatprep.subr.mxu0 0.0
    %3546 = vmatpush1.msra.mxu0 0.0
    %3547 = vmatprep.subr.mxu0 0.0
    %3548 = vmatpush1.msra.mxu0 0.0
    %3549 = vmatprep.subr.mxu0 0.0
    %3550 = vmatpush1.msra.mxu0 0.0
    %3551 = vmatprep.subr.mxu0 0.0
    %3552 = vmatpush1.msra.mxu0 0.0
    %3553 = vmatprep.subr.mxu0 0.0
    %3554 = vmatpush1.msra.mxu0 0.0
    %3555 = vmatprep.subr.mxu0 0.0
    %3556 = vmatpush1.msra.mxu0 0.0
    %3557 = vmatprep.subr.mxu0 0.0
    %3558 = vmatpush1.msra.mxu0 0.0
    %3559 = vmatprep.subr.mxu0 0.0
    %3560 = vmatpush1.msra.mxu0 0.0
    %3561 = vmatprep.subr.mxu0 0.0
    %3562 = vmatpush1.msra.mxu0 0.0
    %3563 = vmatprep.mubr.f32.mxu0 0.0
    %3564 = vmatmul.mubr.f32.gmra.mrb[0].mxu0 %v3497
    %v3565 = vpop.f32.mrb[0].mxu0
    %v3566 = vadd.f32 0.0, %v3565
    %v3567 = vpop.f32.mrb[0].mxu0
    %v3568 = vadd.f32 0.0, %v3567
    %3569 = vdwg.mxu0
    %v3570 = vadd.f32 %v3482, %v3566
    %v3571 = vadd.f32 %v3483, %v3568
    %3572 = vrot.lane.b32.xlu0 %v2879, 111
    %v3573 = vpop.permute.xlu0 %3572
    %3574 = vrot.lane.b32.xlu0 %v2880, 111
    %v3575 = vpop.permute.xlu0 %3574
    %v3576 = vsel %vm882, %v3573, %v3575
    %v3580 = vsel %vm882, %v3575, %v3573
    %v3581 = vmul.f32 %v3576, %v2734
    %v3582 = vmul.f32 %v3580, %v2738
    %v3583 = vld [vmem:[%s1762] sm:$0xff]
    %v3585 = vsel %vm1079, %v3583, 0
    %3587 = vmatprep.subr.mxu0 %v3582
    %3588 = vmatpush1.msra.mxu0 %v3581
    %3589 = vmatprep.subr.mxu0 0.0
    %3590 = vmatpush1.msra.mxu0 0.0
    %3591 = vmatprep.subr.mxu0 0.0
    %3592 = vmatpush1.msra.mxu0 0.0
    %3593 = vmatprep.subr.mxu0 0.0
    %3594 = vmatpush1.msra.mxu0 0.0
    %3595 = vmatprep.subr.mxu0 0.0
    %3596 = vmatpush1.msra.mxu0 0.0
    %3597 = vmatprep.subr.mxu0 0.0
    %3598 = vmatpush1.msra.mxu0 0.0
    %3599 = vmatprep.subr.mxu0 0.0
    %3600 = vmatpush1.msra.mxu0 0.0
    %3601 = vmatprep.subr.mxu0 0.0
    %3602 = vmatpush1.msra.mxu0 0.0
    %3603 = vmatprep.subr.mxu0 0.0
    %3604 = vmatpush1.msra.mxu0 0.0
    %3605 = vmatprep.subr.mxu0 0.0
    %3606 = vmatpush1.msra.mxu0 0.0
    %3607 = vmatprep.subr.mxu0 0.0
    %3608 = vmatpush1.msra.mxu0 0.0
    %3609 = vmatprep.subr.mxu0 0.0
    %3610 = vmatpush1.msra.mxu0 0.0
    %3611 = vmatprep.subr.mxu0 0.0
    %3612 = vmatpush1.msra.mxu0 0.0
    %3613 = vmatprep.subr.mxu0 0.0
    %3614 = vmatpush1.msra.mxu0 0.0
    %3615 = vmatprep.subr.mxu0 0.0
    %3616 = vmatpush1.msra.mxu0 0.0
    %3617 = vmatprep.subr.mxu0 0.0
    %3618 = vmatpush1.msra.mxu0 0.0
    %3619 = vmatprep.subr.mxu0 0.0
    %3620 = vmatpush1.msra.mxu0 0.0
    %3621 = vmatprep.subr.mxu0 0.0
    %3622 = vmatpush1.msra.mxu0 0.0
    %3623 = vmatprep.subr.mxu0 0.0
    %3624 = vmatpush1.msra.mxu0 0.0
    %3625 = vmatprep.subr.mxu0 0.0
    %3626 = vmatpush1.msra.mxu0 0.0
    %3627 = vmatprep.subr.mxu0 0.0
    %3628 = vmatpush1.msra.mxu0 0.0
    %3629 = vmatprep.subr.mxu0 0.0
    %3630 = vmatpush1.msra.mxu0 0.0
    %3631 = vmatprep.subr.mxu0 0.0
    %3632 = vmatpush1.msra.mxu0 0.0
    %3633 = vmatprep.subr.mxu0 0.0
    %3634 = vmatpush1.msra.mxu0 0.0
    %3635 = vmatprep.subr.mxu0 0.0
    %3636 = vmatpush1.msra.mxu0 0.0
    %3637 = vmatprep.subr.mxu0 0.0
    %3638 = vmatpush1.msra.mxu0 0.0
    %3639 = vmatprep.subr.mxu0 0.0
    %3640 = vmatpush1.msra.mxu0 0.0
    %3641 = vmatprep.subr.mxu0 0.0
    %3642 = vmatpush1.msra.mxu0 0.0
    %3643 = vmatprep.subr.mxu0 0.0
    %3644 = vmatpush1.msra.mxu0 0.0
    %3645 = vmatprep.subr.mxu0 0.0
    %3646 = vmatpush1.msra.mxu0 0.0
    %3647 = vmatprep.subr.mxu0 0.0
    %3648 = vmatpush1.msra.mxu0 0.0
    %3649 = vmatprep.subr.mxu0 0.0
    %3650 = vmatpush1.msra.mxu0 0.0
    %3651 = vmatprep.mubr.f32.mxu0 0.0
    %3652 = vmatmul.mubr.f32.gmra.mrb[0].mxu0 %v3585
    %v3653 = vpop.f32.mrb[0].mxu0
    %v3654 = vadd.f32 0.0, %v3653
    %v3655 = vpop.f32.mrb[0].mxu0
    %v3656 = vadd.f32 0.0, %v3655
    %3657 = vdwg.mxu0
    %v3658 = vadd.f32 %v3570, %v3654
    %v3659 = vadd.f32 %v3571, %v3656
    %v3660 = vadd.f32 %v3658, %v3659
    %3661 = vadd.xlane.f32.xlu0 %v3660
    %v3662 = vpop.xlane.xlu0 %3661
    %v3663 = vrot.slane %v3662, 4
    %v3664 = vadd.f32 %v3662, %v3663
    %v3665 = vrot.slane %v3664, 2
    %v3666 = vadd.f32 %v3664, %v3665
    %v3667 = vrot.slane %v3666, 1
    %v3668 = vadd.f32 %v3666, %v3667
    %s3669 = vtos %v3668
    %v3670 = vrcp.pop 2048.0
    %s3671 = vtos %v3670
    %s3672 = smul.f32 %s3669, %s3671
    %v3673 = vmul.f32 %v3658, %v3658
    %v3674 = vmul.f32 %v3659, %v3659
    %v3675 = vadd.f32 %v3673, %v3674
    %3676 = vadd.xlane.f32.xlu0 %v3675
    %v3677 = vpop.xlane.xlu0 %3676
    %v3678 = vrot.slane %v3677, 4
    %v3679 = vadd.f32 %v3677, %v3678
    %v3680 = vrot.slane %v3679, 2
    %v3681 = vadd.f32 %v3679, %v3680
    %v3682 = vrot.slane %v3681, 1
    %v3683 = vadd.f32 %v3681, %v3682
    %s3684 = vtos %v3683
    %v3685 = vrcp.pop 2048.0
    %s3686 = vtos %v3685
    %s3687 = smul.f32 %s3684, %s3686
    %s3688 = smul.f32 %s3672, %s3672
    %s3689 = ssub.f32 %s3687, %s3688
    %s3690 = smax.f32 %s3689, 0.0
    %v3691 = vstv %s3672
    %v3692 = vsub.f32 %v3658, %v3691
    %v3693 = vsub.f32 %v3659, %v3691
    %s3694 = sadd.f32 %s3690, 1e-05
    %v3695 = vstv %s3694
    %v3696 = vrsqrt.pop %v3695
    %s3697 = vtos %v3696
    %v3698 = vstv %s3697
    %v3699 = vmul.f32 %v3692, %v3698
    %v3700 = vmul.f32 %v3693, %v3698
    %v3701 = vmul.f32 %v3699, %v1884
    %v3702 = vmul.f32 %v3700, %v1884
    %v3703 = vadd.f32 %v3701, %v1891
    %v3704 = vadd.f32 %v3702, %v1891
    %s3705 = scalar_lea.vmem [#allocation2], 16
    %3706 = vst [vmem:[%s3705] sm:$0xff] %v3703
    %3707 = vst [vmem:[%s3705 + $0x8] sm:$0xff] %v3704
    // Predicated region
    $region34: #{tpu_custom_call.1} parent=1 // pred_check
      _
    $region35: #{tpu_custom_call.1} parent=1 // pred_check_branch
      %3709 = sbr.rel (0) target = $region37
    $region36: #{tpu_custom_call.1} parent=1 // pred_region
      %s3711 = ssub.s32 512, 512
      %3712 = vsyncadd [#allocation3], %s3711
      %s3713 = sshll.u32 [#allocation2], 4
      %s3714 = int_to_ptr.vmem [resolvable:$true] %s3713
      %3719 = dma.vmem_to_hbm [thread:$0]  %s3714, 512, %s8, [#allocation3], 256, 256, 16
    $region37: #{tpu_custom_call.1} parent=1 // pred_fallthru
      _
    // Predicated region
    $region38: #{tpu_custom_call.1} parent=1 // pred_check
      _
    $region39: #{tpu_custom_call.1} parent=1 // pred_check_branch
      %3721 = sbr.rel (0) target = $region41
    $region40: #{tpu_custom_call.1} parent=1 // pred_region
      %3722 = dma.done [#allocation3], 512
    $region41: #{tpu_custom_call.1} parent=1 // pred_fallthru
      _
    %3723 = vsyncpa [#allocation3], 1

</llo_original>
